<compile_context>
chip_gen: v5e
topology: v5e:2x2
jax: 0.10.0
libtpu: 0.0.40
codegen_flags: <defaults>
</compile_context>

<pallas_src>
import jax
import jax.numpy as jnp
from jax.experimental import pallas as pl
from jax.experimental.pallas import tpu as pltpu

# ----------------------------- configuration --------------------------------
IMAGE_SIZE = (16, 16)
PATCH_SIZE = (4, 4)
NUM_CHANNELS = 3
NUM_CLASSES = 10
DEPTH = 2
HEADS = 2
DIM_HEAD = 16
INNER_DIM_SCALE = 2

DIM = PATCH_SIZE[0] * PATCH_SIZE[1] * NUM_CHANNELS                                  # 48
NUM_PATCHES = (IMAGE_SIZE[0] // PATCH_SIZE[0]) * (IMAGE_SIZE[1] // PATCH_SIZE[1])   # 16
SEQ = NUM_PATCHES + 1                                                               # 17 (CLS)
INNER_DIM = HEADS * DIM_HEAD                                                        # 32
MLP_DIM = DIM * INNER_DIM_SCALE                                                     # 96
EPS = 1e-5                                                                          # nn.LayerNorm default
SCALE = DIM_HEAD ** -0.5


# --------------------------- in-kernel helpers --------------------------------
def _layernorm(x, g, b):
    """Row-wise LayerNorm over the last axis (f32 math on every generation)."""
    mu = jnp.mean(x, axis=-1, keepdims=True)
    var = jnp.mean((x - mu) ** 2, axis=-1, keepdims=True)
    return (x - mu) * jax.lax.rsqrt(var + EPS) * g + b


def _erf(x):
    # Abramowitz & Stegun 7.1.26 polynomial erf (max abs err ~1.5e-7): gives
    # exact-GELU parity with PyTorch nn.GELU to f32 noise using only
    # exp/mul/add/where, which lower on all TPU generations.
    p = 0.3275911
    a1, a2, a3, a4, a5 = 0.254829592, -0.284496736, 1.421413741, -1.453152027, 1.061405429
    ax = jnp.abs(x)
    t = 1.0 / (1.0 + p * ax)
    poly = ((((a5 * t + a4) * t + a3) * t + a2) * t + a1) * t
    y = 1.0 - poly * jnp.exp(-(ax * ax))
    return jnp.where(x < 0.0, -y, y)


def _gelu(x):
    return 0.5 * x * (1.0 + _erf(x * 0.7071067811865476))


# ------------------------------ fused kernel -----------------------------------
def _vit_fused_kernel(
    patches_ref, patch_w_ref, patch_b_ref, cls_ref, pos_ref,
    ln1_g_ref, ln1_b_ref, qkv_w_ref, out_w_ref, out_b_ref,
    ln2_g_ref, ln2_b_ref, mlp_w1_ref, mlp_b1_ref, mlp_w2_ref, mlp_b2_ref,
    head_ln_g_ref, head_ln_b_ref, head_w_ref, head_b_ref,
    o_ref, h_scratch,
):
    """One grid program == one image: full ViT forward for that image."""
    pos = pos_ref[0]                                                  # (SEQ, DIM)

    # ---- Embeddings: patch linear projection, CLS prepend, + pos_emb ----
    tok = jnp.dot(patches_ref[0], patch_w_ref[...],
                  preferred_element_type=jnp.float32) + patch_b_ref[...]   # (NUM_PATCHES, DIM)
    h_scratch[0:1, :] = cls_ref[0] + pos[0:1, :]                      # CLS row
    h_scratch[1:SEQ, :] = tok + pos[1:SEQ, :]                         # patch rows
    h = h_scratch[...]                                                # (SEQ, DIM)

    # ---- EncoderTransformer: DEPTH pre-norm blocks, statically unrolled ----
    for l in range(DEPTH):
        # multi-head self-attention branch
        n1 = _layernorm(h, ln1_g_ref[l], ln1_b_ref[l])
        qkv = jnp.dot(n1, qkv_w_ref[l],
                      preferred_element_type=jnp.float32)             # (SEQ, 3*INNER_DIM), no bias
        out_w = out_w_ref[l]                                          # (INNER_DIM, DIM)
        attn = out_b_ref[l]                                           # (1, DIM) -> broadcasts
        for hh in range(HEADS):
            lo = hh * DIM_HEAD
            q = qkv[:, lo:lo + DIM_HEAD] * SCALE                      # scale folded into q
            k = qkv[:, INNER_DIM + lo:INNER_DIM + lo + DIM_HEAD]
            v = qkv[:, 2 * INNER_DIM + lo:2 * INNER_DIM + lo + DIM_HEAD]
            s = jax.lax.dot_general(q, k, (((1,), (1,)), ((), ())),
                                    preferred_element_type=jnp.float32)   # q @ k^T, (SEQ, SEQ)
            m = jnp.max(s, axis=-1, keepdims=True)
            e = jnp.exp(s - m)
            p = e * pl.reciprocal(jnp.sum(e, axis=-1, keepdims=True), approx=True)
            oh = jnp.dot(p, v, preferred_element_type=jnp.float32)    # (SEQ, DIM_HEAD)
            # fold the per-head slice of the output projection in here instead
            # of concatenating heads (mathematically identical).
            attn = attn + jnp.dot(oh, out_w[lo:lo + DIM_HEAD, :],
                                  preferred_element_type=jnp.float32)
        h = h + attn                                                  # residual, fused in-kernel

        # MLP branch
        n2 = _layernorm(h, ln2_g_ref[l], ln2_b_ref[l])
        m1 = _gelu(jnp.dot(n2, mlp_w1_ref[l],
                           preferred_element_type=jnp.float32) + mlp_b1_ref[l])
        h = h + jnp.dot(m1, mlp_w2_ref[l],
                        preferred_element_type=jnp.float32) + mlp_b2_ref[l]   # residual, fused

    # ---- ClsHead: LayerNorm + Linear on the CLS token ----
    cls_tok = _layernorm(h[0:1, :], head_ln_g_ref[...], head_ln_b_ref[...])
    logits = jnp.dot(cls_tok, head_w_ref[...],
                     preferred_element_type=jnp.float32) + head_b_ref[...]
    o_ref[0] = logits.astype(o_ref.dtype)


# ------------------------------- wrapper ----------------------------------------
def _const_map(nd):
    return lambda b: (0,) * nd


def vit_forward(x, params):
    B = x.shape[0]
    pH, pW = PATCH_SIZE
    nh, nw = IMAGE_SIZE[0] // pH, IMAGE_SIZE[1] // pW

    # patchify 'b c (h p1) (w p2) -> b (h w) (p1 p2 c)'  (single cheap XLA op)
    patches = x.reshape(B, NUM_CHANNELS, nh, pH, nw, pW)
    patches = jnp.transpose(patches, (0, 2, 4, 3, 5, 1)).reshape(B, NUM_PATCHES, DIM)

    weights = (
        params["patch_w"], params["patch_b"], params["cls_token"], params["pos_emb"],
        params["ln1_g"], params["ln1_b"], params["qkv_w"], params["out_w"], params["out_b"],
        params["ln2_g"], params["ln2_b"],
        params["mlp_w1"], params["mlp_b1"], params["mlp_w2"], params["mlp_b2"],
        params["head_ln_g"], params["head_ln_b"], params["head_w"], params["head_b"],
    )

    in_specs = [pl.BlockSpec((1, NUM_PATCHES, DIM), lambda b: (b, 0, 0))]       # per-image patches
    in_specs += [pl.BlockSpec(w.shape, _const_map(w.ndim)) for w in weights]    # VMEM-resident weights

    logits = pl.pallas_call(
        _vit_fused_kernel,
        out_shape=jax.ShapeDtypeStruct((B, 1, NUM_CLASSES), x.dtype),
        grid=(B,),
        in_specs=in_specs,
        out_specs=pl.BlockSpec((1, 1, NUM_CLASSES), lambda b: (b, 0, 0)),
        scratch_shapes=[pltpu.VMEM((SEQ, DIM), jnp.float32)],
        compiler_params=pltpu.CompilerParams(dimension_semantics=("parallel",)),
    )(patches, *weights)
    return logits.reshape(B, NUM_CLASSES)


# ---------------------------- parameter init ----------------------------------
def _nrm(key, shape, scale=0.02):
    return (scale * jax.random.normal(key, shape)).astype(jnp.float32)


def init_params(key):
    ks = jax.random.split(key, 8)
    return {
        "patch_w": _nrm(ks[0], (DIM, DIM)),
        "patch_b": jnp.zeros((1, DIM), jnp.float32),
        "cls_token": _nrm(ks[1], (1, 1, DIM)),
        "pos_emb": _nrm(ks[2], (1, SEQ, DIM)),
        # per-layer weights stacked on a leading DEPTH axis (whole stack in one kernel)
        "ln1_g": jnp.ones((DEPTH, 1, DIM), jnp.float32),
        "ln1_b": jnp.zeros((DEPTH, 1, DIM), jnp.float32),
        "qkv_w": _nrm(ks[3], (DEPTH, DIM, 3 * INNER_DIM)),     # Linear(bias=False)
        "out_w": _nrm(ks[4], (DEPTH, INNER_DIM, DIM)),
        "out_b": jnp.zeros((DEPTH, 1, DIM), jnp.float32),
        "ln2_g": jnp.ones((DEPTH, 1, DIM), jnp.float32),
        "ln2_b": jnp.zeros((DEPTH, 1, DIM), jnp.float32),
        "mlp_w1": _nrm(ks[5], (DEPTH, DIM, MLP_DIM)),
        "mlp_b1": jnp.zeros((DEPTH, 1, MLP_DIM), jnp.float32),
        "mlp_w2": _nrm(ks[6], (DEPTH, MLP_DIM, DIM)),
        "mlp_b2": jnp.zeros((DEPTH, 1, DIM), jnp.float32),
        "head_ln_g": jnp.ones((1, DIM), jnp.float32),
        "head_ln_b": jnp.zeros((1, DIM), jnp.float32),
        "head_w": _nrm(ks[7], (DIM, NUM_CLASSES)),
        "head_b": jnp.zeros((1, NUM_CLASSES), jnp.float32),
    }


# --------------------------------- main ----------------------------------------
if __name__ == "__main__":
    key = jax.random.PRNGKey(0)
    kx, kp = jax.random.split(key)
    x = jax.random.normal(kx, (2, NUM_CHANNELS, IMAGE_SIZE[0], IMAGE_SIZE[1]),
                          dtype=jnp.float32)
    params = init_params(kp)

    logits = jax.jit(vit_forward)(x, params)
    logits = jax.block_until_ready(logits)
    assert logits.shape == (2, NUM_CLASSES), logits.shape
    assert bool(jnp.all(jnp.isfinite(logits)))
    print("KERNEL_OK")
</pallas_src>

<mosaic_0001>
module attributes {stable_mosaic.version = 11 : i64} {
  func.func @_vit_fused_kernel(%arg0: i32, %arg1: memref<1x16x48xf32, #tpu.memory_space<vmem>>, %arg2: memref<48x48xf32, #tpu.memory_space<vmem>>, %arg3: memref<1x48xf32, #tpu.memory_space<vmem>>, %arg4: memref<1x1x48xf32, #tpu.memory_space<vmem>>, %arg5: memref<1x17x48xf32, #tpu.memory_space<vmem>>, %arg6: memref<2x1x48xf32, #tpu.memory_space<vmem>>, %arg7: memref<2x1x48xf32, #tpu.memory_space<vmem>>, %arg8: memref<2x48x96xf32, #tpu.memory_space<vmem>>, %arg9: memref<2x32x48xf32, #tpu.memory_space<vmem>>, %arg10: memref<2x1x48xf32, #tpu.memory_space<vmem>>, %arg11: memref<2x1x48xf32, #tpu.memory_space<vmem>>, %arg12: memref<2x1x48xf32, #tpu.memory_space<vmem>>, %arg13: memref<2x48x96xf32, #tpu.memory_space<vmem>>, %arg14: memref<2x1x96xf32, #tpu.memory_space<vmem>>, %arg15: memref<2x96x48xf32, #tpu.memory_space<vmem>>, %arg16: memref<2x1x48xf32, #tpu.memory_space<vmem>>, %arg17: memref<1x48xf32, #tpu.memory_space<vmem>>, %arg18: memref<1x48xf32, #tpu.memory_space<vmem>>, %arg19: memref<48x10xf32, #tpu.memory_space<vmem>>, %arg20: memref<1x10xf32, #tpu.memory_space<vmem>>, %arg21: memref<1x1x10xf32, #tpu.memory_space<vmem>>, %arg22: memref<17x48xf32, #tpu.memory_space<vmem>>) attributes {dimension_semantics = [#tpu.dimension_semantics<parallel>], iteration_bounds = array<i64: 2>, scalar_prefetch = 0 : i64, scratch_operands = 1 : i64, tpu.core_type = #tpu.core_type<tc>, window_params = [{transform_indices = @transform_0, window_bounds = array<i64: 1, 16, 48>}, {pipeline_mode = #tpu.pipeline_mode<synchronous>, transform_indices = @transform_1, window_bounds = array<i64: 48, 48>}, {pipeline_mode = #tpu.pipeline_mode<synchronous>, transform_indices = @transform_2, window_bounds = array<i64: 1, 48>}, {pipeline_mode = #tpu.pipeline_mode<synchronous>, transform_indices = @transform_3, window_bounds = array<i64: 1, 1, 48>}, {pipeline_mode = #tpu.pipeline_mode<synchronous>, transform_indices = @transform_4, window_bounds = array<i64: 1, 17, 48>}, {pipeline_mode = #tpu.pipeline_mode<synchronous>, transform_indices = @transform_5, window_bounds = array<i64: 2, 1, 48>}, {pipeline_mode = #tpu.pipeline_mode<synchronous>, transform_indices = @transform_6, window_bounds = array<i64: 2, 1, 48>}, {pipeline_mode = #tpu.pipeline_mode<synchronous>, transform_indices = @transform_7, window_bounds = array<i64: 2, 48, 96>}, {pipeline_mode = #tpu.pipeline_mode<synchronous>, transform_indices = @transform_8, window_bounds = array<i64: 2, 32, 48>}, {pipeline_mode = #tpu.pipeline_mode<synchronous>, transform_indices = @transform_9, window_bounds = array<i64: 2, 1, 48>}, {pipeline_mode = #tpu.pipeline_mode<synchronous>, transform_indices = @transform_10, window_bounds = array<i64: 2, 1, 48>}, {pipeline_mode = #tpu.pipeline_mode<synchronous>, transform_indices = @transform_11, window_bounds = array<i64: 2, 1, 48>}, {pipeline_mode = #tpu.pipeline_mode<synchronous>, transform_indices = @transform_12, window_bounds = array<i64: 2, 48, 96>}, {pipeline_mode = #tpu.pipeline_mode<synchronous>, transform_indices = @transform_13, window_bounds = array<i64: 2, 1, 96>}, {pipeline_mode = #tpu.pipeline_mode<synchronous>, transform_indices = @transform_14, window_bounds = array<i64: 2, 96, 48>}, {pipeline_mode = #tpu.pipeline_mode<synchronous>, transform_indices = @transform_15, window_bounds = array<i64: 2, 1, 48>}, {pipeline_mode = #tpu.pipeline_mode<synchronous>, transform_indices = @transform_16, window_bounds = array<i64: 1, 48>}, {pipeline_mode = #tpu.pipeline_mode<synchronous>, transform_indices = @transform_17, window_bounds = array<i64: 1, 48>}, {pipeline_mode = #tpu.pipeline_mode<synchronous>, transform_indices = @transform_18, window_bounds = array<i64: 48, 10>}, {pipeline_mode = #tpu.pipeline_mode<synchronous>, transform_indices = @transform_19, window_bounds = array<i64: 1, 10>}, {transform_indices = @transform_20, window_bounds = array<i64: 1, 1, 10>}]} {
    %c0 = arith.constant 0 : index
    %c0_0 = arith.constant 0 : index
    %c0_1 = arith.constant 0 : index
    %0 = vector.load %arg5[%c0, %c0_0, %c0_1] : memref<1x17x48xf32, #tpu.memory_space<vmem>>, vector<1x17x48xf32>
    %1 = vector.shape_cast %0 : vector<1x17x48xf32> to vector<17x48xf32>
    %c0_2 = arith.constant 0 : index
    %c0_3 = arith.constant 0 : index
    %c0_4 = arith.constant 0 : index
    %2 = vector.load %arg1[%c0_2, %c0_3, %c0_4] : memref<1x16x48xf32, #tpu.memory_space<vmem>>, vector<1x16x48xf32>
    %3 = vector.shape_cast %2 : vector<1x16x48xf32> to vector<16x48xf32>
    %c0_5 = arith.constant 0 : index
    %c0_6 = arith.constant 0 : index
    %4 = vector.load %arg2[%c0_5, %c0_6] : memref<48x48xf32, #tpu.memory_space<vmem>>, vector<48x48xf32>
    %cst = arith.constant dense<0.000000e+00> : vector<16x48xf32>
    %5 = tpu.matmul %3, %4, %cst {dimension_numbers = #tpu.dot_dimension_numbers<[1], [0], [0], [1], [0, 0, 1, 1], [], []>} : vector<16x48xf32>, vector<48x48xf32>, vector<16x48xf32> -> vector<16x48xf32>
    %c0_7 = arith.constant 0 : index
    %c0_8 = arith.constant 0 : index
    %6 = vector.load %arg3[%c0_7, %c0_8] : memref<1x48xf32, #tpu.memory_space<vmem>>, vector<1x48xf32>
    %7 = vector.broadcast %6 : vector<1x48xf32> to vector<16x48xf32>
    %8 = arith.addf %5, %7 : vector<16x48xf32>
    %c0_9 = arith.constant 0 : index
    %c0_10 = arith.constant 0 : index
    %c0_11 = arith.constant 0 : index
    %9 = vector.load %arg4[%c0_9, %c0_10, %c0_11] : memref<1x1x48xf32, #tpu.memory_space<vmem>>, vector<1x1x48xf32>
    %10 = vector.shape_cast %9 : vector<1x1x48xf32> to vector<1x48xf32>
    %11 = vector.extract_strided_slice %1 {offsets = [0, 0], sizes = [1, 48], strides = [1, 1]} : vector<17x48xf32> to vector<1x48xf32>
    %12 = arith.addf %10, %11 : vector<1x48xf32>
    %c0_12 = arith.constant 0 : index
    %c0_13 = arith.constant 0 : index
    %13 = vector.load %arg22[%c0_12, %c0_13] : memref<17x48xf32, #tpu.memory_space<vmem>>, vector<1x48xf32>
    tpu.vector_store %arg22[%c0_12, %c0_13], %12 {strides = array<i32>} : memref<17x48xf32, #tpu.memory_space<vmem>>, vector<1x48xf32>,
    %14 = vector.extract_strided_slice %1 {offsets = [1, 0], sizes = [16, 48], strides = [1, 1]} : vector<17x48xf32> to vector<16x48xf32>
    %15 = arith.addf %8, %14 : vector<16x48xf32>
    %c1 = arith.constant 1 : index
    %c0_14 = arith.constant 0 : index
    %16 = vector.load %arg22[%c1, %c0_14] : memref<17x48xf32, #tpu.memory_space<vmem>>, vector<16x48xf32>
    tpu.vector_store %arg22[%c1, %c0_14], %15 {strides = array<i32>} : memref<17x48xf32, #tpu.memory_space<vmem>>, vector<16x48xf32>,
    %c0_15 = arith.constant 0 : index
    %c0_16 = arith.constant 0 : index
    %17 = vector.load %arg22[%c0_15, %c0_16] : memref<17x48xf32, #tpu.memory_space<vmem>>, vector<17x48xf32>
    %c0_17 = arith.constant 0 : index
    %c0_18 = arith.constant 0 : index
    %c0_19 = arith.constant 0 : index
    %18 = vector.load %arg6[%c0_17, %c0_18, %c0_19] : memref<2x1x48xf32, #tpu.memory_space<vmem>>, vector<1x1x48xf32>
    %19 = vector.shape_cast %18 : vector<1x1x48xf32> to vector<1x48xf32>
    %c0_20 = arith.constant 0 : index
    %c0_21 = arith.constant 0 : index
    %c0_22 = arith.constant 0 : index
    %20 = vector.load %arg7[%c0_20, %c0_21, %c0_22] : memref<2x1x48xf32, #tpu.memory_space<vmem>>, vector<1x1x48xf32>
    %21 = vector.shape_cast %20 : vector<1x1x48xf32> to vector<1x48xf32>
    %cst_23 = arith.constant dense<0.000000e+00> : vector<17xf32>
    %22 = vector.multi_reduction <add>, %17, %cst_23 [1] : vector<17x48xf32> to vector<17xf32>
    %23 = vector.shape_cast %22 : vector<17xf32> to vector<17x1xf32>
    %cst_24 = arith.constant 4.800000e+01 : f32
    %24 = vector.broadcast %cst_24 : f32 to vector<17x1xf32>
    %25 = arith.divf %23, %24 : vector<17x1xf32>
    %26 = vector.broadcast %25 : vector<17x1xf32> to vector<17x48xf32>
    %27 = arith.subf %17, %26 : vector<17x48xf32>
    %28 = arith.mulf %27, %27 : vector<17x48xf32>
    %cst_25 = arith.constant dense<0.000000e+00> : vector<17xf32>
    %29 = vector.multi_reduction <add>, %28, %cst_25 [1] : vector<17x48xf32> to vector<17xf32>
    %30 = vector.shape_cast %29 : vector<17xf32> to vector<17x1xf32>
    %cst_26 = arith.constant 4.800000e+01 : f32
    %31 = vector.broadcast %cst_26 : f32 to vector<17x1xf32>
    %32 = arith.divf %30, %31 : vector<17x1xf32>
    %33 = vector.broadcast %25 : vector<17x1xf32> to vector<17x48xf32>
    %34 = arith.subf %17, %33 : vector<17x48xf32>
    %cst_27 = arith.constant 9.99999974E-6 : f32
    %35 = vector.broadcast %cst_27 : f32 to vector<17x1xf32>
    %36 = arith.addf %32, %35 : vector<17x1xf32>
    %37 = math.rsqrt %36 : vector<17x1xf32>
    %38 = vector.broadcast %37 : vector<17x1xf32> to vector<17x48xf32>
    %39 = arith.mulf %34, %38 : vector<17x48xf32>
    %40 = vector.broadcast %19 : vector<1x48xf32> to vector<17x48xf32>
    %41 = arith.mulf %39, %40 : vector<17x48xf32>
    %42 = vector.broadcast %21 : vector<1x48xf32> to vector<17x48xf32>
    %43 = arith.addf %41, %42 : vector<17x48xf32>
    %c0_28 = arith.constant 0 : index
    %c0_29 = arith.constant 0 : index
    %c0_30 = arith.constant 0 : index
    %44 = vector.load %arg8[%c0_28, %c0_29, %c0_30] : memref<2x48x96xf32, #tpu.memory_space<vmem>>, vector<1x48x96xf32>
    %45 = vector.shape_cast %44 : vector<1x48x96xf32> to vector<48x96xf32>
    %cst_31 = arith.constant dense<0.000000e+00> : vector<17x96xf32>
    %46 = tpu.matmul %43, %45, %cst_31 {dimension_numbers = #tpu.dot_dimension_numbers<[1], [0], [0], [1], [0, 0, 1, 1], [], []>} : vector<17x48xf32>, vector<48x96xf32>, vector<17x96xf32> -> vector<17x96xf32>
    %c0_32 = arith.constant 0 : index
    %c0_33 = arith.constant 0 : index
    %c0_34 = arith.constant 0 : index
    %47 = vector.load %arg9[%c0_32, %c0_33, %c0_34] : memref<2x32x48xf32, #tpu.memory_space<vmem>>, vector<1x32x48xf32>
    %48 = vector.shape_cast %47 : vector<1x32x48xf32> to vector<32x48xf32>
    %c0_35 = arith.constant 0 : index
    %c0_36 = arith.constant 0 : index
    %c0_37 = arith.constant 0 : index
    %49 = vector.load %arg10[%c0_35, %c0_36, %c0_37] : memref<2x1x48xf32, #tpu.memory_space<vmem>>, vector<1x1x48xf32>
    %50 = vector.shape_cast %49 : vector<1x1x48xf32> to vector<1x48xf32>
    %51 = vector.extract_strided_slice %46 {offsets = [0, 0], sizes = [17, 16], strides = [1, 1]} : vector<17x96xf32> to vector<17x16xf32>
    %cst_38 = arith.constant 2.500000e-01 : f32
    %52 = vector.broadcast %cst_38 : f32 to vector<17x16xf32>
    %53 = arith.mulf %51, %52 : vector<17x16xf32>
    %54 = vector.extract_strided_slice %46 {offsets = [0, 32], sizes = [17, 16], strides = [1, 1]} : vector<17x96xf32> to vector<17x16xf32>
    %55 = vector.extract_strided_slice %46 {offsets = [0, 64], sizes = [17, 16], strides = [1, 1]} : vector<17x96xf32> to vector<17x16xf32>
    %cst_39 = arith.constant dense<0.000000e+00> : vector<17x17xf32>
    %56 = tpu.matmul %53, %54, %cst_39 {dimension_numbers = #tpu.dot_dimension_numbers<[1], [1], [0], [0], [0, 0, 1, 0], [], []>} : vector<17x16xf32>, vector<17x16xf32>, vector<17x17xf32> -> vector<17x17xf32>
    %cst_40 = arith.constant dense<0xFF800000> : vector<17xf32>
    %57 = vector.multi_reduction <maximumf>, %56, %cst_40 [1] : vector<17x17xf32> to vector<17xf32>
    %58 = vector.shape_cast %57 : vector<17xf32> to vector<17x1xf32>
    %59 = vector.broadcast %58 : vector<17x1xf32> to vector<17x17xf32>
    %60 = arith.subf %56, %59 : vector<17x17xf32>
    %61 = math.exp %60 : vector<17x17xf32>
    %cst_41 = arith.constant dense<0.000000e+00> : vector<17xf32>
    %62 = vector.multi_reduction <add>, %61, %cst_41 [1] : vector<17x17xf32> to vector<17xf32>
    %63 = vector.shape_cast %62 : vector<17xf32> to vector<17x1xf32>
    %64 = tpu.reciprocal %63 {approx = true} : vector<17x1xf32> -> vector<17x1xf32>
    %65 = vector.broadcast %64 : vector<17x1xf32> to vector<17x17xf32>
    %66 = arith.mulf %61, %65 : vector<17x17xf32>
    %cst_42 = arith.constant dense<0.000000e+00> : vector<17x16xf32>
    %67 = tpu.matmul %66, %55, %cst_42 {dimension_numbers = #tpu.dot_dimension_numbers<[1], [0], [0], [1], [0, 0, 1, 1], [], []>} : vector<17x17xf32>, vector<17x16xf32>, vector<17x16xf32> -> vector<17x16xf32>
    %68 = vector.extract_strided_slice %48 {offsets = [0, 0], sizes = [16, 48], strides = [1, 1]} : vector<32x48xf32> to vector<16x48xf32>
    %cst_43 = arith.constant dense<0.000000e+00> : vector<17x48xf32>
    %69 = tpu.matmul %67, %68, %cst_43 {dimension_numbers = #tpu.dot_dimension_numbers<[1], [0], [0], [1], [0, 0, 1, 1], [], []>} : vector<17x16xf32>, vector<16x48xf32>, vector<17x48xf32> -> vector<17x48xf32>
    %70 = vector.broadcast %50 : vector<1x48xf32> to vector<17x48xf32>
    %71 = arith.addf %70, %69 : vector<17x48xf32>
    %72 = vector.extract_strided_slice %46 {offsets = [0, 16], sizes = [17, 16], strides = [1, 1]} : vector<17x96xf32> to vector<17x16xf32>
    %cst_44 = arith.constant 2.500000e-01 : f32
    %73 = vector.broadcast %cst_44 : f32 to vector<17x16xf32>
    %74 = arith.mulf %72, %73 : vector<17x16xf32>
    %75 = vector.extract_strided_slice %46 {offsets = [0, 48], sizes = [17, 16], strides = [1, 1]} : vector<17x96xf32> to vector<17x16xf32>
    %76 = vector.extract_strided_slice %46 {offsets = [0, 80], sizes = [17, 16], strides = [1, 1]} : vector<17x96xf32> to vector<17x16xf32>
    %cst_45 = arith.constant dense<0.000000e+00> : vector<17x17xf32>
    %77 = tpu.matmul %74, %75, %cst_45 {dimension_numbers = #tpu.dot_dimension_numbers<[1], [1], [0], [0], [0, 0, 1, 0], [], []>} : vector<17x16xf32>, vector<17x16xf32>, vector<17x17xf32> -> vector<17x17xf32>
    %cst_46 = arith.constant dense<0xFF800000> : vector<17xf32>
    %78 = vector.multi_reduction <maximumf>, %77, %cst_46 [1] : vector<17x17xf32> to vector<17xf32>
    %79 = vector.shape_cast %78 : vector<17xf32> to vector<17x1xf32>
    %80 = vector.broadcast %79 : vector<17x1xf32> to vector<17x17xf32>
    %81 = arith.subf %77, %80 : vector<17x17xf32>
    %82 = math.exp %81 : vector<17x17xf32>
    %cst_47 = arith.constant dense<0.000000e+00> : vector<17xf32>
    %83 = vector.multi_reduction <add>, %82, %cst_47 [1] : vector<17x17xf32> to vector<17xf32>
    %84 = vector.shape_cast %83 : vector<17xf32> to vector<17x1xf32>
    %85 = tpu.reciprocal %84 {approx = true} : vector<17x1xf32> -> vector<17x1xf32>
    %86 = vector.broadcast %85 : vector<17x1xf32> to vector<17x17xf32>
    %87 = arith.mulf %82, %86 : vector<17x17xf32>
    %cst_48 = arith.constant dense<0.000000e+00> : vector<17x16xf32>
    %88 = tpu.matmul %87, %76, %cst_48 {dimension_numbers = #tpu.dot_dimension_numbers<[1], [0], [0], [1], [0, 0, 1, 1], [], []>} : vector<17x17xf32>, vector<17x16xf32>, vector<17x16xf32> -> vector<17x16xf32>
    %89 = vector.extract_strided_slice %48 {offsets = [16, 0], sizes = [16, 48], strides = [1, 1]} : vector<32x48xf32> to vector<16x48xf32>
    %cst_49 = arith.constant dense<0.000000e+00> : vector<17x48xf32>
    %90 = tpu.matmul %88, %89, %cst_49 {dimension_numbers = #tpu.dot_dimension_numbers<[1], [0], [0], [1], [0, 0, 1, 1], [], []>} : vector<17x16xf32>, vector<16x48xf32>, vector<17x48xf32> -> vector<17x48xf32>
    %91 = arith.addf %71, %90 : vector<17x48xf32>
    %92 = arith.addf %17, %91 : vector<17x48xf32>
    %c0_50 = arith.constant 0 : index
    %c0_51 = arith.constant 0 : index
    %c0_52 = arith.constant 0 : index
    %93 = vector.load %arg11[%c0_50, %c0_51, %c0_52] : memref<2x1x48xf32, #tpu.memory_space<vmem>>, vector<1x1x48xf32>
    %94 = vector.shape_cast %93 : vector<1x1x48xf32> to vector<1x48xf32>
    %c0_53 = arith.constant 0 : index
    %c0_54 = arith.constant 0 : index
    %c0_55 = arith.constant 0 : index
    %95 = vector.load %arg12[%c0_53, %c0_54, %c0_55] : memref<2x1x48xf32, #tpu.memory_space<vmem>>, vector<1x1x48xf32>
    %96 = vector.shape_cast %95 : vector<1x1x48xf32> to vector<1x48xf32>
    %cst_56 = arith.constant dense<0.000000e+00> : vector<17xf32>
    %97 = vector.multi_reduction <add>, %92, %cst_56 [1] : vector<17x48xf32> to vector<17xf32>
    %98 = vector.shape_cast %97 : vector<17xf32> to vector<17x1xf32>
    %cst_57 = arith.constant 4.800000e+01 : f32
    %99 = vector.broadcast %cst_57 : f32 to vector<17x1xf32>
    %100 = arith.divf %98, %99 : vector<17x1xf32>
    %101 = vector.broadcast %100 : vector<17x1xf32> to vector<17x48xf32>
    %102 = arith.subf %92, %101 : vector<17x48xf32>
    %103 = arith.mulf %102, %102 : vector<17x48xf32>
    %cst_58 = arith.constant dense<0.000000e+00> : vector<17xf32>
    %104 = vector.multi_reduction <add>, %103, %cst_58 [1] : vector<17x48xf32> to vector<17xf32>
    %105 = vector.shape_cast %104 : vector<17xf32> to vector<17x1xf32>
    %cst_59 = arith.constant 4.800000e+01 : f32
    %106 = vector.broadcast %cst_59 : f32 to vector<17x1xf32>
    %107 = arith.divf %105, %106 : vector<17x1xf32>
    %108 = vector.broadcast %100 : vector<17x1xf32> to vector<17x48xf32>
    %109 = arith.subf %92, %108 : vector<17x48xf32>
    %cst_60 = arith.constant 9.99999974E-6 : f32
    %110 = vector.broadcast %cst_60 : f32 to vector<17x1xf32>
    %111 = arith.addf %107, %110 : vector<17x1xf32>
    %112 = math.rsqrt %111 : vector<17x1xf32>
    %113 = vector.broadcast %112 : vector<17x1xf32> to vector<17x48xf32>
    %114 = arith.mulf %109, %113 : vector<17x48xf32>
    %115 = vector.broadcast %94 : vector<1x48xf32> to vector<17x48xf32>
    %116 = arith.mulf %114, %115 : vector<17x48xf32>
    %117 = vector.broadcast %96 : vector<1x48xf32> to vector<17x48xf32>
    %118 = arith.addf %116, %117 : vector<17x48xf32>
    %c0_61 = arith.constant 0 : index
    %c0_62 = arith.constant 0 : index
    %c0_63 = arith.constant 0 : index
    %119 = vector.load %arg13[%c0_61, %c0_62, %c0_63] : memref<2x48x96xf32, #tpu.memory_space<vmem>>, vector<1x48x96xf32>
    %120 = vector.shape_cast %119 : vector<1x48x96xf32> to vector<48x96xf32>
    %cst_64 = arith.constant dense<0.000000e+00> : vector<17x96xf32>
    %121 = tpu.matmul %118, %120, %cst_64 {dimension_numbers = #tpu.dot_dimension_numbers<[1], [0], [0], [1], [0, 0, 1, 1], [], []>} : vector<17x48xf32>, vector<48x96xf32>, vector<17x96xf32> -> vector<17x96xf32>
    %c0_65 = arith.constant 0 : index
    %c0_66 = arith.constant 0 : index
    %c0_67 = arith.constant 0 : index
    %122 = vector.load %arg14[%c0_65, %c0_66, %c0_67] : memref<2x1x96xf32, #tpu.memory_space<vmem>>, vector<1x1x96xf32>
    %123 = vector.shape_cast %122 : vector<1x1x96xf32> to vector<1x96xf32>
    %124 = vector.broadcast %123 : vector<1x96xf32> to vector<17x96xf32>
    %125 = arith.addf %121, %124 : vector<17x96xf32>
    %cst_68 = arith.constant 5.000000e-01 : f32
    %126 = vector.broadcast %cst_68 : f32 to vector<17x96xf32>
    %127 = arith.mulf %126, %125 : vector<17x96xf32>
    %cst_69 = arith.constant 0.707106769 : f32
    %128 = vector.broadcast %cst_69 : f32 to vector<17x96xf32>
    %129 = arith.mulf %125, %128 : vector<17x96xf32>
    %130 = math.absf %129 : vector<17x96xf32>
    %cst_70 = arith.constant 0.327591091 : f32
    %131 = vector.broadcast %cst_70 : f32 to vector<17x96xf32>
    %132 = arith.mulf %131, %130 : vector<17x96xf32>
    %cst_71 = arith.constant 1.000000e+00 : f32
    %133 = vector.broadcast %cst_71 : f32 to vector<17x96xf32>
    %134 = arith.addf %133, %132 : vector<17x96xf32>
    %cst_72 = arith.constant 1.000000e+00 : f32
    %135 = vector.broadcast %cst_72 : f32 to vector<17x96xf32>
    %136 = arith.divf %135, %134 : vector<17x96xf32>
    %cst_73 = arith.constant 1.06140542 : f32
    %137 = vector.broadcast %cst_73 : f32 to vector<17x96xf32>
    %138 = arith.mulf %137, %136 : vector<17x96xf32>
    %cst_74 = arith.constant -1.45315206 : f32
    %139 = vector.broadcast %cst_74 : f32 to vector<17x96xf32>
    %140 = arith.addf %138, %139 : vector<17x96xf32>
    %141 = arith.mulf %140, %136 : vector<17x96xf32>
    %cst_75 = arith.constant 1.42141378 : f32
    %142 = vector.broadcast %cst_75 : f32 to vector<17x96xf32>
    %143 = arith.addf %141, %142 : vector<17x96xf32>
    %144 = arith.mulf %143, %136 : vector<17x96xf32>
    %cst_76 = arith.constant -0.284496725 : f32
    %145 = vector.broadcast %cst_76 : f32 to vector<17x96xf32>
    %146 = arith.addf %144, %145 : vector<17x96xf32>
    %147 = arith.mulf %146, %136 : vector<17x96xf32>
    %cst_77 = arith.constant 0.254829586 : f32
    %148 = vector.broadcast %cst_77 : f32 to vector<17x96xf32>
    %149 = arith.addf %147, %148 : vector<17x96xf32>
    %150 = arith.mulf %149, %136 : vector<17x96xf32>
    %151 = arith.mulf %130, %130 : vector<17x96xf32>
    %cst_78 = arith.constant 0.000000e+00 : f32
    %152 = vector.broadcast %cst_78 : f32 to vector<17x96xf32>
    %153 = arith.subf %152, %151 : vector<17x96xf32>
    %154 = math.exp %153 : vector<17x96xf32>
    %155 = arith.mulf %150, %154 : vector<17x96xf32>
    %cst_79 = arith.constant 1.000000e+00 : f32
    %156 = vector.broadcast %cst_79 : f32 to vector<17x96xf32>
    %157 = arith.subf %156, %155 : vector<17x96xf32>
    %cst_80 = arith.constant 0.000000e+00 : f32
    %158 = vector.broadcast %cst_80 : f32 to vector<17x96xf32>
    %159 = arith.cmpf olt, %129, %158 : vector<17x96xf32>
    %cst_81 = arith.constant 0.000000e+00 : f32
    %160 = vector.broadcast %cst_81 : f32 to vector<17x96xf32>
    %161 = arith.subf %160, %157 : vector<17x96xf32>
    %162 = arith.select %159, %161, %157 : vector<17x96xi1>, vector<17x96xf32>
    %cst_82 = arith.constant 1.000000e+00 : f32
    %163 = vector.broadcast %cst_82 : f32 to vector<17x96xf32>
    %164 = arith.addf %163, %162 : vector<17x96xf32>
    %165 = arith.mulf %127, %164 : vector<17x96xf32>
    %c0_83 = arith.constant 0 : index
    %c0_84 = arith.constant 0 : index
    %c0_85 = arith.constant 0 : index
    %166 = vector.load %arg15[%c0_83, %c0_84, %c0_85] : memref<2x96x48xf32, #tpu.memory_space<vmem>>, vector<1x96x48xf32>
    %167 = vector.shape_cast %166 : vector<1x96x48xf32> to vector<96x48xf32>
    %cst_86 = arith.constant dense<0.000000e+00> : vector<17x48xf32>
    %168 = tpu.matmul %165, %167, %cst_86 {dimension_numbers = #tpu.dot_dimension_numbers<[1], [0], [0], [1], [0, 0, 1, 1], [], []>} : vector<17x96xf32>, vector<96x48xf32>, vector<17x48xf32> -> vector<17x48xf32>
    %169 = arith.addf %92, %168 : vector<17x48xf32>
    %c0_87 = arith.constant 0 : index
    %c0_88 = arith.constant 0 : index
    %c0_89 = arith.constant 0 : index
    %170 = vector.load %arg16[%c0_87, %c0_88, %c0_89] : memref<2x1x48xf32, #tpu.memory_space<vmem>>, vector<1x1x48xf32>
    %171 = vector.shape_cast %170 : vector<1x1x48xf32> to vector<1x48xf32>
    %172 = vector.broadcast %171 : vector<1x48xf32> to vector<17x48xf32>
    %173 = arith.addf %169, %172 : vector<17x48xf32>
    %c1_90 = arith.constant 1 : index
    %c0_91 = arith.constant 0 : index
    %c0_92 = arith.constant 0 : index
    %174 = vector.load %arg6[%c1_90, %c0_91, %c0_92] : memref<2x1x48xf32, #tpu.memory_space<vmem>>, vector<1x1x48xf32>
    %175 = vector.shape_cast %174 : vector<1x1x48xf32> to vector<1x48xf32>
    %c1_93 = arith.constant 1 : index
    %c0_94 = arith.constant 0 : index
    %c0_95 = arith.constant 0 : index
    %176 = vector.load %arg7[%c1_93, %c0_94, %c0_95] : memref<2x1x48xf32, #tpu.memory_space<vmem>>, vector<1x1x48xf32>
    %177 = vector.shape_cast %176 : vector<1x1x48xf32> to vector<1x48xf32>
    %cst_96 = arith.constant dense<0.000000e+00> : vector<17xf32>
    %178 = vector.multi_reduction <add>, %173, %cst_96 [1] : vector<17x48xf32> to vector<17xf32>
    %179 = vector.shape_cast %178 : vector<17xf32> to vector<17x1xf32>
    %cst_97 = arith.constant 4.800000e+01 : f32
    %180 = vector.broadcast %cst_97 : f32 to vector<17x1xf32>
    %181 = arith.divf %179, %180 : vector<17x1xf32>
    %182 = vector.broadcast %181 : vector<17x1xf32> to vector<17x48xf32>
    %183 = arith.subf %173, %182 : vector<17x48xf32>
    %184 = arith.mulf %183, %183 : vector<17x48xf32>
    %cst_98 = arith.constant dense<0.000000e+00> : vector<17xf32>
    %185 = vector.multi_reduction <add>, %184, %cst_98 [1] : vector<17x48xf32> to vector<17xf32>
    %186 = vector.shape_cast %185 : vector<17xf32> to vector<17x1xf32>
    %cst_99 = arith.constant 4.800000e+01 : f32
    %187 = vector.broadcast %cst_99 : f32 to vector<17x1xf32>
    %188 = arith.divf %186, %187 : vector<17x1xf32>
    %189 = vector.broadcast %181 : vector<17x1xf32> to vector<17x48xf32>
    %190 = arith.subf %173, %189 : vector<17x48xf32>
    %cst_100 = arith.constant 9.99999974E-6 : f32
    %191 = vector.broadcast %cst_100 : f32 to vector<17x1xf32>
    %192 = arith.addf %188, %191 : vector<17x1xf32>
    %193 = math.rsqrt %192 : vector<17x1xf32>
    %194 = vector.broadcast %193 : vector<17x1xf32> to vector<17x48xf32>
    %195 = arith.mulf %190, %194 : vector<17x48xf32>
    %196 = vector.broadcast %175 : vector<1x48xf32> to vector<17x48xf32>
    %197 = arith.mulf %195, %196 : vector<17x48xf32>
    %198 = vector.broadcast %177 : vector<1x48xf32> to vector<17x48xf32>
    %199 = arith.addf %197, %198 : vector<17x48xf32>
    %c1_101 = arith.constant 1 : index
    %c0_102 = arith.constant 0 : index
    %c0_103 = arith.constant 0 : index
    %200 = vector.load %arg8[%c1_101, %c0_102, %c0_103] : memref<2x48x96xf32, #tpu.memory_space<vmem>>, vector<1x48x96xf32>
    %201 = vector.shape_cast %200 : vector<1x48x96xf32> to vector<48x96xf32>
    %cst_104 = arith.constant dense<0.000000e+00> : vector<17x96xf32>
    %202 = tpu.matmul %199, %201, %cst_104 {dimension_numbers = #tpu.dot_dimension_numbers<[1], [0], [0], [1], [0, 0, 1, 1], [], []>} : vector<17x48xf32>, vector<48x96xf32>, vector<17x96xf32> -> vector<17x96xf32>
    %c1_105 = arith.constant 1 : index
    %c0_106 = arith.constant 0 : index
    %c0_107 = arith.constant 0 : index
    %203 = vector.load %arg9[%c1_105, %c0_106, %c0_107] : memref<2x32x48xf32, #tpu.memory_space<vmem>>, vector<1x32x48xf32>
    %204 = vector.shape_cast %203 : vector<1x32x48xf32> to vector<32x48xf32>
    %c1_108 = arith.constant 1 : index
    %c0_109 = arith.constant 0 : index
    %c0_110 = arith.constant 0 : index
    %205 = vector.load %arg10[%c1_108, %c0_109, %c0_110] : memref<2x1x48xf32, #tpu.memory_space<vmem>>, vector<1x1x48xf32>
    %206 = vector.shape_cast %205 : vector<1x1x48xf32> to vector<1x48xf32>
    %207 = vector.extract_strided_slice %202 {offsets = [0, 0], sizes = [17, 16], strides = [1, 1]} : vector<17x96xf32> to vector<17x16xf32>
    %cst_111 = arith.constant 2.500000e-01 : f32
    %208 = vector.broadcast %cst_111 : f32 to vector<17x16xf32>
    %209 = arith.mulf %207, %208 : vector<17x16xf32>
    %210 = vector.extract_strided_slice %202 {offsets = [0, 32], sizes = [17, 16], strides = [1, 1]} : vector<17x96xf32> to vector<17x16xf32>
    %211 = vector.extract_strided_slice %202 {offsets = [0, 64], sizes = [17, 16], strides = [1, 1]} : vector<17x96xf32> to vector<17x16xf32>
    %cst_112 = arith.constant dense<0.000000e+00> : vector<17x17xf32>
    %212 = tpu.matmul %209, %210, %cst_112 {dimension_numbers = #tpu.dot_dimension_numbers<[1], [1], [0], [0], [0, 0, 1, 0], [], []>} : vector<17x16xf32>, vector<17x16xf32>, vector<17x17xf32> -> vector<17x17xf32>
    %cst_113 = arith.constant dense<0xFF800000> : vector<17xf32>
    %213 = vector.multi_reduction <maximumf>, %212, %cst_113 [1] : vector<17x17xf32> to vector<17xf32>
    %214 = vector.shape_cast %213 : vector<17xf32> to vector<17x1xf32>
    %215 = vector.broadcast %214 : vector<17x1xf32> to vector<17x17xf32>
    %216 = arith.subf %212, %215 : vector<17x17xf32>
    %217 = math.exp %216 : vector<17x17xf32>
    %cst_114 = arith.constant dense<0.000000e+00> : vector<17xf32>
    %218 = vector.multi_reduction <add>, %217, %cst_114 [1] : vector<17x17xf32> to vector<17xf32>
    %219 = vector.shape_cast %218 : vector<17xf32> to vector<17x1xf32>
    %220 = tpu.reciprocal %219 {approx = true} : vector<17x1xf32> -> vector<17x1xf32>
    %221 = vector.broadcast %220 : vector<17x1xf32> to vector<17x17xf32>
    %222 = arith.mulf %217, %221 : vector<17x17xf32>
    %cst_115 = arith.constant dense<0.000000e+00> : vector<17x16xf32>
    %223 = tpu.matmul %222, %211, %cst_115 {dimension_numbers = #tpu.dot_dimension_numbers<[1], [0], [0], [1], [0, 0, 1, 1], [], []>} : vector<17x17xf32>, vector<17x16xf32>, vector<17x16xf32> -> vector<17x16xf32>
    %224 = vector.extract_strided_slice %204 {offsets = [0, 0], sizes = [16, 48], strides = [1, 1]} : vector<32x48xf32> to vector<16x48xf32>
    %cst_116 = arith.constant dense<0.000000e+00> : vector<17x48xf32>
    %225 = tpu.matmul %223, %224, %cst_116 {dimension_numbers = #tpu.dot_dimension_numbers<[1], [0], [0], [1], [0, 0, 1, 1], [], []>} : vector<17x16xf32>, vector<16x48xf32>, vector<17x48xf32> -> vector<17x48xf32>
    %226 = vector.broadcast %206 : vector<1x48xf32> to vector<17x48xf32>
    %227 = arith.addf %226, %225 : vector<17x48xf32>
    %228 = vector.extract_strided_slice %202 {offsets = [0, 16], sizes = [17, 16], strides = [1, 1]} : vector<17x96xf32> to vector<17x16xf32>
    %cst_117 = arith.constant 2.500000e-01 : f32
    %229 = vector.broadcast %cst_117 : f32 to vector<17x16xf32>
    %230 = arith.mulf %228, %229 : vector<17x16xf32>
    %231 = vector.extract_strided_slice %202 {offsets = [0, 48], sizes = [17, 16], strides = [1, 1]} : vector<17x96xf32> to vector<17x16xf32>
    %232 = vector.extract_strided_slice %202 {offsets = [0, 80], sizes = [17, 16], strides = [1, 1]} : vector<17x96xf32> to vector<17x16xf32>
    %cst_118 = arith.constant dense<0.000000e+00> : vector<17x17xf32>
    %233 = tpu.matmul %230, %231, %cst_118 {dimension_numbers = #tpu.dot_dimension_numbers<[1], [1], [0], [0], [0, 0, 1, 0], [], []>} : vector<17x16xf32>, vector<17x16xf32>, vector<17x17xf32> -> vector<17x17xf32>
    %cst_119 = arith.constant dense<0xFF800000> : vector<17xf32>
    %234 = vector.multi_reduction <maximumf>, %233, %cst_119 [1] : vector<17x17xf32> to vector<17xf32>
    %235 = vector.shape_cast %234 : vector<17xf32> to vector<17x1xf32>
    %236 = vector.broadcast %235 : vector<17x1xf32> to vector<17x17xf32>
    %237 = arith.subf %233, %236 : vector<17x17xf32>
    %238 = math.exp %237 : vector<17x17xf32>
    %cst_120 = arith.constant dense<0.000000e+00> : vector<17xf32>
    %239 = vector.multi_reduction <add>, %238, %cst_120 [1] : vector<17x17xf32> to vector<17xf32>
    %240 = vector.shape_cast %239 : vector<17xf32> to vector<17x1xf32>
    %241 = tpu.reciprocal %240 {approx = true} : vector<17x1xf32> -> vector<17x1xf32>
    %242 = vector.broadcast %241 : vector<17x1xf32> to vector<17x17xf32>
    %243 = arith.mulf %238, %242 : vector<17x17xf32>
    %cst_121 = arith.constant dense<0.000000e+00> : vector<17x16xf32>
    %244 = tpu.matmul %243, %232, %cst_121 {dimension_numbers = #tpu.dot_dimension_numbers<[1], [0], [0], [1], [0, 0, 1, 1], [], []>} : vector<17x17xf32>, vector<17x16xf32>, vector<17x16xf32> -> vector<17x16xf32>
    %245 = vector.extract_strided_slice %204 {offsets = [16, 0], sizes = [16, 48], strides = [1, 1]} : vector<32x48xf32> to vector<16x48xf32>
    %cst_122 = arith.constant dense<0.000000e+00> : vector<17x48xf32>
    %246 = tpu.matmul %244, %245, %cst_122 {dimension_numbers = #tpu.dot_dimension_numbers<[1], [0], [0], [1], [0, 0, 1, 1], [], []>} : vector<17x16xf32>, vector<16x48xf32>, vector<17x48xf32> -> vector<17x48xf32>
    %247 = arith.addf %227, %246 : vector<17x48xf32>
    %248 = arith.addf %173, %247 : vector<17x48xf32>
    %c1_123 = arith.constant 1 : index
    %c0_124 = arith.constant 0 : index
    %c0_125 = arith.constant 0 : index
    %249 = vector.load %arg11[%c1_123, %c0_124, %c0_125] : memref<2x1x48xf32, #tpu.memory_space<vmem>>, vector<1x1x48xf32>
    %250 = vector.shape_cast %249 : vector<1x1x48xf32> to vector<1x48xf32>
    %c1_126 = arith.constant 1 : index
    %c0_127 = arith.constant 0 : index
    %c0_128 = arith.constant 0 : index
    %251 = vector.load %arg12[%c1_126, %c0_127, %c0_128] : memref<2x1x48xf32, #tpu.memory_space<vmem>>, vector<1x1x48xf32>
    %252 = vector.shape_cast %251 : vector<1x1x48xf32> to vector<1x48xf32>
    %cst_129 = arith.constant dense<0.000000e+00> : vector<17xf32>
    %253 = vector.multi_reduction <add>, %248, %cst_129 [1] : vector<17x48xf32> to vector<17xf32>
    %254 = vector.shape_cast %253 : vector<17xf32> to vector<17x1xf32>
    %cst_130 = arith.constant 4.800000e+01 : f32
    %255 = vector.broadcast %cst_130 : f32 to vector<17x1xf32>
    %256 = arith.divf %254, %255 : vector<17x1xf32>
    %257 = vector.broadcast %256 : vector<17x1xf32> to vector<17x48xf32>
    %258 = arith.subf %248, %257 : vector<17x48xf32>
    %259 = arith.mulf %258, %258 : vector<17x48xf32>
    %cst_131 = arith.constant dense<0.000000e+00> : vector<17xf32>
    %260 = vector.multi_reduction <add>, %259, %cst_131 [1] : vector<17x48xf32> to vector<17xf32>
    %261 = vector.shape_cast %260 : vector<17xf32> to vector<17x1xf32>
    %cst_132 = arith.constant 4.800000e+01 : f32
    %262 = vector.broadcast %cst_132 : f32 to vector<17x1xf32>
    %263 = arith.divf %261, %262 : vector<17x1xf32>
    %264 = vector.broadcast %256 : vector<17x1xf32> to vector<17x48xf32>
    %265 = arith.subf %248, %264 : vector<17x48xf32>
    %cst_133 = arith.constant 9.99999974E-6 : f32
    %266 = vector.broadcast %cst_133 : f32 to vector<17x1xf32>
    %267 = arith.addf %263, %266 : vector<17x1xf32>
    %268 = math.rsqrt %267 : vector<17x1xf32>
    %269 = vector.broadcast %268 : vector<17x1xf32> to vector<17x48xf32>
    %270 = arith.mulf %265, %269 : vector<17x48xf32>
    %271 = vector.broadcast %250 : vector<1x48xf32> to vector<17x48xf32>
    %272 = arith.mulf %270, %271 : vector<17x48xf32>
    %273 = vector.broadcast %252 : vector<1x48xf32> to vector<17x48xf32>
    %274 = arith.addf %272, %273 : vector<17x48xf32>
    %c1_134 = arith.constant 1 : index
    %c0_135 = arith.constant 0 : index
    %c0_136 = arith.constant 0 : index
    %275 = vector.load %arg13[%c1_134, %c0_135, %c0_136] : memref<2x48x96xf32, #tpu.memory_space<vmem>>, vector<1x48x96xf32>
    %276 = vector.shape_cast %275 : vector<1x48x96xf32> to vector<48x96xf32>
    %cst_137 = arith.constant dense<0.000000e+00> : vector<17x96xf32>
    %277 = tpu.matmul %274, %276, %cst_137 {dimension_numbers = #tpu.dot_dimension_numbers<[1], [0], [0], [1], [0, 0, 1, 1], [], []>} : vector<17x48xf32>, vector<48x96xf32>, vector<17x96xf32> -> vector<17x96xf32>
    %c1_138 = arith.constant 1 : index
    %c0_139 = arith.constant 0 : index
    %c0_140 = arith.constant 0 : index
    %278 = vector.load %arg14[%c1_138, %c0_139, %c0_140] : memref<2x1x96xf32, #tpu.memory_space<vmem>>, vector<1x1x96xf32>
    %279 = vector.shape_cast %278 : vector<1x1x96xf32> to vector<1x96xf32>
    %280 = vector.broadcast %279 : vector<1x96xf32> to vector<17x96xf32>
    %281 = arith.addf %277, %280 : vector<17x96xf32>
    %cst_141 = arith.constant 5.000000e-01 : f32
    %282 = vector.broadcast %cst_141 : f32 to vector<17x96xf32>
    %283 = arith.mulf %282, %281 : vector<17x96xf32>
    %cst_142 = arith.constant 0.707106769 : f32
    %284 = vector.broadcast %cst_142 : f32 to vector<17x96xf32>
    %285 = arith.mulf %281, %284 : vector<17x96xf32>
    %286 = math.absf %285 : vector<17x96xf32>
    %cst_143 = arith.constant 0.327591091 : f32
    %287 = vector.broadcast %cst_143 : f32 to vector<17x96xf32>
    %288 = arith.mulf %287, %286 : vector<17x96xf32>
    %cst_144 = arith.constant 1.000000e+00 : f32
    %289 = vector.broadcast %cst_144 : f32 to vector<17x96xf32>
    %290 = arith.addf %289, %288 : vector<17x96xf32>
    %cst_145 = arith.constant 1.000000e+00 : f32
    %291 = vector.broadcast %cst_145 : f32 to vector<17x96xf32>
    %292 = arith.divf %291, %290 : vector<17x96xf32>
    %cst_146 = arith.constant 1.06140542 : f32
    %293 = vector.broadcast %cst_146 : f32 to vector<17x96xf32>
    %294 = arith.mulf %293, %292 : vector<17x96xf32>
    %cst_147 = arith.constant -1.45315206 : f32
    %295 = vector.broadcast %cst_147 : f32 to vector<17x96xf32>
    %296 = arith.addf %294, %295 : vector<17x96xf32>
    %297 = arith.mulf %296, %292 : vector<17x96xf32>
    %cst_148 = arith.constant 1.42141378 : f32
    %298 = vector.broadcast %cst_148 : f32 to vector<17x96xf32>
    %299 = arith.addf %297, %298 : vector<17x96xf32>
    %300 = arith.mulf %299, %292 : vector<17x96xf32>
    %cst_149 = arith.constant -0.284496725 : f32
    %301 = vector.broadcast %cst_149 : f32 to vector<17x96xf32>
    %302 = arith.addf %300, %301 : vector<17x96xf32>
    %303 = arith.mulf %302, %292 : vector<17x96xf32>
    %cst_150 = arith.constant 0.254829586 : f32
    %304 = vector.broadcast %cst_150 : f32 to vector<17x96xf32>
    %305 = arith.addf %303, %304 : vector<17x96xf32>
    %306 = arith.mulf %305, %292 : vector<17x96xf32>
    %307 = arith.mulf %286, %286 : vector<17x96xf32>
    %cst_151 = arith.constant 0.000000e+00 : f32
    %308 = vector.broadcast %cst_151 : f32 to vector<17x96xf32>
    %309 = arith.subf %308, %307 : vector<17x96xf32>
    %310 = math.exp %309 : vector<17x96xf32>
    %311 = arith.mulf %306, %310 : vector<17x96xf32>
    %cst_152 = arith.constant 1.000000e+00 : f32
    %312 = vector.broadcast %cst_152 : f32 to vector<17x96xf32>
    %313 = arith.subf %312, %311 : vector<17x96xf32>
    %cst_153 = arith.constant 0.000000e+00 : f32
    %314 = vector.broadcast %cst_153 : f32 to vector<17x96xf32>
    %315 = arith.cmpf olt, %285, %314 : vector<17x96xf32>
    %cst_154 = arith.constant 0.000000e+00 : f32
    %316 = vector.broadcast %cst_154 : f32 to vector<17x96xf32>
    %317 = arith.subf %316, %313 : vector<17x96xf32>
    %318 = arith.select %315, %317, %313 : vector<17x96xi1>, vector<17x96xf32>
    %cst_155 = arith.constant 1.000000e+00 : f32
    %319 = vector.broadcast %cst_155 : f32 to vector<17x96xf32>
    %320 = arith.addf %319, %318 : vector<17x96xf32>
    %321 = arith.mulf %283, %320 : vector<17x96xf32>
    %c1_156 = arith.constant 1 : index
    %c0_157 = arith.constant 0 : index
    %c0_158 = arith.constant 0 : index
    %322 = vector.load %arg15[%c1_156, %c0_157, %c0_158] : memref<2x96x48xf32, #tpu.memory_space<vmem>>, vector<1x96x48xf32>
    %323 = vector.shape_cast %322 : vector<1x96x48xf32> to vector<96x48xf32>
    %cst_159 = arith.constant dense<0.000000e+00> : vector<17x48xf32>
    %324 = tpu.matmul %321, %323, %cst_159 {dimension_numbers = #tpu.dot_dimension_numbers<[1], [0], [0], [1], [0, 0, 1, 1], [], []>} : vector<17x96xf32>, vector<96x48xf32>, vector<17x48xf32> -> vector<17x48xf32>
    %325 = arith.addf %248, %324 : vector<17x48xf32>
    %c1_160 = arith.constant 1 : index
    %c0_161 = arith.constant 0 : index
    %c0_162 = arith.constant 0 : index
    %326 = vector.load %arg16[%c1_160, %c0_161, %c0_162] : memref<2x1x48xf32, #tpu.memory_space<vmem>>, vector<1x1x48xf32>
    %327 = vector.shape_cast %326 : vector<1x1x48xf32> to vector<1x48xf32>
    %328 = vector.broadcast %327 : vector<1x48xf32> to vector<17x48xf32>
    %329 = arith.addf %325, %328 : vector<17x48xf32>
    %330 = vector.extract_strided_slice %329 {offsets = [0, 0], sizes = [1, 48], strides = [1, 1]} : vector<17x48xf32> to vector<1x48xf32>
    %c0_163 = arith.constant 0 : index
    %c0_164 = arith.constant 0 : index
    %331 = vector.load %arg17[%c0_163, %c0_164] : memref<1x48xf32, #tpu.memory_space<vmem>>, vector<1x48xf32>
    %c0_165 = arith.constant 0 : index
    %c0_166 = arith.constant 0 : index
    %332 = vector.load %arg18[%c0_165, %c0_166] : memref<1x48xf32, #tpu.memory_space<vmem>>, vector<1x48xf32>
    %cst_167 = arith.constant dense<0.000000e+00> : vector<1xf32>
    %333 = vector.multi_reduction <add>, %330, %cst_167 [1] : vector<1x48xf32> to vector<1xf32>
    %334 = vector.shape_cast %333 : vector<1xf32> to vector<1x1xf32>
    %cst_168 = arith.constant 4.800000e+01 : f32
    %335 = vector.broadcast %cst_168 : f32 to vector<1x1xf32>
    %336 = arith.divf %334, %335 : vector<1x1xf32>
    %337 = vector.broadcast %336 : vector<1x1xf32> to vector<1x48xf32>
    %338 = arith.subf %330, %337 : vector<1x48xf32>
    %339 = arith.mulf %338, %338 : vector<1x48xf32>
    %cst_169 = arith.constant dense<0.000000e+00> : vector<1xf32>
    %340 = vector.multi_reduction <add>, %339, %cst_169 [1] : vector<1x48xf32> to vector<1xf32>
    %341 = vector.shape_cast %340 : vector<1xf32> to vector<1x1xf32>
    %cst_170 = arith.constant 4.800000e+01 : f32
    %342 = vector.broadcast %cst_170 : f32 to vector<1x1xf32>
    %343 = arith.divf %341, %342 : vector<1x1xf32>
    %344 = vector.broadcast %336 : vector<1x1xf32> to vector<1x48xf32>
    %345 = arith.subf %330, %344 : vector<1x48xf32>
    %cst_171 = arith.constant 9.99999974E-6 : f32
    %346 = vector.broadcast %cst_171 : f32 to vector<1x1xf32>
    %347 = arith.addf %343, %346 : vector<1x1xf32>
    %348 = math.rsqrt %347 : vector<1x1xf32>
    %349 = vector.broadcast %348 : vector<1x1xf32> to vector<1x48xf32>
    %350 = arith.mulf %345, %349 : vector<1x48xf32>
    %351 = arith.mulf %350, %331 : vector<1x48xf32>
    %352 = arith.addf %351, %332 : vector<1x48xf32>
    %c0_172 = arith.constant 0 : index
    %c0_173 = arith.constant 0 : index
    %353 = vector.load %arg19[%c0_172, %c0_173] : memref<48x10xf32, #tpu.memory_space<vmem>>, vector<48x10xf32>
    %cst_174 = arith.constant dense<0.000000e+00> : vector<1x10xf32>
    %354 = tpu.matmul %352, %353, %cst_174 {dimension_numbers = #tpu.dot_dimension_numbers<[1], [0], [0], [1], [0, 0, 1, 1], [], []>} : vector<1x48xf32>, vector<48x10xf32>, vector<1x10xf32> -> vector<1x10xf32>
    %c0_175 = arith.constant 0 : index
    %c0_176 = arith.constant 0 : index
    %355 = vector.load %arg20[%c0_175, %c0_176] : memref<1x10xf32, #tpu.memory_space<vmem>>, vector<1x10xf32>
    %356 = arith.addf %354, %355 : vector<1x10xf32>
    %c0_177 = arith.constant 0 : index
    %c0_178 = arith.constant 0 : index
    %c0_179 = arith.constant 0 : index
    %357 = vector.load %arg21[%c0_177, %c0_178, %c0_179] : memref<1x1x10xf32, #tpu.memory_space<vmem>>, vector<1x1x10xf32>
    %358 = vector.shape_cast %357 : vector<1x1x10xf32> to vector<1x10xf32>
    %359 = vector.shape_cast %356 : vector<1x10xf32> to vector<1x1x10xf32>
    tpu.vector_store %arg21[%c0_177, %c0_178, %c0_179], %359 {strides = array<i32>} : memref<1x1x10xf32, #tpu.memory_space<vmem>>, vector<1x1x10xf32>,
    return
  }
  func.func @transform_0(%arg0: i32) -> (i32, i32, i32) {
    %c0_i32 = arith.constant 0 : i32
    %c0_i32_0 = arith.constant 0 : i32
    %c0_i32_1 = arith.constant 0 : i32
    return %arg0, %c0_i32, %c0_i32_0 : i32, i32, i32
  }
  func.func @transform_1(%arg0: i32) -> (i32, i32) {
    %c0_i32 = arith.constant 0 : i32
    %c0_i32_0 = arith.constant 0 : i32
    %c0_i32_1 = arith.constant 0 : i32
    return %c0_i32, %c0_i32_0 : i32, i32
  }
  func.func @transform_2(%arg0: i32) -> (i32, i32) {
    %c0_i32 = arith.constant 0 : i32
    %c0_i32_0 = arith.constant 0 : i32
    %c0_i32_1 = arith.constant 0 : i32
    return %c0_i32, %c0_i32_0 : i32, i32
  }
  func.func @transform_3(%arg0: i32) -> (i32, i32, i32) {
    %c0_i32 = arith.constant 0 : i32
    %c0_i32_0 = arith.constant 0 : i32
    %c0_i32_1 = arith.constant 0 : i32
    %c0_i32_2 = arith.constant 0 : i32
    return %c0_i32, %c0_i32_0, %c0_i32_1 : i32, i32, i32
  }
  func.func @transform_4(%arg0: i32) -> (i32, i32, i32) {
    %c0_i32 = arith.constant 0 : i32
    %c0_i32_0 = arith.constant 0 : i32
    %c0_i32_1 = arith.constant 0 : i32
    %c0_i32_2 = arith.constant 0 : i32
    return %c0_i32, %c0_i32_0, %c0_i32_1 : i32, i32, i32
  }
  func.func @transform_5(%arg0: i32) -> (i32, i32, i32) {
    %c0_i32 = arith.constant 0 : i32
    %c0_i32_0 = arith.constant 0 : i32
    %c0_i32_1 = arith.constant 0 : i32
    %c0_i32_2 = arith.constant 0 : i32
    return %c0_i32, %c0_i32_0, %c0_i32_1 : i32, i32, i32
  }
  func.func @transform_6(%arg0: i32) -> (i32, i32, i32) {
    %c0_i32 = arith.constant 0 : i32
    %c0_i32_0 = arith.constant 0 : i32
    %c0_i32_1 = arith.constant 0 : i32
    %c0_i32_2 = arith.constant 0 : i32
    return %c0_i32, %c0_i32_0, %c0_i32_1 : i32, i32, i32
  }
  func.func @transform_7(%arg0: i32) -> (i32, i32, i32) {
    %c0_i32 = arith.constant 0 : i32
    %c0_i32_0 = arith.constant 0 : i32
    %c0_i32_1 = arith.constant 0 : i32
    %c0_i32_2 = arith.constant 0 : i32
    return %c0_i32, %c0_i32_0, %c0_i32_1 : i32, i32, i32
  }
  func.func @transform_8(%arg0: i32) -> (i32, i32, i32) {
    %c0_i32 = arith.constant 0 : i32
    %c0_i32_0 = arith.constant 0 : i32
    %c0_i32_1 = arith.constant 0 : i32
    %c0_i32_2 = arith.constant 0 : i32
    return %c0_i32, %c0_i32_0, %c0_i32_1 : i32, i32, i32
  }
  func.func @transform_9(%arg0: i32) -> (i32, i32, i32) {
    %c0_i32 = arith.constant 0 : i32
    %c0_i32_0 = arith.constant 0 : i32
    %c0_i32_1 = arith.constant 0 : i32
    %c0_i32_2 = arith.constant 0 : i32
    return %c0_i32, %c0_i32_0, %c0_i32_1 : i32, i32, i32
  }
  func.func @transform_10(%arg0: i32) -> (i32, i32, i32) {
    %c0_i32 = arith.constant 0 : i32
    %c0_i32_0 = arith.constant 0 : i32
    %c0_i32_1 = arith.constant 0 : i32
    %c0_i32_2 = arith.constant 0 : i32
    return %c0_i32, %c0_i32_0, %c0_i32_1 : i32, i32, i32
  }
  func.func @transform_11(%arg0: i32) -> (i32, i32, i32) {
    %c0_i32 = arith.constant 0 : i32
    %c0_i32_0 = arith.constant 0 : i32
    %c0_i32_1 = arith.constant 0 : i32
    %c0_i32_2 = arith.constant 0 : i32
    return %c0_i32, %c0_i32_0, %c0_i32_1 : i32, i32, i32
  }
  func.func @transform_12(%arg0: i32) -> (i32, i32, i32) {
    %c0_i32 = arith.constant 0 : i32
    %c0_i32_0 = arith.constant 0 : i32
    %c0_i32_1 = arith.constant 0 : i32
    %c0_i32_2 = arith.constant 0 : i32
    return %c0_i32, %c0_i32_0, %c0_i32_1 : i32, i32, i32
  }
  func.func @transform_13(%arg0: i32) -> (i32, i32, i32) {
    %c0_i32 = arith.constant 0 : i32
    %c0_i32_0 = arith.constant 0 : i32
    %c0_i32_1 = arith.constant 0 : i32
    %c0_i32_2 = arith.constant 0 : i32
    return %c0_i32, %c0_i32_0, %c0_i32_1 : i32, i32, i32
  }
  func.func @transform_14(%arg0: i32) -> (i32, i32, i32) {
    %c0_i32 = arith.constant 0 : i32
    %c0_i32_0 = arith.constant 0 : i32
    %c0_i32_1 = arith.constant 0 : i32
    %c0_i32_2 = arith.constant 0 : i32
    return %c0_i32, %c0_i32_0, %c0_i32_1 : i32, i32, i32
  }
  func.func @transform_15(%arg0: i32) -> (i32, i32, i32) {
    %c0_i32 = arith.constant 0 : i32
    %c0_i32_0 = arith.constant 0 : i32
    %c0_i32_1 = arith.constant 0 : i32
    %c0_i32_2 = arith.constant 0 : i32
    return %c0_i32, %c0_i32_0, %c0_i32_1 : i32, i32, i32
  }
  func.func @transform_16(%arg0: i32) -> (i32, i32) {
    %c0_i32 = arith.constant 0 : i32
    %c0_i32_0 = arith.constant 0 : i32
    %c0_i32_1 = arith.constant 0 : i32
    return %c0_i32, %c0_i32_0 : i32, i32
  }
  func.func @transform_17(%arg0: i32) -> (i32, i32) {
    %c0_i32 = arith.constant 0 : i32
    %c0_i32_0 = arith.constant 0 : i32
    %c0_i32_1 = arith.constant 0 : i32
    return %c0_i32, %c0_i32_0 : i32, i32
  }
  func.func @transform_18(%arg0: i32) -> (i32, i32) {
    %c0_i32 = arith.constant 0 : i32
    %c0_i32_0 = arith.constant 0 : i32
    %c0_i32_1 = arith.constant 0 : i32
    return %c0_i32, %c0_i32_0 : i32, i32
  }
  func.func @transform_19(%arg0: i32) -> (i32, i32) {
    %c0_i32 = arith.constant 0 : i32
    %c0_i32_0 = arith.constant 0 : i32
    %c0_i32_1 = arith.constant 0 : i32
    return %c0_i32, %c0_i32_0 : i32, i32
  }
  func.func @transform_20(%arg0: i32) -> (i32, i32, i32) {
    %c0_i32 = arith.constant 0 : i32
    %c0_i32_0 = arith.constant 0 : i32
    %c0_i32_1 = arith.constant 0 : i32
    return %arg0, %c0_i32, %c0_i32_0 : i32, i32, i32
  }
}

</mosaic_0001>

<llo_original>
// kernel: vit_forward.1
$region0: #{vit_forward.1}
  #allocation0 [shape = 'u32[]', space=smem, size = 0x4, offset = 0x4, fixed_abs, tag = 'smem constant byte address 0x4 - core index']
  #allocation1 [shape = 'u32[72,128]{1,0:T(1,128)}', space=vmem, size = 0x9000, scoped, tag = 'internal scratch']
  #allocation2 [shape = 'f32[17,48]{1,0:T(8,128)}', space=vmem, size = 0x3000, scoped, tag = 'scratch operand']
  %s0 = inlined_call_operand.vmem [shape: f32[2,16,48], index: 0, kind: input, shape index: {}]
  %s1 = inlined_call_operand.vmem [shape: f32[48,48], index: 1, kind: input, shape index: {}]
  %s2 = inlined_call_operand.vmem [shape: f32[1,48], index: 2, kind: input, shape index: {}]
  %s3 = inlined_call_operand.vmem [shape: f32[1,1,48], index: 3, kind: input, shape index: {}]
  %s4 = inlined_call_operand.vmem [shape: f32[1,17,48], index: 4, kind: input, shape index: {}]
  %s5 = inlined_call_operand.vmem [shape: f32[2,1,48], index: 5, kind: input, shape index: {}]
  %s6 = inlined_call_operand.vmem [shape: f32[2,1,48], index: 6, kind: input, shape index: {}]
  %s7 = inlined_call_operand.vmem [shape: f32[2,48,96], index: 7, kind: input, shape index: {}]
  %s8 = inlined_call_operand.vmem [shape: f32[2,32,48], index: 8, kind: input, shape index: {}]
  %s9 = inlined_call_operand.vmem [shape: f32[2,1,48], index: 9, kind: input, shape index: {}]
  %s10 = inlined_call_operand.vmem [shape: f32[2,1,48], index: 10, kind: input, shape index: {}]
  %s11 = inlined_call_operand.vmem [shape: f32[2,1,48], index: 11, kind: input, shape index: {}]
  %s12 = inlined_call_operand.vmem [shape: f32[2,48,96], index: 12, kind: input, shape index: {}]
  %s13 = inlined_call_operand.vmem [shape: f32[2,1,96], index: 13, kind: input, shape index: {}]
  %s14 = inlined_call_operand.vmem [shape: f32[2,96,48], index: 14, kind: input, shape index: {}]
  %s15 = inlined_call_operand.vmem [shape: f32[2,1,48], index: 15, kind: input, shape index: {}]
  %s16 = inlined_call_operand.vmem [shape: f32[1,48], index: 16, kind: input, shape index: {}]
  %s17 = inlined_call_operand.vmem [shape: f32[1,48], index: 17, kind: input, shape index: {}]
  %s18 = inlined_call_operand.vmem [shape: f32[48,10], index: 18, kind: input, shape index: {}]
  %s19 = inlined_call_operand.vmem [shape: f32[1,10], index: 19, kind: input, shape index: {}]
  %s20 = inlined_call_operand.hbm [shape: f32[2,1,10], index: 20, kind: output, shape index: {}]
  %s21 = sld [smem:[#allocation0]]
  $region113: #{vit_forward.1} parent=0
    _
  %s23 = ssub.s32 1, %s21
  %s24 = scalar_select 0, %s23, %s21
  $region1: #{vit_forward.1} parent=0
    #allocation3 [shape = 'u8[1024]{0}', space=vmem, size = 0x400, scoped, tag = 'output window, operand 0']
    #allocation4 [shape = 's32[2]{0}', space=sflag, size = 0x8, scoped, tag = 'scoped memory for vit_forward.1']
    %25 = vsyncpa [#allocation4], 0
    %s26 = scalar_lea.sflag [#allocation4], 1
    %27 = vsyncpa %s26, 0
    loop: start=0, step=1, limit=4
    $region2: #{vit_forward.1} parent=1 // loop_pre_header
      _
    $region3: #{vit_forward.1} parent=1 // loop_header
      %s29 = sphi 0, %s33
      %p30 = scmp.ge.s32.totalorder %s29, 4
      %s39 = sphi 0, %s41
      %s42 = sphi 0, %s39
      %s43 = sphi 0, %s42
      %s59 = sphi 0, %s43
      %s63 = sphi 0, %s63
      %s65 = sphi 0, %s63
      %s66 = sphi 0, %s65
      %s80 = sphi 0, %s66
      %s84 = sphi 0, %s84
      %s86 = sphi 0, %s84
      %s87 = sphi 0, %s86
      %s101 = sphi 0, %s87
      %s105 = sphi 0, %s105
      %s107 = sphi 0, %s105
      %s108 = sphi 0, %s107
      %s122 = sphi 0, %s108
      %s126 = sphi 0, %s126
      %s128 = sphi 0, %s126
      %s129 = sphi 0, %s128
      %s143 = sphi 0, %s129
      %s147 = sphi 0, %s147
      %s149 = sphi 0, %s147
      %s150 = sphi 0, %s149
      %s164 = sphi 0, %s150
      %s168 = sphi 0, %s168
      %s170 = sphi 0, %s168
      %s171 = sphi 0, %s170
      %s185 = sphi 0, %s171
      %s189 = sphi 0, %s189
      %s191 = sphi 0, %s189
      %s192 = sphi 0, %s191
      %s206 = sphi 0, %s192
      %s210 = sphi 0, %s210
      %s212 = sphi 0, %s210
      %s213 = sphi 0, %s212
      %s227 = sphi 0, %s213
      %s231 = sphi 0, %s231
      %s233 = sphi 0, %s231
      %s234 = sphi 0, %s233
      %s248 = sphi 0, %s234
      %s252 = sphi 0, %s252
      %s254 = sphi 0, %s252
      %s255 = sphi 0, %s254
      %s269 = sphi 0, %s255
      %s273 = sphi 0, %s273
      %s275 = sphi 0, %s273
      %s276 = sphi 0, %s275
      %s290 = sphi 0, %s276
      %s294 = sphi 0, %s294
      %s296 = sphi 0, %s294
      %s297 = sphi 0, %s296
      %s311 = sphi 0, %s297
      %s315 = sphi 0, %s315
      %s317 = sphi 0, %s315
      %s318 = sphi 0, %s317
      %s332 = sphi 0, %s318
      %s336 = sphi 0, %s336
      %s338 = sphi 0, %s336
      %s339 = sphi 0, %s338
      %s353 = sphi 0, %s339
      %s357 = sphi 0, %s357
      %s359 = sphi 0, %s357
      %s360 = sphi 0, %s359
      %s374 = sphi 0, %s360
      %s378 = sphi 0, %s378
      %s380 = sphi 0, %s378
      %s381 = sphi 0, %s380
      %s395 = sphi 0, %s381
      %s399 = sphi 0, %s399
      %s401 = sphi 0, %s399
      %s402 = sphi 0, %s401
      %s416 = sphi 0, %s402
      %s420 = sphi 0, %s420
      %s422 = sphi 0, %s420
      %s423 = sphi 0, %s422
      %s437 = sphi 0, %s423
      %s441 = sphi 0, %s441
      %s443 = sphi 0, %s441
      %s444 = sphi 0, %s443
      %s458 = sphi 0, %s444
      %s464 = sphi 0, %s466
      %s467 = sphi 0, %s464
      %s468 = sphi 0, %s467
      %s484 = sphi 0, %s468
    $region4: #{vit_forward.1} parent=1 // loop_header_branch
      %32 = sbr.rel (%p30) target = $region8
    $region5: #{vit_forward.1} parent=1 // loop_body
      %s34 = ssub.s32 %s29, 1
      %s35 = ssub.s32 %s29, 2
      %s36 = sadd.s32 %s29, 1
      %s37 = ssub.s32 %s29, %s36
      %p38 = scmp.eq.s32.totalorder %s37, 0
      %s40 = sadd.s32 %s39, 1
      %s41 = scalar_select %p38, %s39, %s40
      %p44 = pneg %p38
      %p45 = scmp.eq.s32.totalorder %s29, 1
      %p46 = por %p44, %p45
      %p47 = scmp.ne.s32.totalorder %s39, %s42
      %p48 = scmp.eq.s32.totalorder %s29, 0
      %p49 = por %p47, %p48
      %p50 = scmp.ne.s32.totalorder %s39, %s42
      %p51 = scmp.eq.s32.totalorder %s34, 1
      %p52 = por %p50, %p51
      %p53 = scmp.ne.s32.totalorder %s42, %s43
      %p54 = scmp.eq.s32.totalorder %s34, 0
      %p55 = por %p53, %p54
      %p56 = scmp.ne.s32.totalorder %s42, %s43
      %p57 = scmp.eq.s32.totalorder %s35, 1
      %p58 = por %p56, %p57
      %p60 = scmp.ne.s32.totalorder %s43, %s59
      %p61 = scmp.eq.s32.totalorder %s35, 0
      %p62 = por %p60, %p61
      %s64 = sadd.s32 %s63, 1
      %p67 = scmp.eq.s32.totalorder %s29, 1
      %p68 = scmp.ne.s32.totalorder %s63, %s65
      %p69 = scmp.eq.s32.totalorder %s29, 0
      %p70 = por %p68, %p69
      %p71 = scmp.ne.s32.totalorder %s63, %s65
      %p72 = scmp.eq.s32.totalorder %s34, 1
      %p73 = por %p71, %p72
      %p74 = scmp.ne.s32.totalorder %s65, %s66
      %p75 = scmp.eq.s32.totalorder %s34, 0
      %p76 = por %p74, %p75
      %p77 = scmp.ne.s32.totalorder %s65, %s66
      %p78 = scmp.eq.s32.totalorder %s35, 1
      %p79 = por %p77, %p78
      %p81 = scmp.ne.s32.totalorder %s66, %s80
      %p82 = scmp.eq.s32.totalorder %s35, 0
      %p83 = por %p81, %p82
      %s85 = sadd.s32 %s84, 1
      %p88 = scmp.eq.s32.totalorder %s29, 1
      %p89 = scmp.ne.s32.totalorder %s84, %s86
      %p90 = scmp.eq.s32.totalorder %s29, 0
      %p91 = por %p89, %p90
      %p92 = scmp.ne.s32.totalorder %s84, %s86
      %p93 = scmp.eq.s32.totalorder %s34, 1
      %p94 = por %p92, %p93
      %p95 = scmp.ne.s32.totalorder %s86, %s87
      %p96 = scmp.eq.s32.totalorder %s34, 0
      %p97 = por %p95, %p96
      %p98 = scmp.ne.s32.totalorder %s86, %s87
      %p99 = scmp.eq.s32.totalorder %s35, 1
      %p100 = por %p98, %p99
      %p102 = scmp.ne.s32.totalorder %s87, %s101
      %p103 = scmp.eq.s32.totalorder %s35, 0
      %p104 = por %p102, %p103
      %s106 = sadd.s32 %s105, 1
      %p109 = scmp.eq.s32.totalorder %s29, 1
      %p110 = scmp.ne.s32.totalorder %s105, %s107
      %p111 = scmp.eq.s32.totalorder %s29, 0
      %p112 = por %p110, %p111
      %p113 = scmp.ne.s32.totalorder %s105, %s107
      %p114 = scmp.eq.s32.totalorder %s34, 1
      %p115 = por %p113, %p114
      %p116 = scmp.ne.s32.totalorder %s107, %s108
      %p117 = scmp.eq.s32.totalorder %s34, 0
      %p118 = por %p116, %p117
      %p119 = scmp.ne.s32.totalorder %s107, %s108
      %p120 = scmp.eq.s32.totalorder %s35, 1
      %p121 = por %p119, %p120
      %p123 = scmp.ne.s32.totalorder %s108, %s122
      %p124 = scmp.eq.s32.totalorder %s35, 0
      %p125 = por %p123, %p124
      %s127 = sadd.s32 %s126, 1
      %p130 = scmp.eq.s32.totalorder %s29, 1
      %p131 = scmp.ne.s32.totalorder %s126, %s128
      %p132 = scmp.eq.s32.totalorder %s29, 0
      %p133 = por %p131, %p132
      %p134 = scmp.ne.s32.totalorder %s126, %s128
      %p135 = scmp.eq.s32.totalorder %s34, 1
      %p136 = por %p134, %p135
      %p137 = scmp.ne.s32.totalorder %s128, %s129
      %p138 = scmp.eq.s32.totalorder %s34, 0
      %p139 = por %p137, %p138
      %p140 = scmp.ne.s32.totalorder %s128, %s129
      %p141 = scmp.eq.s32.totalorder %s35, 1
      %p142 = por %p140, %p141
      %p144 = scmp.ne.s32.totalorder %s129, %s143
      %p145 = scmp.eq.s32.totalorder %s35, 0
      %p146 = por %p144, %p145
      %s148 = sadd.s32 %s147, 1
      %p151 = scmp.eq.s32.totalorder %s29, 1
      %p152 = scmp.ne.s32.totalorder %s147, %s149
      %p153 = scmp.eq.s32.totalorder %s29, 0
      %p154 = por %p152, %p153
      %p155 = scmp.ne.s32.totalorder %s147, %s149
      %p156 = scmp.eq.s32.totalorder %s34, 1
      %p157 = por %p155, %p156
      %p158 = scmp.ne.s32.totalorder %s149, %s150
      %p159 = scmp.eq.s32.totalorder %s34, 0
      %p160 = por %p158, %p159
      %p161 = scmp.ne.s32.totalorder %s149, %s150
      %p162 = scmp.eq.s32.totalorder %s35, 1
      %p163 = por %p161, %p162
      %p165 = scmp.ne.s32.totalorder %s150, %s164
      %p166 = scmp.eq.s32.totalorder %s35, 0
      %p167 = por %p165, %p166
      %s169 = sadd.s32 %s168, 1
      %p172 = scmp.eq.s32.totalorder %s29, 1
      %p173 = scmp.ne.s32.totalorder %s168, %s170
      %p174 = scmp.eq.s32.totalorder %s29, 0
      %p175 = por %p173, %p174
      %p176 = scmp.ne.s32.totalorder %s168, %s170
      %p177 = scmp.eq.s32.totalorder %s34, 1
      %p178 = por %p176, %p177
      %p179 = scmp.ne.s32.totalorder %s170, %s171
      %p180 = scmp.eq.s32.totalorder %s34, 0
      %p181 = por %p179, %p180
      %p182 = scmp.ne.s32.totalorder %s170, %s171
      %p183 = scmp.eq.s32.totalorder %s35, 1
      %p184 = por %p182, %p183
      %p186 = scmp.ne.s32.totalorder %s171, %s185
      %p187 = scmp.eq.s32.totalorder %s35, 0
      %p188 = por %p186, %p187
      %s190 = sadd.s32 %s189, 1
      %p193 = scmp.eq.s32.totalorder %s29, 1
      %p194 = scmp.ne.s32.totalorder %s189, %s191
      %p195 = scmp.eq.s32.totalorder %s29, 0
      %p196 = por %p194, %p195
      %p197 = scmp.ne.s32.totalorder %s189, %s191
      %p198 = scmp.eq.s32.totalorder %s34, 1
      %p199 = por %p197, %p198
      %p200 = scmp.ne.s32.totalorder %s191, %s192
      %p201 = scmp.eq.s32.totalorder %s34, 0
      %p202 = por %p200, %p201
      %p203 = scmp.ne.s32.totalorder %s191, %s192
      %p204 = scmp.eq.s32.totalorder %s35, 1
      %p205 = por %p203, %p204
      %p207 = scmp.ne.s32.totalorder %s192, %s206
      %p208 = scmp.eq.s32.totalorder %s35, 0
      %p209 = por %p207, %p208
      %s211 = sadd.s32 %s210, 1
      %p214 = scmp.eq.s32.totalorder %s29, 1
      %p215 = scmp.ne.s32.totalorder %s210, %s212
      %p216 = scmp.eq.s32.totalorder %s29, 0
      %p217 = por %p215, %p216
      %p218 = scmp.ne.s32.totalorder %s210, %s212
      %p219 = scmp.eq.s32.totalorder %s34, 1
      %p220 = por %p218, %p219
      %p221 = scmp.ne.s32.totalorder %s212, %s213
      %p222 = scmp.eq.s32.totalorder %s34, 0
      %p223 = por %p221, %p222
      %p224 = scmp.ne.s32.totalorder %s212, %s213
      %p225 = scmp.eq.s32.totalorder %s35, 1
      %p226 = por %p224, %p225
      %p228 = scmp.ne.s32.totalorder %s213, %s227
      %p229 = scmp.eq.s32.totalorder %s35, 0
      %p230 = por %p228, %p229
      %s232 = sadd.s32 %s231, 1
      %p235 = scmp.eq.s32.totalorder %s29, 1
      %p236 = scmp.ne.s32.totalorder %s231, %s233
      %p237 = scmp.eq.s32.totalorder %s29, 0
      %p238 = por %p236, %p237
      %p239 = scmp.ne.s32.totalorder %s231, %s233
      %p240 = scmp.eq.s32.totalorder %s34, 1
      %p241 = por %p239, %p240
      %p242 = scmp.ne.s32.totalorder %s233, %s234
      %p243 = scmp.eq.s32.totalorder %s34, 0
      %p244 = por %p242, %p243
      %p245 = scmp.ne.s32.totalorder %s233, %s234
      %p246 = scmp.eq.s32.totalorder %s35, 1
      %p247 = por %p245, %p246
      %p249 = scmp.ne.s32.totalorder %s234, %s248
      %p250 = scmp.eq.s32.totalorder %s35, 0
      %p251 = por %p249, %p250
      %s253 = sadd.s32 %s252, 1
      %p256 = scmp.eq.s32.totalorder %s29, 1
      %p257 = scmp.ne.s32.totalorder %s252, %s254
      %p258 = scmp.eq.s32.totalorder %s29, 0
      %p259 = por %p257, %p258
      %p260 = scmp.ne.s32.totalorder %s252, %s254
      %p261 = scmp.eq.s32.totalorder %s34, 1
      %p262 = por %p260, %p261
      %p263 = scmp.ne.s32.totalorder %s254, %s255
      %p264 = scmp.eq.s32.totalorder %s34, 0
      %p265 = por %p263, %p264
      %p266 = scmp.ne.s32.totalorder %s254, %s255
      %p267 = scmp.eq.s32.totalorder %s35, 1
      %p268 = por %p266, %p267
      %p270 = scmp.ne.s32.totalorder %s255, %s269
      %p271 = scmp.eq.s32.totalorder %s35, 0
      %p272 = por %p270, %p271
      %s274 = sadd.s32 %s273, 1
      %p277 = scmp.eq.s32.totalorder %s29, 1
      %p278 = scmp.ne.s32.totalorder %s273, %s275
      %p279 = scmp.eq.s32.totalorder %s29, 0
      %p280 = por %p278, %p279
      %p281 = scmp.ne.s32.totalorder %s273, %s275
      %p282 = scmp.eq.s32.totalorder %s34, 1
      %p283 = por %p281, %p282
      %p284 = scmp.ne.s32.totalorder %s275, %s276
      %p285 = scmp.eq.s32.totalorder %s34, 0
      %p286 = por %p284, %p285
      %p287 = scmp.ne.s32.totalorder %s275, %s276
      %p288 = scmp.eq.s32.totalorder %s35, 1
      %p289 = por %p287, %p288
      %p291 = scmp.ne.s32.totalorder %s276, %s290
      %p292 = scmp.eq.s32.totalorder %s35, 0
      %p293 = por %p291, %p292
      %s295 = sadd.s32 %s294, 1
      %p298 = scmp.eq.s32.totalorder %s29, 1
      %p299 = scmp.ne.s32.totalorder %s294, %s296
      %p300 = scmp.eq.s32.totalorder %s29, 0
      %p301 = por %p299, %p300
      %p302 = scmp.ne.s32.totalorder %s294, %s296
      %p303 = scmp.eq.s32.totalorder %s34, 1
      %p304 = por %p302, %p303
      %p305 = scmp.ne.s32.totalorder %s296, %s297
      %p306 = scmp.eq.s32.totalorder %s34, 0
      %p307 = por %p305, %p306
      %p308 = scmp.ne.s32.totalorder %s296, %s297
      %p309 = scmp.eq.s32.totalorder %s35, 1
      %p310 = por %p308, %p309
      %p312 = scmp.ne.s32.totalorder %s297, %s311
      %p313 = scmp.eq.s32.totalorder %s35, 0
      %p314 = por %p312, %p313
      %s316 = sadd.s32 %s315, 1
      %p319 = scmp.eq.s32.totalorder %s29, 1
      %p320 = scmp.ne.s32.totalorder %s315, %s317
      %p321 = scmp.eq.s32.totalorder %s29, 0
      %p322 = por %p320, %p321
      %p323 = scmp.ne.s32.totalorder %s315, %s317
      %p324 = scmp.eq.s32.totalorder %s34, 1
      %p325 = por %p323, %p324
      %p326 = scmp.ne.s32.totalorder %s317, %s318
      %p327 = scmp.eq.s32.totalorder %s34, 0
      %p328 = por %p326, %p327
      %p329 = scmp.ne.s32.totalorder %s317, %s318
      %p330 = scmp.eq.s32.totalorder %s35, 1
      %p331 = por %p329, %p330
      %p333 = scmp.ne.s32.totalorder %s318, %s332
      %p334 = scmp.eq.s32.totalorder %s35, 0
      %p335 = por %p333, %p334
      %s337 = sadd.s32 %s336, 1
      %p340 = scmp.eq.s32.totalorder %s29, 1
      %p341 = scmp.ne.s32.totalorder %s336, %s338
      %p342 = scmp.eq.s32.totalorder %s29, 0
      %p343 = por %p341, %p342
      %p344 = scmp.ne.s32.totalorder %s336, %s338
      %p345 = scmp.eq.s32.totalorder %s34, 1
      %p346 = por %p344, %p345
      %p347 = scmp.ne.s32.totalorder %s338, %s339
      %p348 = scmp.eq.s32.totalorder %s34, 0
      %p349 = por %p347, %p348
      %p350 = scmp.ne.s32.totalorder %s338, %s339
      %p351 = scmp.eq.s32.totalorder %s35, 1
      %p352 = por %p350, %p351
      %p354 = scmp.ne.s32.totalorder %s339, %s353
      %p355 = scmp.eq.s32.totalorder %s35, 0
      %p356 = por %p354, %p355
      %s358 = sadd.s32 %s357, 1
      %p361 = scmp.eq.s32.totalorder %s29, 1
      %p362 = scmp.ne.s32.totalorder %s357, %s359
      %p363 = scmp.eq.s32.totalorder %s29, 0
      %p364 = por %p362, %p363
      %p365 = scmp.ne.s32.totalorder %s357, %s359
      %p366 = scmp.eq.s32.totalorder %s34, 1
      %p367 = por %p365, %p366
      %p368 = scmp.ne.s32.totalorder %s359, %s360
      %p369 = scmp.eq.s32.totalorder %s34, 0
      %p370 = por %p368, %p369
      %p371 = scmp.ne.s32.totalorder %s359, %s360
      %p372 = scmp.eq.s32.totalorder %s35, 1
      %p373 = por %p371, %p372
      %p375 = scmp.ne.s32.totalorder %s360, %s374
      %p376 = scmp.eq.s32.totalorder %s35, 0
      %p377 = por %p375, %p376
      %s379 = sadd.s32 %s378, 1
      %p382 = scmp.eq.s32.totalorder %s29, 1
      %p383 = scmp.ne.s32.totalorder %s378, %s380
      %p384 = scmp.eq.s32.totalorder %s29, 0
      %p385 = por %p383, %p384
      %p386 = scmp.ne.s32.totalorder %s378, %s380
      %p387 = scmp.eq.s32.totalorder %s34, 1
      %p388 = por %p386, %p387
      %p389 = scmp.ne.s32.totalorder %s380, %s381
      %p390 = scmp.eq.s32.totalorder %s34, 0
      %p391 = por %p389, %p390
      %p392 = scmp.ne.s32.totalorder %s380, %s381
      %p393 = scmp.eq.s32.totalorder %s35, 1
      %p394 = por %p392, %p393
      %p396 = scmp.ne.s32.totalorder %s381, %s395
      %p397 = scmp.eq.s32.totalorder %s35, 0
      %p398 = por %p396, %p397
      %s400 = sadd.s32 %s399, 1
      %p403 = scmp.eq.s32.totalorder %s29, 1
      %p404 = scmp.ne.s32.totalorder %s399, %s401
      %p405 = scmp.eq.s32.totalorder %s29, 0
      %p406 = por %p404, %p405
      %p407 = scmp.ne.s32.totalorder %s399, %s401
      %p408 = scmp.eq.s32.totalorder %s34, 1
      %p409 = por %p407, %p408
      %p410 = scmp.ne.s32.totalorder %s401, %s402
      %p411 = scmp.eq.s32.totalorder %s34, 0
      %p412 = por %p410, %p411
      %p413 = scmp.ne.s32.totalorder %s401, %s402
      %p414 = scmp.eq.s32.totalorder %s35, 1
      %p415 = por %p413, %p414
      %p417 = scmp.ne.s32.totalorder %s402, %s416
      %p418 = scmp.eq.s32.totalorder %s35, 0
      %p419 = por %p417, %p418
      %s421 = sadd.s32 %s420, 1
      %p424 = scmp.eq.s32.totalorder %s29, 1
      %p425 = scmp.ne.s32.totalorder %s420, %s422
      %p426 = scmp.eq.s32.totalorder %s29, 0
      %p427 = por %p425, %p426
      %p428 = scmp.ne.s32.totalorder %s420, %s422
      %p429 = scmp.eq.s32.totalorder %s34, 1
      %p430 = por %p428, %p429
      %p431 = scmp.ne.s32.totalorder %s422, %s423
      %p432 = scmp.eq.s32.totalorder %s34, 0
      %p433 = por %p431, %p432
      %p434 = scmp.ne.s32.totalorder %s422, %s423
      %p435 = scmp.eq.s32.totalorder %s35, 1
      %p436 = por %p434, %p435
      %p438 = scmp.ne.s32.totalorder %s423, %s437
      %p439 = scmp.eq.s32.totalorder %s35, 0
      %p440 = por %p438, %p439
      %s442 = sadd.s32 %s441, 1
      %p445 = scmp.eq.s32.totalorder %s29, 1
      %p446 = scmp.ne.s32.totalorder %s441, %s443
      %p447 = scmp.eq.s32.totalorder %s29, 0
      %p448 = por %p446, %p447
      %p449 = scmp.ne.s32.totalorder %s441, %s443
      %p450 = scmp.eq.s32.totalorder %s34, 1
      %p451 = por %p449, %p450
      %p452 = scmp.ne.s32.totalorder %s443, %s444
      %p453 = scmp.eq.s32.totalorder %s34, 0
      %p454 = por %p452, %p453
      %p455 = scmp.ne.s32.totalorder %s443, %s444
      %p456 = scmp.eq.s32.totalorder %s35, 1
      %p457 = por %p455, %p456
      %p459 = scmp.ne.s32.totalorder %s444, %s458
      %p460 = scmp.eq.s32.totalorder %s35, 0
      %p461 = por %p459, %p460
      %s462 = ssub.s32 %s29, %s36
      %p463 = scmp.eq.s32.totalorder %s462, 0
      %s465 = sadd.s32 %s464, 1
      %s466 = scalar_select %p463, %s464, %s465
      %p469 = pneg %p463
      %p470 = scmp.eq.s32.totalorder %s29, 1
      %p471 = por %p469, %p470
      %p472 = scmp.ne.s32.totalorder %s464, %s467
      %p473 = scmp.eq.s32.totalorder %s29, 0
      %p474 = por %p472, %p473
      %p475 = scmp.ne.s32.totalorder %s464, %s467
      %p476 = scmp.eq.s32.totalorder %s34, 1
      %p477 = por %p475, %p476
      %p478 = scmp.ne.s32.totalorder %s467, %s468
      %p479 = scmp.eq.s32.totalorder %s34, 0
      %p480 = por %p478, %p479
      %p481 = scmp.ne.s32.totalorder %s467, %s468
      %p482 = scmp.eq.s32.totalorder %s35, 1
      %p483 = por %p481, %p482
      %p485 = scmp.ne.s32.totalorder %s468, %s484
      %p486 = scmp.eq.s32.totalorder %s35, 0
      %p487 = por %p485, %p486
      %p488 = scmp.le.s32.totalorder 1, %s29
      %p489 = scmp.lt.s32.totalorder %s29, 3
      %p490 = pnand %p488, %p489
      %p491 = pneg %p490
      // Predicated region
      $region9: #{vit_forward.1} parent=5 // pred_check
        _
      $region10: #{vit_forward.1} parent=5 // pred_check_branch
        %493 = sbr.rel (%p490) target = $region12
      $region11: #{vit_forward.1} parent=5 // pred_region
        %s494 = ssub.s32 %s29, 1
        // Predicated region
        $region13: #{vit_forward.1} parent=11 // pred_check
          %p495 = pneg %p76
        $region14: #{vit_forward.1} parent=11 // pred_check_branch
          %497 = sbr.rel (%p495) target = $region16
        $region15: #{vit_forward.1} parent=11 // pred_region
          _
        $region16: #{vit_forward.1} parent=11 // pred_fallthru
          _
        // Predicated region
        $region17: #{vit_forward.1} parent=11 // pred_check
          %p498 = pneg %p97
        $region18: #{vit_forward.1} parent=11 // pred_check_branch
          %500 = sbr.rel (%p498) target = $region20
        $region19: #{vit_forward.1} parent=11 // pred_region
          _
        $region20: #{vit_forward.1} parent=11 // pred_fallthru
          _
        // Predicated region
        $region21: #{vit_forward.1} parent=11 // pred_check
          %p501 = pneg %p118
        $region22: #{vit_forward.1} parent=11 // pred_check_branch
          %503 = sbr.rel (%p501) target = $region24
        $region23: #{vit_forward.1} parent=11 // pred_region
          _
        $region24: #{vit_forward.1} parent=11 // pred_fallthru
          _
        // Predicated region
        $region25: #{vit_forward.1} parent=11 // pred_check
          %p504 = pneg %p139
        $region26: #{vit_forward.1} parent=11 // pred_check_branch
          %506 = sbr.rel (%p504) target = $region28
        $region27: #{vit_forward.1} parent=11 // pred_region
          _
        $region28: #{vit_forward.1} parent=11 // pred_fallthru
          _
        // Predicated region
        $region29: #{vit_forward.1} parent=11 // pred_check
          %p507 = pneg %p160
        $region30: #{vit_forward.1} parent=11 // pred_check_branch
          %509 = sbr.rel (%p507) target = $region32
        $region31: #{vit_forward.1} parent=11 // pred_region
          _
        $region32: #{vit_forward.1} parent=11 // pred_fallthru
          _
        // Predicated region
        $region33: #{vit_forward.1} parent=11 // pred_check
          %p510 = pneg %p181
        $region34: #{vit_forward.1} parent=11 // pred_check_branch
          %512 = sbr.rel (%p510) target = $region36
        $region35: #{vit_forward.1} parent=11 // pred_region
          _
        $region36: #{vit_forward.1} parent=11 // pred_fallthru
          _
        // Predicated region
        $region37: #{vit_forward.1} parent=11 // pred_check
          %p513 = pneg %p202
        $region38: #{vit_forward.1} parent=11 // pred_check_branch
          %515 = sbr.rel (%p513) target = $region40
        $region39: #{vit_forward.1} parent=11 // pred_region
          _
        $region40: #{vit_forward.1} parent=11 // pred_fallthru
          _
        // Predicated region
        $region41: #{vit_forward.1} parent=11 // pred_check
          %p516 = pneg %p223
        $region42: #{vit_forward.1} parent=11 // pred_check_branch
          %518 = sbr.rel (%p516) target = $region44
        $region43: #{vit_forward.1} parent=11 // pred_region
          _
        $region44: #{vit_forward.1} parent=11 // pred_fallthru
          _
        // Predicated region
        $region45: #{vit_forward.1} parent=11 // pred_check
          %p519 = pneg %p244
        $region46: #{vit_forward.1} parent=11 // pred_check_branch
          %521 = sbr.rel (%p519) target = $region48
        $region47: #{vit_forward.1} parent=11 // pred_region
          _
        $region48: #{vit_forward.1} parent=11 // pred_fallthru
          _
        // Predicated region
        $region49: #{vit_forward.1} parent=11 // pred_check
          %p522 = pneg %p265
        $region50: #{vit_forward.1} parent=11 // pred_check_branch
          %524 = sbr.rel (%p522) target = $region52
        $region51: #{vit_forward.1} parent=11 // pred_region
          _
        $region52: #{vit_forward.1} parent=11 // pred_fallthru
          _
        // Predicated region
        $region53: #{vit_forward.1} parent=11 // pred_check
          %p525 = pneg %p286
        $region54: #{vit_forward.1} parent=11 // pred_check_branch
          %527 = sbr.rel (%p525) target = $region56
        $region55: #{vit_forward.1} parent=11 // pred_region
          _
        $region56: #{vit_forward.1} parent=11 // pred_fallthru
          _
        // Predicated region
        $region57: #{vit_forward.1} parent=11 // pred_check
          %p528 = pneg %p307
        $region58: #{vit_forward.1} parent=11 // pred_check_branch
          %530 = sbr.rel (%p528) target = $region60
        $region59: #{vit_forward.1} parent=11 // pred_region
          _
        $region60: #{vit_forward.1} parent=11 // pred_fallthru
          _
        // Predicated region
        $region61: #{vit_forward.1} parent=11 // pred_check
          %p531 = pneg %p328
        $region62: #{vit_forward.1} parent=11 // pred_check_branch
          %533 = sbr.rel (%p531) target = $region64
        $region63: #{vit_forward.1} parent=11 // pred_region
          _
        $region64: #{vit_forward.1} parent=11 // pred_fallthru
          _
        // Predicated region
        $region65: #{vit_forward.1} parent=11 // pred_check
          %p534 = pneg %p349
        $region66: #{vit_forward.1} parent=11 // pred_check_branch
          %536 = sbr.rel (%p534) target = $region68
        $region67: #{vit_forward.1} parent=11 // pred_region
          _
        $region68: #{vit_forward.1} parent=11 // pred_fallthru
          _
        // Predicated region
        $region69: #{vit_forward.1} parent=11 // pred_check
          %p537 = pneg %p370
        $region70: #{vit_forward.1} parent=11 // pred_check_branch
          %539 = sbr.rel (%p537) target = $region72
        $region71: #{vit_forward.1} parent=11 // pred_region
          _
        $region72: #{vit_forward.1} parent=11 // pred_fallthru
          _
        // Predicated region
        $region73: #{vit_forward.1} parent=11 // pred_check
          %p540 = pneg %p391
        $region74: #{vit_forward.1} parent=11 // pred_check_branch
          %542 = sbr.rel (%p540) target = $region76
        $region75: #{vit_forward.1} parent=11 // pred_region
          _
        $region76: #{vit_forward.1} parent=11 // pred_fallthru
          _
        // Predicated region
        $region77: #{vit_forward.1} parent=11 // pred_check
          %p543 = pneg %p412
        $region78: #{vit_forward.1} parent=11 // pred_check_branch
          %545 = sbr.rel (%p543) target = $region80
        $region79: #{vit_forward.1} parent=11 // pred_region
          _
        $region80: #{vit_forward.1} parent=11 // pred_fallthru
          _
        // Predicated region
        $region81: #{vit_forward.1} parent=11 // pred_check
          %p546 = pneg %p433
        $region82: #{vit_forward.1} parent=11 // pred_check_branch
          %548 = sbr.rel (%p546) target = $region84
        $region83: #{vit_forward.1} parent=11 // pred_region
          _
        $region84: #{vit_forward.1} parent=11 // pred_fallthru
          _
        // Predicated region
        $region85: #{vit_forward.1} parent=11 // pred_check
          %p549 = pneg %p454
        $region86: #{vit_forward.1} parent=11 // pred_check_branch
          %551 = sbr.rel (%p549) target = $region88
        $region87: #{vit_forward.1} parent=11 // pred_region
          _
        $region88: #{vit_forward.1} parent=11 // pred_fallthru
          _
      $region12: #{vit_forward.1} parent=5 // pred_fallthru
        _
      %p552 = scmp.lt.s32.totalorder %s29, 2
      // Predicated region
      $region89: #{vit_forward.1} parent=5 // pred_check
        %p553 = pneg %p552
      $region90: #{vit_forward.1} parent=5 // pred_check_branch
        %555 = sbr.rel (%p553) target = $region92
      $region91: #{vit_forward.1} parent=5 // pred_region
        // Predicated region
        $region93: #{vit_forward.1} parent=91 // pred_check
          %p556 = pneg %p49
        $region94: #{vit_forward.1} parent=91 // pred_check_branch
          %558 = sbr.rel (%p556) target = $region96
        $region95: #{vit_forward.1} parent=91 // pred_region
          %p559 = scmp.lt.s32.totalorder %s29, 1
          %s560 = scalar_select %p559, %s29, 1
          %s561 = smul.addr %s560, 2
          %s562 = smul.addr %s561, 8
          %s563 = scalar_lea.vmem %s0, %s562
        $region96: #{vit_forward.1} parent=91 // pred_fallthru
          _
      $region92: #{vit_forward.1} parent=5 // pred_fallthru
        _
      %p564 = scmp.le.s32.totalorder 1, %s29
      %p565 = scmp.lt.s32.totalorder %s29, 3
      %p566 = pnand %p564, %p565
      %p567 = pneg %p566
      // Predicated region
      $region97: #{vit_forward.1} parent=5 // pred_check
        _
      $region98: #{vit_forward.1} parent=5 // pred_check_branch
        %569 = sbr.rel (%p566) target = $region100
      $region99: #{vit_forward.1} parent=5 // pred_region
        %s570 = ssub.s32 %s29, 1
        %p571 = scmp.lt.s32.totalorder %s34, 1
        %s572 = scalar_select %p571, %s34, 1
        %s573 = smul.addr %s572, 2
        %s574 = smul.addr %s573, 8
        %s575 = scalar_lea.vmem %s0, %s574
        %p576 = pneg %p55
        %p577 = pneg %p52
        %p578 = pneg %p76
        %p579 = pneg %p73
        %p580 = pneg %p97
        %p581 = pneg %p94
        %p582 = pneg %p118
        %p583 = pneg %p115
        %p584 = pneg %p139
        %p585 = pneg %p136
        %p586 = pneg %p160
        %p587 = pneg %p157
        %p588 = pneg %p181
        %p589 = pneg %p178
        %p590 = pneg %p202
        %p591 = pneg %p199
        %p592 = pneg %p223
        %p593 = pneg %p220
        %p594 = pneg %p244
        %p595 = pneg %p241
        %p596 = pneg %p265
        %p597 = pneg %p262
        %p598 = pneg %p286
        %p599 = pneg %p283
        %p600 = pneg %p307
        %p601 = pneg %p304
        %p602 = pneg %p328
        %p603 = pneg %p325
        %p604 = pneg %p349
        %p605 = pneg %p346
        %p606 = pneg %p370
        %p607 = pneg %p367
        %p608 = pneg %p391
        %p609 = pneg %p388
        %p610 = pneg %p412
        %p611 = pneg %p409
        %p612 = pneg %p433
        %p613 = pneg %p430
        %p614 = pneg %p454
        %p615 = pneg %p451
        %p616 = pneg %p480
        %p617 = pneg %p477
        %s618 = sand.u32 %s467, 1
        %s619 = scalar_lea.sflag [#allocation4], %s618
        %s620 = sand.u32 %s467, 1
        %s621 = scalar_lea.vmem [#allocation3], %s620
        %p622 = scmp.lt.s32.totalorder %s34, 1
        %s623 = scalar_select %p622, %s34, 1
        %s624 = smul.addr %s623, 2
        %s625 = smul.addr %s624, 8
        %s626 = scalar_lea.vmem %s0, %s625
        %v627 = vld [vmem:[%s4] sm:$0xff]
        %v628 = vld [vmem:[%s4 + $0x8] sm:$0xff]
        %v629 = vld [vmem:[%s4 + $0x10] sm:$0x1]
        %v630 = vld [vmem:[%s626] sm:$0xff]
        %v631 = vld [vmem:[%s626 + $0x8] sm:$0xff]
        %v632 = vld [vmem:[%s1] sm:$0xff]
        %v633 = vld [vmem:[%s1 + $0x8] sm:$0xff]
        %v634 = vld [vmem:[%s1 + $0x10] sm:$0xff]
        %v635 = vld [vmem:[%s1 + $0x18] sm:$0xff]
        %v636 = vld [vmem:[%s1 + $0x20] sm:$0xff]
        %v637 = vld [vmem:[%s1 + $0x28] sm:$0xff]
        %v638 = vld [vmem:[%s2] sm:$0x1]
        %v640 = vperm.slane %v638, 0
        %vm642 = vcmask 392192
        %v644 = vsel %vm642, %v630, 0
        %v647 = vsel %vm642, %v631, 0
        %649 = vmatpush.msra.mxu0 0.0
        %650 = vmatpush.msra.mxu0 0.0
        %651 = vmatpush.msra.mxu0 0.0
        %652 = vmatpush.msra.mxu0 0.0
        %653 = vmatpush.msra.mxu0 0.0
        %654 = vmatpush.msra.mxu0 0.0
        %655 = vmatpush.msra.mxu0 0.0
        %656 = vmatpush.msra.mxu0 0.0
        %657 = vmatpush.msra.mxu0 0.0
        %658 = vmatpush.msra.mxu0 0.0
        %659 = vmatpush.msra.mxu0 %v637
        %660 = vmatpush.msra.mxu0 %v636
        %661 = vmatpush.msra.mxu0 %v635
        %662 = vmatpush.msra.mxu0 %v634
        %663 = vmatpush.msra.mxu0 %v633
        %664 = vmatpush.msra.mxu0 %v632
        %665 = vmatmul.f32.gmra.mxu0 %v644
        %v666 = vpop.f32.mrf.mxu0
        %v667 = vadd.f32 %v640, %v666
        %668 = vmatmul.f32.gmra.mxu0 %v647
        %v669 = vpop.f32.mrf.mxu0
        %v670 = vadd.f32 %v640, %v669
        %671 = vdwg.mxu0
        %v672 = vld [vmem:[%s3] sm:$0x1]
        %v673 = vadd.f32 %v672, %v627
        %vm674 = vcmask 385024
        %675 = vst.msk [vmem:[#allocation2] sm:$0x1] %vm674, %v673
        %vm679 = vcmask 1046528
        %v680 = vrot.slane %v627, 1
        %v681 = vrot.slane %v628, 1
        %v682 = vsel %vm679, %v680, %v681
        %v683 = vrot.slane %v629, 1
        %v684 = vsel %vm679, %v681, %v683
        %v687 = vadd.f32 %v667, %v682
        %v688 = vadd.f32 %v670, %v684
        %689 = vst.msk [vmem:[#allocation2 + $0x1] sm:$0xff] %vm642, %v687
        %690 = vst.msk [vmem:[#allocation2 + $0x9] sm:$0xff] %vm642, %v688
        %v691 = vld [vmem:[#allocation2] sm:$0xff]
        %v692 = vld [vmem:[#allocation2 + $0x8] sm:$0xff]
        %v693 = vld [vmem:[#allocation2 + $0x10] sm:$0x1]
        %v694 = vld [vmem:[%s5] sm:$0x1]
        %v695 = vld [vmem:[%s6] sm:$0x1]
        %v696 = vsel %vm642, %v691, 0.0
        %697 = vadd.xlane.f32.xlu0 %v696
        %v698 = vpop.xlane.xlu0 %697
        %v699 = vsel %vm642, %v692, 0.0
        %700 = vadd.xlane.f32.xlu0 %v699
        %v701 = vpop.xlane.xlu0 %700
        %v702 = vsel %vm674, %v693, 0.0
        %703 = vadd.xlane.f32.xlu0 %v702
        %v704 = vpop.xlane.xlu0 %703
        %v705 = vrcp.pop 48.0
        %v706 = vmul.f32 48.0, %v705
        %v707 = vsub.f32 1.0, %v706
        %v708 = vmul.f32 %v705, %v707
        %v709 = vadd.f32 %v705, %v708
        %vm710 = vweird.f32 %v705
        %v711 = vsel %vm710, %v705, %v709
        %v712 = vmul.f32 %v698, %v711
        %v713 = vmul.f32 %v701, %v711
        %v714 = vmul.f32 %v704, %v711
        %v715 = vsub.f32 %v691, %v712
        %v716 = vsub.f32 %v692, %v713
        %v717 = vsub.f32 %v693, %v714
        %v718 = vmul.f32 %v715, %v715
        %v719 = vmul.f32 %v716, %v716
        %v720 = vmul.f32 %v717, %v717
        %v721 = vsel %vm642, %v718, 0.0
        %722 = vadd.xlane.f32.xlu0 %v721
        %v723 = vpop.xlane.xlu0 %722
        %v724 = vsel %vm642, %v719, 0.0
        %725 = vadd.xlane.f32.xlu0 %v724
        %v726 = vpop.xlane.xlu0 %725
        %v727 = vsel %vm674, %v720, 0.0
        %728 = vadd.xlane.f32.xlu0 %v727
        %v729 = vpop.xlane.xlu0 %728
        %v730 = vmul.f32 %v723, %v711
        %v731 = vmul.f32 %v726, %v711
        %v732 = vmul.f32 %v729, %v711
        %v733 = vadd.f32 %v730, 1e-05
        %v734 = vadd.f32 %v731, 1e-05
        %v735 = vadd.f32 %v732, 1e-05
        %v736 = vrsqrt.pop %v733
        %v737 = vmul.f32 %v736, %v733
        %v738 = vmul.f32 %v737, %v736
        %v739 = vmul.f32 0.5, %v738
        %v740 = vsub.f32 1.5, %v739
        %v741 = vmul.f32 %v736, %v740
        %vm742 = vweird.f32 %v733
        %vm743 = vweird.f32 %v736
        %vm744 = vmor %vm742, %vm743
        %v745 = vsel %vm744, %v736, %v741
        %v746 = vrsqrt.pop %v734
        %v747 = vmul.f32 %v746, %v734
        %v748 = vmul.f32 %v747, %v746
        %v749 = vmul.f32 0.5, %v748
        %v750 = vsub.f32 1.5, %v749
        %v751 = vmul.f32 %v746, %v750
        %vm752 = vweird.f32 %v734
        %vm753 = vweird.f32 %v746
        %vm754 = vmor %vm752, %vm753
        %v755 = vsel %vm754, %v746, %v751
        %v756 = vrsqrt.pop %v735
        %v757 = vmul.f32 %v756, %v735
        %v758 = vmul.f32 %v757, %v756
        %v759 = vmul.f32 0.5, %v758
        %v760 = vsub.f32 1.5, %v759
        %v761 = vmul.f32 %v756, %v760
        %vm762 = vweird.f32 %v735
        %vm763 = vweird.f32 %v756
        %vm764 = vmor %vm762, %vm763
        %v765 = vsel %vm764, %v756, %v761
        %v766 = vmul.f32 %v715, %v745
        %v767 = vmul.f32 %v716, %v755
        %v768 = vmul.f32 %v717, %v765
        %v770 = vperm.slane %v694, 0
        %v772 = vmul.f32 %v766, %v770
        %v773 = vmul.f32 %v767, %v770
        %v774 = vmul.f32 %v768, %v770
        %v776 = vperm.slane %v695, 0
        %v778 = vadd.f32 %v772, %v776
        %v779 = vadd.f32 %v773, %v776
        %v780 = vadd.f32 %v774, %v776
        %v781 = vld [vmem:[%s7] sm:$0xff]
        %v782 = vld [vmem:[%s7 + $0x8] sm:$0xff]
        %v783 = vld [vmem:[%s7 + $0x10] sm:$0xff]
        %v784 = vld [vmem:[%s7 + $0x18] sm:$0xff]
        %v785 = vld [vmem:[%s7 + $0x20] sm:$0xff]
        %v786 = vld [vmem:[%s7 + $0x28] sm:$0xff]
        %v788 = vsel %vm642, %v778, 0
        %v791 = vsel %vm642, %v779, 0
        %v794 = vsel %vm642, %v780, 0
        %796 = vmatpush.msra.mxu0 0.0
        %797 = vmatpush.msra.mxu0 0.0
        %798 = vmatpush.msra.mxu0 0.0
        %799 = vmatpush.msra.mxu0 0.0
        %800 = vmatpush.msra.mxu0 0.0
        %801 = vmatpush.msra.mxu0 0.0
        %802 = vmatpush.msra.mxu0 0.0
        %803 = vmatpush.msra.mxu0 0.0
        %804 = vmatpush.msra.mxu0 0.0
        %805 = vmatpush.msra.mxu0 0.0
        %806 = vmatpush.msra.mxu0 %v786
        %807 = vmatpush.msra.mxu0 %v785
        %808 = vmatpush.msra.mxu0 %v784
        %809 = vmatpush.msra.mxu0 %v783
        %810 = vmatpush.msra.mxu0 %v782
        %811 = vmatpush.msra.mxu0 %v781
        %812 = vmatmul.f32.gmra.mxu0 %v788
        %v813 = vpop.f32.mrf.mxu0
        %v814 = vadd.f32 0.0, %v813
        %815 = vmatmul.f32.gmra.mxu0 %v791
        %v816 = vpop.f32.mrf.mxu0
        %v817 = vadd.f32 0.0, %v816
        %818 = vmatmul.f32.gmra.mxu0 %v794
        %v819 = vpop.f32.mrf.mxu0
        %v820 = vadd.f32 0.0, %v819
        %821 = vdwg.mxu0
        %v822 = vld [vmem:[%s8] sm:$0xff]
        %v823 = vld [vmem:[%s8 + $0x8] sm:$0xff]
        %v824 = vld [vmem:[%s8 + $0x10] sm:$0xff]
        %v825 = vld [vmem:[%s8 + $0x18] sm:$0xff]
        %v826 = vld [vmem:[%s9] sm:$0x1]
        %v827 = vmul.f32 %v814, 0.25
        %v828 = vmul.f32 %v817, 0.25
        %v829 = vmul.f32 %v820, 0.25
        %833 = vrot.lane.b32.xlu0 %v814, 96
        %v834 = vpop.permute.xlu0 %833
        %835 = vrot.lane.b32.xlu0 %v817, 96
        %v836 = vpop.permute.xlu0 %835
        %837 = vrot.lane.b32.xlu0 %v820, 96
        %v838 = vpop.permute.xlu0 %837
        %vm839 = vcmask 130048
        %v841 = vsel %vm839, %v827, 0
        %v844 = vsel %vm839, %v828, 0
        %v847 = vsel %vm839, %v829, 0
        %v849 = vsel %vm839, %v834, 0
        %v851 = vsel %vm839, %v836, 0
        %v853 = vsel %vm839, %v838, 0
        %855 = vmatpush.xpose.msra.mxu0 0.0
        %856 = vmatpush.xpose.msra.mxu0 0.0
        %857 = vmatpush.xpose.msra.mxu0 0.0
        %858 = vmatpush.xpose.msra.mxu0 0.0
        %859 = vmatpush.xpose.msra.mxu0 0.0
        %860 = vmatpush.xpose.msra.mxu0 0.0
        %861 = vmatpush.xpose.msra.mxu0 0.0
        %862 = vmatpush.xpose.msra.mxu0 0.0
        %863 = vmatpush.xpose.msra.mxu0 0.0
        %864 = vmatpush.xpose.msra.mxu0 0.0
        %865 = vmatpush.xpose.msra.mxu0 0.0
        %866 = vmatpush.xpose.msra.mxu0 0.0
        %867 = vmatpush.xpose.msra.mxu0 0.0
        %868 = vmatpush.xpose.msra.mxu0 %v853
        %869 = vmatpush.xpose.msra.mxu0 %v851
        %870 = vmatpush.xpose.msra.mxu0 %v849
        %871 = vmatmul.f32.gmra.mxu0 %v841
        %v872 = vpop.f32.mrf.mxu0
        %v873 = vadd.f32 0.0, %v872
        %874 = vmatmul.f32.gmra.mxu0 %v844
        %v875 = vpop.f32.mrf.mxu0
        %v876 = vadd.f32 0.0, %v875
        %877 = vmatmul.f32.gmra.mxu0 %v847
        %v878 = vpop.f32.mrf.mxu0
        %v879 = vadd.f32 0.0, %v878
        %880 = vdwg.mxu0
        %vm881 = vcmask 138240
        %v882 = vsel %vm881, %v873, -inf
        %883 = vmax.xlane.f32.xlu0 %v882
        %v884 = vpop.xlane.xlu0 %883
        %v885 = vsel %vm881, %v876, -inf
        %886 = vmax.xlane.f32.xlu0 %v885
        %v887 = vpop.xlane.xlu0 %886
        %vm888 = vcmask 131072
        %v889 = vsel %vm888, %v879, -inf
        %890 = vmax.xlane.f32.xlu0 %v889
        %v891 = vpop.xlane.xlu0 %890
        %v892 = vsub.f32 %v873, %v884
        %v893 = vsub.f32 %v876, %v887
        %v894 = vsub.f32 %v879, %v891
        %v895 = vmul.f32 %v892, 1.442695
        %v896 = vpow.pop %v895
        %v897 = vmul.f32 %v893, 1.442695
        %v898 = vpow.pop %v897
        %v899 = vmul.f32 %v894, 1.442695
        %v900 = vpow.pop %v899
        %v901 = vsel %vm881, %v896, 0.0
        %902 = vadd.xlane.f32.xlu0 %v901
        %v903 = vpop.xlane.xlu0 %902
        %v904 = vsel %vm881, %v898, 0.0
        %905 = vadd.xlane.f32.xlu0 %v904
        %v906 = vpop.xlane.xlu0 %905
        %v907 = vsel %vm888, %v900, 0.0
        %908 = vadd.xlane.f32.xlu0 %v907
        %v909 = vpop.xlane.xlu0 %908
        %v910 = vrcp.pop %v903
        %v911 = vrcp.pop %v906
        %v912 = vrcp.pop %v909
        %v913 = vmul.f32 %v896, %v910
        %v914 = vmul.f32 %v898, %v911
        %v915 = vmul.f32 %v900, %v912
        %916 = vrot.lane.b32.xlu0 %v814, 64
        %v917 = vpop.permute.xlu0 %916
        %918 = vrot.lane.b32.xlu0 %v817, 64
        %v919 = vpop.permute.xlu0 %918
        %920 = vrot.lane.b32.xlu0 %v820, 64
        %v921 = vpop.permute.xlu0 %920
        %v925 = vsel %vm881, %v913, 0
        %v928 = vsel %vm881, %v914, 0
        %v931 = vsel %vm881, %v915, 0
        %vm933 = vcmask 1040384
        %v934 = vsel %vm933, %v921, 0
        %936 = vmatpush.msra.mxu0 0.0
        %937 = vmatpush.msra.mxu0 0.0
        %938 = vmatpush.msra.mxu0 0.0
        %939 = vmatpush.msra.mxu0 0.0
        %940 = vmatpush.msra.mxu0 0.0
        %941 = vmatpush.msra.mxu0 0.0
        %942 = vmatpush.msra.mxu0 0.0
        %943 = vmatpush.msra.mxu0 0.0
        %944 = vmatpush.msra.mxu0 0.0
        %945 = vmatpush.msra.mxu0 0.0
        %946 = vmatpush.msra.mxu0 0.0
        %947 = vmatpush.msra.mxu0 0.0
        %948 = vmatpush.msra.mxu0 0.0
        %949 = vmatpush.msra.mxu0 %v934
        %950 = vmatpush.msra.mxu0 %v919
        %951 = vmatpush.msra.mxu0 %v917
        %952 = vmatmul.f32.gmra.mxu0 %v925
        %v953 = vpop.f32.mrf.mxu0
        %v954 = vadd.f32 0.0, %v953
        %955 = vmatmul.f32.gmra.mxu0 %v928
        %v956 = vpop.f32.mrf.mxu0
        %v957 = vadd.f32 0.0, %v956
        %958 = vmatmul.f32.gmra.mxu0 %v931
        %v959 = vpop.f32.mrf.mxu0
        %v960 = vadd.f32 0.0, %v959
        %961 = vdwg.mxu0
        %v963 = vsel %vm839, %v954, 0
        %v966 = vsel %vm839, %v957, 0
        %v969 = vsel %vm839, %v960, 0
        %971 = vmatpush.msra.mxu0 0.0
        %972 = vmatpush.msra.mxu0 0.0
        %973 = vmatpush.msra.mxu0 0.0
        %974 = vmatpush.msra.mxu0 0.0
        %975 = vmatpush.msra.mxu0 0.0
        %976 = vmatpush.msra.mxu0 0.0
        %977 = vmatpush.msra.mxu0 0.0
        %978 = vmatpush.msra.mxu0 0.0
        %979 = vmatpush.msra.mxu0 0.0
        %980 = vmatpush.msra.mxu0 0.0
        %981 = vmatpush.msra.mxu0 0.0
        %982 = vmatpush.msra.mxu0 0.0
        %983 = vmatpush.msra.mxu0 0.0
        %984 = vmatpush.msra.mxu0 0.0
        %985 = vmatpush.msra.mxu0 %v823
        %986 = vmatpush.msra.mxu0 %v822
        %987 = vmatmul.f32.gmra.mxu0 %v963
        %v988 = vpop.f32.mrf.mxu0
        %v989 = vadd.f32 0.0, %v988
        %990 = vmatmul.f32.gmra.mxu0 %v966
        %v991 = vpop.f32.mrf.mxu0
        %v992 = vadd.f32 0.0, %v991
        %993 = vmatmul.f32.gmra.mxu0 %v969
        %v994 = vpop.f32.mrf.mxu0
        %v995 = vadd.f32 0.0, %v994
        %996 = vdwg.mxu0
        %v998 = vperm.slane %v826, 0
        %v1000 = vadd.f32 %v998, %v989
        %v1001 = vadd.f32 %v998, %v992
        %v1002 = vadd.f32 %v998, %v995
        %1003 = vrot.lane.b32.xlu0 %v827, 112
        %v1004 = vpop.permute.xlu0 %1003
        %1005 = vrot.lane.b32.xlu0 %v828, 112
        %v1006 = vpop.permute.xlu0 %1005
        %1007 = vrot.lane.b32.xlu0 %v829, 112
        %v1008 = vpop.permute.xlu0 %1007
        %1009 = vrot.lane.b32.xlu0 %v814, 80
        %v1010 = vpop.permute.xlu0 %1009
        %1011 = vrot.lane.b32.xlu0 %v817, 80
        %v1012 = vpop.permute.xlu0 %1011
        %1013 = vrot.lane.b32.xlu0 %v820, 80
        %v1014 = vpop.permute.xlu0 %1013
        %v1015 = vsel %vm839, %v1004, 0
        %v1017 = vsel %vm839, %v1006, 0
        %v1019 = vsel %vm839, %v1008, 0
        %v1021 = vsel %vm839, %v1010, 0
        %v1023 = vsel %vm839, %v1012, 0
        %v1025 = vsel %vm839, %v1014, 0
        %1027 = vmatpush.xpose.msra.mxu0 0.0
        %1028 = vmatpush.xpose.msra.mxu0 0.0
        %1029 = vmatpush.xpose.msra.mxu0 0.0
        %1030 = vmatpush.xpose.msra.mxu0 0.0
        %1031 = vmatpush.xpose.msra.mxu0 0.0
        %1032 = vmatpush.xpose.msra.mxu0 0.0
        %1033 = vmatpush.xpose.msra.mxu0 0.0
        %1034 = vmatpush.xpose.msra.mxu0 0.0
        %1035 = vmatpush.xpose.msra.mxu0 0.0
        %1036 = vmatpush.xpose.msra.mxu0 0.0
        %1037 = vmatpush.xpose.msra.mxu0 0.0
        %1038 = vmatpush.xpose.msra.mxu0 0.0
        %1039 = vmatpush.xpose.msra.mxu0 0.0
        %1040 = vmatpush.xpose.msra.mxu0 %v1025
        %1041 = vmatpush.xpose.msra.mxu0 %v1023
        %1042 = vmatpush.xpose.msra.mxu0 %v1021
        %1043 = vmatmul.f32.gmra.mxu0 %v1015
        %v1044 = vpop.f32.mrf.mxu0
        %v1045 = vadd.f32 0.0, %v1044
        %1046 = vmatmul.f32.gmra.mxu0 %v1017
        %v1047 = vpop.f32.mrf.mxu0
        %v1048 = vadd.f32 0.0, %v1047
        %1049 = vmatmul.f32.gmra.mxu0 %v1019
        %v1050 = vpop.f32.mrf.mxu0
        %v1051 = vadd.f32 0.0, %v1050
        %1052 = vdwg.mxu0
        %v1053 = vsel %vm881, %v1045, -inf
        %1054 = vmax.xlane.f32.xlu0 %v1053
        %v1055 = vpop.xlane.xlu0 %1054
        %v1056 = vsel %vm881, %v1048, -inf
        %1057 = vmax.xlane.f32.xlu0 %v1056
        %v1058 = vpop.xlane.xlu0 %1057
        %v1059 = vsel %vm888, %v1051, -inf
        %1060 = vmax.xlane.f32.xlu0 %v1059
        %v1061 = vpop.xlane.xlu0 %1060
        %v1062 = vsub.f32 %v1045, %v1055
        %v1063 = vsub.f32 %v1048, %v1058
        %v1064 = vsub.f32 %v1051, %v1061
        %v1065 = vmul.f32 %v1062, 1.442695
        %v1066 = vpow.pop %v1065
        %v1067 = vmul.f32 %v1063, 1.442695
        %v1068 = vpow.pop %v1067
        %v1069 = vmul.f32 %v1064, 1.442695
        %v1070 = vpow.pop %v1069
        %v1071 = vsel %vm881, %v1066, 0.0
        %1072 = vadd.xlane.f32.xlu0 %v1071
        %v1073 = vpop.xlane.xlu0 %1072
        %v1074 = vsel %vm881, %v1068, 0.0
        %1075 = vadd.xlane.f32.xlu0 %v1074
        %v1076 = vpop.xlane.xlu0 %1075
        %v1077 = vsel %vm888, %v1070, 0.0
        %1078 = vadd.xlane.f32.xlu0 %v1077
        %v1079 = vpop.xlane.xlu0 %1078
        %v1080 = vrcp.pop %v1073
        %v1081 = vrcp.pop %v1076
        %v1082 = vrcp.pop %v1079
        %v1083 = vmul.f32 %v1066, %v1080
        %v1084 = vmul.f32 %v1068, %v1081
        %v1085 = vmul.f32 %v1070, %v1082
        %1086 = vrot.lane.b32.xlu0 %v814, 48
        %v1087 = vpop.permute.xlu0 %1086
        %1088 = vrot.lane.b32.xlu0 %v817, 48
        %v1089 = vpop.permute.xlu0 %1088
        %1090 = vrot.lane.b32.xlu0 %v820, 48
        %v1091 = vpop.permute.xlu0 %1090
        %v1095 = vsel %vm881, %v1083, 0
        %v1098 = vsel %vm881, %v1084, 0
        %v1101 = vsel %vm881, %v1085, 0
        %v1103 = vsel %vm933, %v1091, 0
        %1105 = vmatpush.msra.mxu0 0.0
        %1106 = vmatpush.msra.mxu0 0.0
        %1107 = vmatpush.msra.mxu0 0.0
        %1108 = vmatpush.msra.mxu0 0.0
        %1109 = vmatpush.msra.mxu0 0.0
        %1110 = vmatpush.msra.mxu0 0.0
        %1111 = vmatpush.msra.mxu0 0.0
        %1112 = vmatpush.msra.mxu0 0.0
        %1113 = vmatpush.msra.mxu0 0.0
        %1114 = vmatpush.msra.mxu0 0.0
        %1115 = vmatpush.msra.mxu0 0.0
        %1116 = vmatpush.msra.mxu0 0.0
        %1117 = vmatpush.msra.mxu0 0.0
        %1118 = vmatpush.msra.mxu0 %v1103
        %1119 = vmatpush.msra.mxu0 %v1089
        %1120 = vmatpush.msra.mxu0 %v1087
        %1121 = vmatmul.f32.gmra.mxu0 %v1095
        %v1122 = vpop.f32.mrf.mxu0
        %v1123 = vadd.f32 0.0, %v1122
        %1124 = vmatmul.f32.gmra.mxu0 %v1098
        %v1125 = vpop.f32.mrf.mxu0
        %v1126 = vadd.f32 0.0, %v1125
        %1127 = vmatmul.f32.gmra.mxu0 %v1101
        %v1128 = vpop.f32.mrf.mxu0
        %v1129 = vadd.f32 0.0, %v1128
        %1130 = vdwg.mxu0
        %v1132 = vsel %vm839, %v1123, 0
        %v1135 = vsel %vm839, %v1126, 0
        %v1138 = vsel %vm839, %v1129, 0
        %1140 = vmatpush.msra.mxu0 0.0
        %1141 = vmatpush.msra.mxu0 0.0
        %1142 = vmatpush.msra.mxu0 0.0
        %1143 = vmatpush.msra.mxu0 0.0
        %1144 = vmatpush.msra.mxu0 0.0
        %1145 = vmatpush.msra.mxu0 0.0
        %1146 = vmatpush.msra.mxu0 0.0
        %1147 = vmatpush.msra.mxu0 0.0
        %1148 = vmatpush.msra.mxu0 0.0
        %1149 = vmatpush.msra.mxu0 0.0
        %1150 = vmatpush.msra.mxu0 0.0
        %1151 = vmatpush.msra.mxu0 0.0
        %1152 = vmatpush.msra.mxu0 0.0
        %1153 = vmatpush.msra.mxu0 0.0
        %1154 = vmatpush.msra.mxu0 %v825
        %1155 = vmatpush.msra.mxu0 %v824
        %1156 = vmatmul.f32.gmra.mxu0 %v1132
        %v1157 = vpop.f32.mrf.mxu0
        %v1158 = vadd.f32 0.0, %v1157
        %1159 = vmatmul.f32.gmra.mxu0 %v1135
        %v1160 = vpop.f32.mrf.mxu0
        %v1161 = vadd.f32 0.0, %v1160
        %1162 = vmatmul.f32.gmra.mxu0 %v1138
        %v1163 = vpop.f32.mrf.mxu0
        %v1164 = vadd.f32 0.0, %v1163
        %1165 = vdwg.mxu0
        %v1166 = vadd.f32 %v1000, %v1158
        %v1167 = vadd.f32 %v1001, %v1161
        %v1168 = vadd.f32 %v1002, %v1164
        %v1169 = vadd.f32 %v691, %v1166
        %v1170 = vadd.f32 %v692, %v1167
        %v1171 = vadd.f32 %v693, %v1168
        %v1172 = vld [vmem:[%s10] sm:$0x1]
        %v1173 = vld [vmem:[%s11] sm:$0x1]
        %v1174 = vsel %vm642, %v1169, 0.0
        %1175 = vadd.xlane.f32.xlu0 %v1174
        %v1176 = vpop.xlane.xlu0 %1175
        %v1177 = vsel %vm642, %v1170, 0.0
        %1178 = vadd.xlane.f32.xlu0 %v1177
        %v1179 = vpop.xlane.xlu0 %1178
        %v1180 = vsel %vm674, %v1171, 0.0
        %1181 = vadd.xlane.f32.xlu0 %v1180
        %v1182 = vpop.xlane.xlu0 %1181
        %v1183 = vmul.f32 %v1176, %v711
        %v1184 = vmul.f32 %v1179, %v711
        %v1185 = vmul.f32 %v1182, %v711
        %v1186 = vsub.f32 %v1169, %v1183
        %v1187 = vsub.f32 %v1170, %v1184
        %v1188 = vsub.f32 %v1171, %v1185
        %v1189 = vmul.f32 %v1186, %v1186
        %v1190 = vmul.f32 %v1187, %v1187
        %v1191 = vmul.f32 %v1188, %v1188
        %v1192 = vsel %vm642, %v1189, 0.0
        %1193 = vadd.xlane.f32.xlu0 %v1192
        %v1194 = vpop.xlane.xlu0 %1193
        %v1195 = vsel %vm642, %v1190, 0.0
        %1196 = vadd.xlane.f32.xlu0 %v1195
        %v1197 = vpop.xlane.xlu0 %1196
        %v1198 = vsel %vm674, %v1191, 0.0
        %1199 = vadd.xlane.f32.xlu0 %v1198
        %v1200 = vpop.xlane.xlu0 %1199
        %v1201 = vmul.f32 %v1194, %v711
        %v1202 = vmul.f32 %v1197, %v711
        %v1203 = vmul.f32 %v1200, %v711
        %v1204 = vadd.f32 %v1201, 1e-05
        %v1205 = vadd.f32 %v1202, 1e-05
        %v1206 = vadd.f32 %v1203, 1e-05
        %v1207 = vrsqrt.pop %v1204
        %v1208 = vmul.f32 %v1207, %v1204
        %v1209 = vmul.f32 %v1208, %v1207
        %v1210 = vmul.f32 0.5, %v1209
        %v1211 = vsub.f32 1.5, %v1210
        %v1212 = vmul.f32 %v1207, %v1211
        %vm1213 = vweird.f32 %v1204
        %vm1214 = vweird.f32 %v1207
        %vm1215 = vmor %vm1213, %vm1214
        %v1216 = vsel %vm1215, %v1207, %v1212
        %v1217 = vrsqrt.pop %v1205
        %v1218 = vmul.f32 %v1217, %v1205
        %v1219 = vmul.f32 %v1218, %v1217
        %v1220 = vmul.f32 0.5, %v1219
        %v1221 = vsub.f32 1.5, %v1220
        %v1222 = vmul.f32 %v1217, %v1221
        %vm1223 = vweird.f32 %v1205
        %vm1224 = vweird.f32 %v1217
        %vm1225 = vmor %vm1223, %vm1224
        %v1226 = vsel %vm1225, %v1217, %v1222
        %v1227 = vrsqrt.pop %v1206
        %v1228 = vmul.f32 %v1227, %v1206
        %v1229 = vmul.f32 %v1228, %v1227
        %v1230 = vmul.f32 0.5, %v1229
        %v1231 = vsub.f32 1.5, %v1230
        %v1232 = vmul.f32 %v1227, %v1231
        %vm1233 = vweird.f32 %v1206
        %vm1234 = vweird.f32 %v1227
        %vm1235 = vmor %vm1233, %vm1234
        %v1236 = vsel %vm1235, %v1227, %v1232
        %v1237 = vmul.f32 %v1186, %v1216
        %v1238 = vmul.f32 %v1187, %v1226
        %v1239 = vmul.f32 %v1188, %v1236
        %v1241 = vperm.slane %v1172, 0
        %v1243 = vmul.f32 %v1237, %v1241
        %v1244 = vmul.f32 %v1238, %v1241
        %v1245 = vmul.f32 %v1239, %v1241
        %v1247 = vperm.slane %v1173, 0
        %v1249 = vadd.f32 %v1243, %v1247
        %v1250 = vadd.f32 %v1244, %v1247
        %v1251 = vadd.f32 %v1245, %v1247
        %v1252 = vld [vmem:[%s12] sm:$0xff]
        %v1253 = vld [vmem:[%s12 + $0x8] sm:$0xff]
        %v1254 = vld [vmem:[%s12 + $0x10] sm:$0xff]
        %v1255 = vld [vmem:[%s12 + $0x18] sm:$0xff]
        %v1256 = vld [vmem:[%s12 + $0x20] sm:$0xff]
        %v1257 = vld [vmem:[%s12 + $0x28] sm:$0xff]
        %v1258 = vld [vmem:[%s13] sm:$0x1]
        %v1260 = vperm.slane %v1258, 0
        %v1263 = vsel %vm642, %v1249, 0
        %v1266 = vsel %vm642, %v1250, 0
        %v1269 = vsel %vm642, %v1251, 0
        %1271 = vmatpush.msra.mxu0 0.0
        %1272 = vmatpush.msra.mxu0 0.0
        %1273 = vmatpush.msra.mxu0 0.0
        %1274 = vmatpush.msra.mxu0 0.0
        %1275 = vmatpush.msra.mxu0 0.0
        %1276 = vmatpush.msra.mxu0 0.0
        %1277 = vmatpush.msra.mxu0 0.0
        %1278 = vmatpush.msra.mxu0 0.0
        %1279 = vmatpush.msra.mxu0 0.0
        %1280 = vmatpush.msra.mxu0 0.0
        %1281 = vmatpush.msra.mxu0 %v1257
        %1282 = vmatpush.msra.mxu0 %v1256
        %1283 = vmatpush.msra.mxu0 %v1255
        %1284 = vmatpush.msra.mxu0 %v1254
        %1285 = vmatpush.msra.mxu0 %v1253
        %1286 = vmatpush.msra.mxu0 %v1252
        %1287 = vmatmul.f32.gmra.mxu0 %v1263
        %v1288 = vpop.f32.mrf.mxu0
        %v1289 = vadd.f32 %v1260, %v1288
        %1290 = vmatmul.f32.gmra.mxu0 %v1266
        %v1291 = vpop.f32.mrf.mxu0
        %v1292 = vadd.f32 %v1260, %v1291
        %1293 = vmatmul.f32.gmra.mxu0 %v1269
        %v1294 = vpop.f32.mrf.mxu0
        %v1295 = vadd.f32 %v1260, %v1294
        %1296 = vdwg.mxu0
        %v1297 = vmul.f32 %v1289, 0.5
        %v1298 = vmul.f32 %v1292, 0.5
        %v1299 = vmul.f32 %v1295, 0.5
        %v1300 = vmul.f32 %v1289, 0.70710677
        %v1301 = vmul.f32 %v1292, 0.70710677
        %v1302 = vmul.f32 %v1295, 0.70710677
        %v1303 = vand.u32 2147483647, %v1300
        %v1304 = vand.u32 2147483647, %v1301
        %v1305 = vand.u32 2147483647, %v1302
        %v1306 = vmul.f32 %v1303, 0.3275911
        %v1307 = vmul.f32 %v1304, 0.3275911
        %v1308 = vmul.f32 %v1305, 0.3275911
        %v1309 = vadd.f32 %v1306, 1.0
        %v1310 = vadd.f32 %v1307, 1.0
        %v1311 = vadd.f32 %v1308, 1.0
        %v1312 = vrcp.pop %v1309
        %v1313 = vmul.f32 %v1309, %v1312
        %v1314 = vsub.f32 1.0, %v1313
        %v1315 = vmul.f32 %v1312, %v1314
        %v1316 = vadd.f32 %v1312, %v1315
        %vm1317 = vweird.f32 %v1309
        %vm1318 = vweird.f32 %v1312
        %vm1319 = vmor %vm1317, %vm1318
        %v1320 = vsel %vm1319, %v1312, %v1316
        %v1321 = vand.u32 2147483647, %v1309
        %vm1322 = vcmp.eq.f32.partialorder %v1321, 8.507059e+37
        %v1323 = vand.u32 %v1309, 2147483648
        %v1324 = vor.u32 1.1754944e-38, %v1323
        %v1325 = vsel %vm1322, %v1324, %v1320
        %v1326 = vmul.f32 1.0, %v1325
        %v1327 = vrcp.pop %v1310
        %v1328 = vmul.f32 %v1310, %v1327
        %v1329 = vsub.f32 1.0, %v1328
        %v1330 = vmul.f32 %v1327, %v1329
        %v1331 = vadd.f32 %v1327, %v1330
        %vm1332 = vweird.f32 %v1310
        %vm1333 = vweird.f32 %v1327
        %vm1334 = vmor %vm1332, %vm1333
        %v1335 = vsel %vm1334, %v1327, %v1331
        %v1336 = vand.u32 2147483647, %v1310
        %vm1337 = vcmp.eq.f32.partialorder %v1336, 8.507059e+37
        %v1338 = vand.u32 %v1310, 2147483648
        %v1339 = vor.u32 1.1754944e-38, %v1338
        %v1340 = vsel %vm1337, %v1339, %v1335
        %v1341 = vmul.f32 1.0, %v1340
        %v1342 = vrcp.pop %v1311
        %v1343 = vmul.f32 %v1311, %v1342
        %v1344 = vsub.f32 1.0, %v1343
        %v1345 = vmul.f32 %v1342, %v1344
        %v1346 = vadd.f32 %v1342, %v1345
        %vm1347 = vweird.f32 %v1311
        %vm1348 = vweird.f32 %v1342
        %vm1349 = vmor %vm1347, %vm1348
        %v1350 = vsel %vm1349, %v1342, %v1346
        %v1351 = vand.u32 2147483647, %v1311
        %vm1352 = vcmp.eq.f32.partialorder %v1351, 8.507059e+37
        %v1353 = vand.u32 %v1311, 2147483648
        %v1354 = vor.u32 1.1754944e-38, %v1353
        %v1355 = vsel %vm1352, %v1354, %v1350
        %v1356 = vmul.f32 1.0, %v1355
        %v1357 = vmul.f32 %v1326, 1.0614054
        %v1358 = vmul.f32 %v1341, 1.0614054
        %v1359 = vmul.f32 %v1356, 1.0614054
        %v1360 = vadd.f32 %v1357, -1.4531521
        %v1361 = vadd.f32 %v1358, -1.4531521
        %v1362 = vadd.f32 %v1359, -1.4531521
        %v1363 = vmul.f32 %v1360, %v1326
        %v1364 = vmul.f32 %v1361, %v1341
        %v1365 = vmul.f32 %v1362, %v1356
        %v1366 = vadd.f32 %v1363, 1.4214138
        %v1367 = vadd.f32 %v1364, 1.4214138
        %v1368 = vadd.f32 %v1365, 1.4214138
        %v1369 = vmul.f32 %v1366, %v1326
        %v1370 = vmul.f32 %v1367, %v1341
        %v1371 = vmul.f32 %v1368, %v1356
        %v1372 = vadd.f32 %v1369, -0.28449672
        %v1373 = vadd.f32 %v1370, -0.28449672
        %v1374 = vadd.f32 %v1371, -0.28449672
        %v1375 = vmul.f32 %v1372, %v1326
        %v1376 = vmul.f32 %v1373, %v1341
        %v1377 = vmul.f32 %v1374, %v1356
        %v1378 = vadd.f32 %v1375, 0.2548296
        %v1379 = vadd.f32 %v1376, 0.2548296
        %v1380 = vadd.f32 %v1377, 0.2548296
        %v1381 = vmul.f32 %v1378, %v1326
        %v1382 = vmul.f32 %v1379, %v1341
        %v1383 = vmul.f32 %v1380, %v1356
        %v1384 = vmul.f32 %v1303, %v1303
        %v1385 = vmul.f32 %v1304, %v1304
        %v1386 = vmul.f32 %v1305, %v1305
        %v1387 = vsub.f32 0.0, %v1384
        %v1388 = vsub.f32 0.0, %v1385
        %v1389 = vsub.f32 0.0, %v1386
        %v1390 = vmul.f32 %v1387, 1.442695
        %v1391 = vpow.pop %v1390
        %v1392 = vmul.f32 %v1388, 1.442695
        %v1393 = vpow.pop %v1392
        %v1394 = vmul.f32 %v1389, 1.442695
        %v1395 = vpow.pop %v1394
        %v1396 = vmul.f32 %v1381, %v1391
        %v1397 = vmul.f32 %v1382, %v1393
        %v1398 = vmul.f32 %v1383, %v1395
        %v1399 = vsub.f32 1.0, %v1396
        %v1400 = vsub.f32 1.0, %v1397
        %v1401 = vsub.f32 1.0, %v1398
        %vm1402 = vcmp.lt.f32.partialorder %v1300, 0.0
        %vm1403 = vcmp.lt.f32.partialorder %v1301, 0.0
        %vm1404 = vcmp.lt.f32.partialorder %v1302, 0.0
        %v1405 = vsub.f32 0.0, %v1399
        %v1406 = vsub.f32 0.0, %v1400
        %v1407 = vsub.f32 0.0, %v1401
        %v1408 = vsel %vm1402, %v1405, %v1399
        %v1409 = vsel %vm1403, %v1406, %v1400
        %v1410 = vsel %vm1404, %v1407, %v1401
        %v1411 = vadd.f32 %v1408, 1.0
        %v1412 = vadd.f32 %v1409, 1.0
        %v1413 = vadd.f32 %v1410, 1.0
        %v1414 = vmul.f32 %v1297, %v1411
        %v1415 = vmul.f32 %v1298, %v1412
        %v1416 = vmul.f32 %v1299, %v1413
        %v1417 = vld [vmem:[%s14] sm:$0xff]
        %v1418 = vld [vmem:[%s14 + $0x8] sm:$0xff]
        %v1419 = vld [vmem:[%s14 + $0x10] sm:$0xff]
        %v1420 = vld [vmem:[%s14 + $0x18] sm:$0xff]
        %v1421 = vld [vmem:[%s14 + $0x20] sm:$0xff]
        %v1422 = vld [vmem:[%s14 + $0x28] sm:$0xff]
        %v1423 = vld [vmem:[%s14 + $0x30] sm:$0xff]
        %v1424 = vld [vmem:[%s14 + $0x38] sm:$0xff]
        %v1425 = vld [vmem:[%s14 + $0x40] sm:$0xff]
        %v1426 = vld [vmem:[%s14 + $0x48] sm:$0xff]
        %v1427 = vld [vmem:[%s14 + $0x50] sm:$0xff]
        %v1428 = vld [vmem:[%s14 + $0x58] sm:$0xff]
        %vm1429 = vcmask 785408
        %v1431 = vsel %vm1429, %v1414, 0
        %v1434 = vsel %vm1429, %v1415, 0
        %v1437 = vsel %vm1429, %v1416, 0
        %1439 = vmatpush.msra.mxu0 0.0
        %1440 = vmatpush.msra.mxu0 0.0
        %1441 = vmatpush.msra.mxu0 0.0
        %1442 = vmatpush.msra.mxu0 0.0
        %1443 = vmatpush.msra.mxu0 %v1428
        %1444 = vmatpush.msra.mxu0 %v1427
        %1445 = vmatpush.msra.mxu0 %v1426
        %1446 = vmatpush.msra.mxu0 %v1425
        %1447 = vmatpush.msra.mxu0 %v1424
        %1448 = vmatpush.msra.mxu0 %v1423
        %1449 = vmatpush.msra.mxu0 %v1422
        %1450 = vmatpush.msra.mxu0 %v1421
        %1451 = vmatpush.msra.mxu0 %v1420
        %1452 = vmatpush.msra.mxu0 %v1419
        %1453 = vmatpush.msra.mxu0 %v1418
        %1454 = vmatpush.msra.mxu0 %v1417
        %1455 = vmatmul.f32.gmra.mxu0 %v1431
        %v1456 = vpop.f32.mrf.mxu0
        %v1457 = vadd.f32 0.0, %v1456
        %1458 = vmatmul.f32.gmra.mxu0 %v1434
        %v1459 = vpop.f32.mrf.mxu0
        %v1460 = vadd.f32 0.0, %v1459
        %1461 = vmatmul.f32.gmra.mxu0 %v1437
        %v1462 = vpop.f32.mrf.mxu0
        %v1463 = vadd.f32 0.0, %v1462
        %1464 = vdwg.mxu0
        %v1465 = vadd.f32 %v1169, %v1457
        %v1466 = vadd.f32 %v1170, %v1460
        %v1467 = vadd.f32 %v1171, %v1463
        %v1468 = vld [vmem:[%s15] sm:$0x1]
        %v1470 = vperm.slane %v1468, 0
        %v1472 = vadd.f32 %v1465, %v1470
        %v1473 = vadd.f32 %v1466, %v1470
        %v1474 = vadd.f32 %v1467, %v1470
        %s1475 = scalar_lea.vmem %s5, 1
        %v1476 = vld [vmem:[%s1475] sm:$0x1]
        %s1477 = scalar_lea.vmem %s6, 1
        %v1478 = vld [vmem:[%s1477] sm:$0x1]
        %v1479 = vsel %vm642, %v1472, 0.0
        %1480 = vadd.xlane.f32.xlu0 %v1479
        %v1481 = vpop.xlane.xlu0 %1480
        %v1482 = vsel %vm642, %v1473, 0.0
        %1483 = vadd.xlane.f32.xlu0 %v1482
        %v1484 = vpop.xlane.xlu0 %1483
        %v1485 = vsel %vm674, %v1474, 0.0
        %1486 = vadd.xlane.f32.xlu0 %v1485
        %v1487 = vpop.xlane.xlu0 %1486
        %v1488 = vmul.f32 %v1481, %v711
        %v1489 = vmul.f32 %v1484, %v711
        %v1490 = vmul.f32 %v1487, %v711
        %v1491 = vsub.f32 %v1472, %v1488
        %v1492 = vsub.f32 %v1473, %v1489
        %v1493 = vsub.f32 %v1474, %v1490
        %v1494 = vmul.f32 %v1491, %v1491
        %v1495 = vmul.f32 %v1492, %v1492
        %v1496 = vmul.f32 %v1493, %v1493
        %v1497 = vsel %vm642, %v1494, 0.0
        %1498 = vadd.xlane.f32.xlu0 %v1497
        %v1499 = vpop.xlane.xlu0 %1498
        %v1500 = vsel %vm642, %v1495, 0.0
        %1501 = vadd.xlane.f32.xlu0 %v1500
        %v1502 = vpop.xlane.xlu0 %1501
        %v1503 = vsel %vm674, %v1496, 0.0
        %1504 = vadd.xlane.f32.xlu0 %v1503
        %v1505 = vpop.xlane.xlu0 %1504
        %v1506 = vmul.f32 %v1499, %v711
        %v1507 = vmul.f32 %v1502, %v711
        %v1508 = vmul.f32 %v1505, %v711
        %v1509 = vadd.f32 %v1506, 1e-05
        %v1510 = vadd.f32 %v1507, 1e-05
        %v1511 = vadd.f32 %v1508, 1e-05
        %v1512 = vrsqrt.pop %v1509
        %v1513 = vmul.f32 %v1512, %v1509
        %v1514 = vmul.f32 %v1513, %v1512
        %v1515 = vmul.f32 0.5, %v1514
        %v1516 = vsub.f32 1.5, %v1515
        %v1517 = vmul.f32 %v1512, %v1516
        %vm1518 = vweird.f32 %v1509
        %vm1519 = vweird.f32 %v1512
        %vm1520 = vmor %vm1518, %vm1519
        %v1521 = vsel %vm1520, %v1512, %v1517
        %v1522 = vrsqrt.pop %v1510
        %v1523 = vmul.f32 %v1522, %v1510
        %v1524 = vmul.f32 %v1523, %v1522
        %v1525 = vmul.f32 0.5, %v1524
        %v1526 = vsub.f32 1.5, %v1525
        %v1527 = vmul.f32 %v1522, %v1526
        %vm1528 = vweird.f32 %v1510
        %vm1529 = vweird.f32 %v1522
        %vm1530 = vmor %vm1528, %vm1529
        %v1531 = vsel %vm1530, %v1522, %v1527
        %v1532 = vrsqrt.pop %v1511
        %v1533 = vmul.f32 %v1532, %v1511
        %v1534 = vmul.f32 %v1533, %v1532
        %v1535 = vmul.f32 0.5, %v1534
        %v1536 = vsub.f32 1.5, %v1535
        %v1537 = vmul.f32 %v1532, %v1536
        %vm1538 = vweird.f32 %v1511
        %vm1539 = vweird.f32 %v1532
        %vm1540 = vmor %vm1538, %vm1539
        %v1541 = vsel %vm1540, %v1532, %v1537
        %v1542 = vmul.f32 %v1491, %v1521
        %v1543 = vmul.f32 %v1492, %v1531
        %v1544 = vmul.f32 %v1493, %v1541
        %v1546 = vperm.slane %v1476, 0
        %v1548 = vmul.f32 %v1542, %v1546
        %v1549 = vmul.f32 %v1543, %v1546
        %v1550 = vmul.f32 %v1544, %v1546
        %v1552 = vperm.slane %v1478, 0
        %v1554 = vadd.f32 %v1548, %v1552
        %v1555 = vadd.f32 %v1549, %v1552
        %v1556 = vadd.f32 %v1550, %v1552
        %s1557 = scalar_lea.vmem %s7, 48
        %v1558 = vld [vmem:[%s1557] sm:$0xff]
        %v1559 = vld [vmem:[%s1557 + $0x8] sm:$0xff]
        %v1560 = vld [vmem:[%s1557 + $0x10] sm:$0xff]
        %v1561 = vld [vmem:[%s1557 + $0x18] sm:$0xff]
        %v1562 = vld [vmem:[%s1557 + $0x20] sm:$0xff]
        %v1563 = vld [vmem:[%s1557 + $0x28] sm:$0xff]
        %v1565 = vsel %vm642, %v1554, 0
        %v1568 = vsel %vm642, %v1555, 0
        %v1571 = vsel %vm642, %v1556, 0
        %1573 = vmatpush.msra.mxu0 0.0
        %1574 = vmatpush.msra.mxu0 0.0
        %1575 = vmatpush.msra.mxu0 0.0
        %1576 = vmatpush.msra.mxu0 0.0
        %1577 = vmatpush.msra.mxu0 0.0
        %1578 = vmatpush.msra.mxu0 0.0
        %1579 = vmatpush.msra.mxu0 0.0
        %1580 = vmatpush.msra.mxu0 0.0
        %1581 = vmatpush.msra.mxu0 0.0
        %1582 = vmatpush.msra.mxu0 0.0
        %1583 = vmatpush.msra.mxu0 %v1563
        %1584 = vmatpush.msra.mxu0 %v1562
        %1585 = vmatpush.msra.mxu0 %v1561
        %1586 = vmatpush.msra.mxu0 %v1560
        %1587 = vmatpush.msra.mxu0 %v1559
        %1588 = vmatpush.msra.mxu0 %v1558
        %1589 = vmatmul.f32.gmra.mxu0 %v1565
        %v1590 = vpop.f32.mrf.mxu0
        %v1591 = vadd.f32 0.0, %v1590
        %1592 = vmatmul.f32.gmra.mxu0 %v1568
        %v1593 = vpop.f32.mrf.mxu0
        %v1594 = vadd.f32 0.0, %v1593
        %1595 = vmatmul.f32.gmra.mxu0 %v1571
        %v1596 = vpop.f32.mrf.mxu0
        %v1597 = vadd.f32 0.0, %v1596
        %1598 = vdwg.mxu0
        %s1599 = scalar_lea.vmem %s8, 32
        %v1600 = vld [vmem:[%s1599] sm:$0xff]
        %v1601 = vld [vmem:[%s1599 + $0x8] sm:$0xff]
        %v1602 = vld [vmem:[%s1599 + $0x10] sm:$0xff]
        %v1603 = vld [vmem:[%s1599 + $0x18] sm:$0xff]
        %s1604 = scalar_lea.vmem %s9, 1
        %v1605 = vld [vmem:[%s1604] sm:$0x1]
        %v1606 = vmul.f32 %v1591, 0.25
        %v1607 = vmul.f32 %v1594, 0.25
        %v1608 = vmul.f32 %v1597, 0.25
        %1612 = vrot.lane.b32.xlu0 %v1591, 96
        %v1613 = vpop.permute.xlu0 %1612
        %1614 = vrot.lane.b32.xlu0 %v1594, 96
        %v1615 = vpop.permute.xlu0 %1614
        %1616 = vrot.lane.b32.xlu0 %v1597, 96
        %v1617 = vpop.permute.xlu0 %1616
        %v1619 = vsel %vm839, %v1606, 0
        %v1622 = vsel %vm839, %v1607, 0
        %v1625 = vsel %vm839, %v1608, 0
        %v1627 = vsel %vm839, %v1613, 0
        %v1629 = vsel %vm839, %v1615, 0
        %v1631 = vsel %vm839, %v1617, 0
        %1633 = vmatpush.xpose.msra.mxu0 0.0
        %1634 = vmatpush.xpose.msra.mxu0 0.0
        %1635 = vmatpush.xpose.msra.mxu0 0.0
        %1636 = vmatpush.xpose.msra.mxu0 0.0
        %1637 = vmatpush.xpose.msra.mxu0 0.0
        %1638 = vmatpush.xpose.msra.mxu0 0.0
        %1639 = vmatpush.xpose.msra.mxu0 0.0
        %1640 = vmatpush.xpose.msra.mxu0 0.0
        %1641 = vmatpush.xpose.msra.mxu0 0.0
        %1642 = vmatpush.xpose.msra.mxu0 0.0
        %1643 = vmatpush.xpose.msra.mxu0 0.0
        %1644 = vmatpush.xpose.msra.mxu0 0.0
        %1645 = vmatpush.xpose.msra.mxu0 0.0
        %1646 = vmatpush.xpose.msra.mxu0 %v1631
        %1647 = vmatpush.xpose.msra.mxu0 %v1629
        %1648 = vmatpush.xpose.msra.mxu0 %v1627
        %1649 = vmatmul.f32.gmra.mxu0 %v1619
        %v1650 = vpop.f32.mrf.mxu0
        %v1651 = vadd.f32 0.0, %v1650
        %1652 = vmatmul.f32.gmra.mxu0 %v1622
        %v1653 = vpop.f32.mrf.mxu0
        %v1654 = vadd.f32 0.0, %v1653
        %1655 = vmatmul.f32.gmra.mxu0 %v1625
        %v1656 = vpop.f32.mrf.mxu0
        %v1657 = vadd.f32 0.0, %v1656
        %1658 = vdwg.mxu0
        %v1659 = vsel %vm881, %v1651, -inf
        %1660 = vmax.xlane.f32.xlu0 %v1659
        %v1661 = vpop.xlane.xlu0 %1660
        %v1662 = vsel %vm881, %v1654, -inf
        %1663 = vmax.xlane.f32.xlu0 %v1662
        %v1664 = vpop.xlane.xlu0 %1663
        %v1665 = vsel %vm888, %v1657, -inf
        %1666 = vmax.xlane.f32.xlu0 %v1665
        %v1667 = vpop.xlane.xlu0 %1666
        %v1668 = vsub.f32 %v1651, %v1661
        %v1669 = vsub.f32 %v1654, %v1664
        %v1670 = vsub.f32 %v1657, %v1667
        %v1671 = vmul.f32 %v1668, 1.442695
        %v1672 = vpow.pop %v1671
        %v1673 = vmul.f32 %v1669, 1.442695
        %v1674 = vpow.pop %v1673
        %v1675 = vmul.f32 %v1670, 1.442695
        %v1676 = vpow.pop %v1675
        %v1677 = vsel %vm881, %v1672, 0.0
        %1678 = vadd.xlane.f32.xlu0 %v1677
        %v1679 = vpop.xlane.xlu0 %1678
        %v1680 = vsel %vm881, %v1674, 0.0
        %1681 = vadd.xlane.f32.xlu0 %v1680
        %v1682 = vpop.xlane.xlu0 %1681
        %v1683 = vsel %vm888, %v1676, 0.0
        %1684 = vadd.xlane.f32.xlu0 %v1683
        %v1685 = vpop.xlane.xlu0 %1684
        %v1686 = vrcp.pop %v1679
        %v1687 = vrcp.pop %v1682
        %v1688 = vrcp.pop %v1685
        %v1689 = vmul.f32 %v1672, %v1686
        %v1690 = vmul.f32 %v1674, %v1687
        %v1691 = vmul.f32 %v1676, %v1688
        %1692 = vrot.lane.b32.xlu0 %v1591, 64
        %v1693 = vpop.permute.xlu0 %1692
        %1694 = vrot.lane.b32.xlu0 %v1594, 64
        %v1695 = vpop.permute.xlu0 %1694
        %1696 = vrot.lane.b32.xlu0 %v1597, 64
        %v1697 = vpop.permute.xlu0 %1696
        %v1701 = vsel %vm881, %v1689, 0
        %v1704 = vsel %vm881, %v1690, 0
        %v1707 = vsel %vm881, %v1691, 0
        %v1709 = vsel %vm933, %v1697, 0
        %1711 = vmatpush.msra.mxu0 0.0
        %1712 = vmatpush.msra.mxu0 0.0
        %1713 = vmatpush.msra.mxu0 0.0
        %1714 = vmatpush.msra.mxu0 0.0
        %1715 = vmatpush.msra.mxu0 0.0
        %1716 = vmatpush.msra.mxu0 0.0
        %1717 = vmatpush.msra.mxu0 0.0
        %1718 = vmatpush.msra.mxu0 0.0
        %1719 = vmatpush.msra.mxu0 0.0
        %1720 = vmatpush.msra.mxu0 0.0
        %1721 = vmatpush.msra.mxu0 0.0
        %1722 = vmatpush.msra.mxu0 0.0
        %1723 = vmatpush.msra.mxu0 0.0
        %1724 = vmatpush.msra.mxu0 %v1709
        %1725 = vmatpush.msra.mxu0 %v1695
        %1726 = vmatpush.msra.mxu0 %v1693
        %1727 = vmatmul.f32.gmra.mxu0 %v1701
        %v1728 = vpop.f32.mrf.mxu0
        %v1729 = vadd.f32 0.0, %v1728
        %1730 = vmatmul.f32.gmra.mxu0 %v1704
        %v1731 = vpop.f32.mrf.mxu0
        %v1732 = vadd.f32 0.0, %v1731
        %1733 = vmatmul.f32.gmra.mxu0 %v1707
        %v1734 = vpop.f32.mrf.mxu0
        %v1735 = vadd.f32 0.0, %v1734
        %1736 = vdwg.mxu0
        %v1738 = vsel %vm839, %v1729, 0
        %v1741 = vsel %vm839, %v1732, 0
        %v1744 = vsel %vm839, %v1735, 0
        %1746 = vmatpush.msra.mxu0 0.0
        %1747 = vmatpush.msra.mxu0 0.0
        %1748 = vmatpush.msra.mxu0 0.0
        %1749 = vmatpush.msra.mxu0 0.0
        %1750 = vmatpush.msra.mxu0 0.0
        %1751 = vmatpush.msra.mxu0 0.0
        %1752 = vmatpush.msra.mxu0 0.0
        %1753 = vmatpush.msra.mxu0 0.0
        %1754 = vmatpush.msra.mxu0 0.0
        %1755 = vmatpush.msra.mxu0 0.0
        %1756 = vmatpush.msra.mxu0 0.0
        %1757 = vmatpush.msra.mxu0 0.0
        %1758 = vmatpush.msra.mxu0 0.0
        %1759 = vmatpush.msra.mxu0 0.0
        %1760 = vmatpush.msra.mxu0 %v1601
        %1761 = vmatpush.msra.mxu0 %v1600
        %1762 = vmatmul.f32.gmra.mxu0 %v1738
        %v1763 = vpop.f32.mrf.mxu0
        %v1764 = vadd.f32 0.0, %v1763
        %1765 = vmatmul.f32.gmra.mxu0 %v1741
        %v1766 = vpop.f32.mrf.mxu0
        %v1767 = vadd.f32 0.0, %v1766
        %1768 = vmatmul.f32.gmra.mxu0 %v1744
        %v1769 = vpop.f32.mrf.mxu0
        %v1770 = vadd.f32 0.0, %v1769
        %1771 = vdwg.mxu0
        %v1773 = vperm.slane %v1605, 0
        %v1775 = vadd.f32 %v1773, %v1764
        %v1776 = vadd.f32 %v1773, %v1767
        %v1777 = vadd.f32 %v1773, %v1770
        %1778 = vrot.lane.b32.xlu0 %v1606, 112
        %v1779 = vpop.permute.xlu0 %1778
        %1780 = vrot.lane.b32.xlu0 %v1607, 112
        %v1781 = vpop.permute.xlu0 %1780
        %1782 = vrot.lane.b32.xlu0 %v1608, 112
        %v1783 = vpop.permute.xlu0 %1782
        %1784 = vrot.lane.b32.xlu0 %v1591, 80
        %v1785 = vpop.permute.xlu0 %1784
        %1786 = vrot.lane.b32.xlu0 %v1594, 80
        %v1787 = vpop.permute.xlu0 %1786
        %1788 = vrot.lane.b32.xlu0 %v1597, 80
        %v1789 = vpop.permute.xlu0 %1788
        %v1790 = vsel %vm839, %v1779, 0
        %v1792 = vsel %vm839, %v1781, 0
        %v1794 = vsel %vm839, %v1783, 0
        %v1796 = vsel %vm839, %v1785, 0
        %v1798 = vsel %vm839, %v1787, 0
        %v1800 = vsel %vm839, %v1789, 0
        %1802 = vmatpush.xpose.msra.mxu0 0.0
        %1803 = vmatpush.xpose.msra.mxu0 0.0
        %1804 = vmatpush.xpose.msra.mxu0 0.0
        %1805 = vmatpush.xpose.msra.mxu0 0.0
        %1806 = vmatpush.xpose.msra.mxu0 0.0
        %1807 = vmatpush.xpose.msra.mxu0 0.0
        %1808 = vmatpush.xpose.msra.mxu0 0.0
        %1809 = vmatpush.xpose.msra.mxu0 0.0
        %1810 = vmatpush.xpose.msra.mxu0 0.0
        %1811 = vmatpush.xpose.msra.mxu0 0.0
        %1812 = vmatpush.xpose.msra.mxu0 0.0
        %1813 = vmatpush.xpose.msra.mxu0 0.0
        %1814 = vmatpush.xpose.msra.mxu0 0.0
        %1815 = vmatpush.xpose.msra.mxu0 %v1800
        %1816 = vmatpush.xpose.msra.mxu0 %v1798
        %1817 = vmatpush.xpose.msra.mxu0 %v1796
        %1818 = vmatmul.f32.gmra.mxu0 %v1790
        %v1819 = vpop.f32.mrf.mxu0
        %v1820 = vadd.f32 0.0, %v1819
        %1821 = vmatmul.f32.gmra.mxu0 %v1792
        %v1822 = vpop.f32.mrf.mxu0
        %v1823 = vadd.f32 0.0, %v1822
        %1824 = vmatmul.f32.gmra.mxu0 %v1794
        %v1825 = vpop.f32.mrf.mxu0
        %v1826 = vadd.f32 0.0, %v1825
        %1827 = vdwg.mxu0
        %v1828 = vsel %vm881, %v1820, -inf
        %1829 = vmax.xlane.f32.xlu0 %v1828
        %v1830 = vpop.xlane.xlu0 %1829
        %v1831 = vsel %vm881, %v1823, -inf
        %1832 = vmax.xlane.f32.xlu0 %v1831
        %v1833 = vpop.xlane.xlu0 %1832
        %v1834 = vsel %vm888, %v1826, -inf
        %1835 = vmax.xlane.f32.xlu0 %v1834
        %v1836 = vpop.xlane.xlu0 %1835
        %v1837 = vsub.f32 %v1820, %v1830
        %v1838 = vsub.f32 %v1823, %v1833
        %v1839 = vsub.f32 %v1826, %v1836
        %v1840 = vmul.f32 %v1837, 1.442695
        %v1841 = vpow.pop %v1840
        %v1842 = vmul.f32 %v1838, 1.442695
        %v1843 = vpow.pop %v1842
        %v1844 = vmul.f32 %v1839, 1.442695
        %v1845 = vpow.pop %v1844
        %v1846 = vsel %vm881, %v1841, 0.0
        %1847 = vadd.xlane.f32.xlu0 %v1846
        %v1848 = vpop.xlane.xlu0 %1847
        %v1849 = vsel %vm881, %v1843, 0.0
        %1850 = vadd.xlane.f32.xlu0 %v1849
        %v1851 = vpop.xlane.xlu0 %1850
        %v1852 = vsel %vm888, %v1845, 0.0
        %1853 = vadd.xlane.f32.xlu0 %v1852
        %v1854 = vpop.xlane.xlu0 %1853
        %v1855 = vrcp.pop %v1848
        %v1856 = vrcp.pop %v1851
        %v1857 = vrcp.pop %v1854
        %v1858 = vmul.f32 %v1841, %v1855
        %v1859 = vmul.f32 %v1843, %v1856
        %v1860 = vmul.f32 %v1845, %v1857
        %1861 = vrot.lane.b32.xlu0 %v1591, 48
        %v1862 = vpop.permute.xlu0 %1861
        %1863 = vrot.lane.b32.xlu0 %v1594, 48
        %v1864 = vpop.permute.xlu0 %1863
        %1865 = vrot.lane.b32.xlu0 %v1597, 48
        %v1866 = vpop.permute.xlu0 %1865
        %v1870 = vsel %vm881, %v1858, 0
        %v1873 = vsel %vm881, %v1859, 0
        %v1876 = vsel %vm881, %v1860, 0
        %v1878 = vsel %vm933, %v1866, 0
        %1880 = vmatpush.msra.mxu0 0.0
        %1881 = vmatpush.msra.mxu0 0.0
        %1882 = vmatpush.msra.mxu0 0.0
        %1883 = vmatpush.msra.mxu0 0.0
        %1884 = vmatpush.msra.mxu0 0.0
        %1885 = vmatpush.msra.mxu0 0.0
        %1886 = vmatpush.msra.mxu0 0.0
        %1887 = vmatpush.msra.mxu0 0.0
        %1888 = vmatpush.msra.mxu0 0.0
        %1889 = vmatpush.msra.mxu0 0.0
        %1890 = vmatpush.msra.mxu0 0.0
        %1891 = vmatpush.msra.mxu0 0.0
        %1892 = vmatpush.msra.mxu0 0.0
        %1893 = vmatpush.msra.mxu0 %v1878
        %1894 = vmatpush.msra.mxu0 %v1864
        %1895 = vmatpush.msra.mxu0 %v1862
        %1896 = vmatmul.f32.gmra.mxu0 %v1870
        %v1897 = vpop.f32.mrf.mxu0
        %v1898 = vadd.f32 0.0, %v1897
        %1899 = vmatmul.f32.gmra.mxu0 %v1873
        %v1900 = vpop.f32.mrf.mxu0
        %v1901 = vadd.f32 0.0, %v1900
        %1902 = vmatmul.f32.gmra.mxu0 %v1876
        %v1903 = vpop.f32.mrf.mxu0
        %v1904 = vadd.f32 0.0, %v1903
        %1905 = vdwg.mxu0
        %v1907 = vsel %vm839, %v1898, 0
        %v1910 = vsel %vm839, %v1901, 0
        %v1913 = vsel %vm839, %v1904, 0
        %1915 = vmatpush.msra.mxu0 0.0
        %1916 = vmatpush.msra.mxu0 0.0
        %1917 = vmatpush.msra.mxu0 0.0
        %1918 = vmatpush.msra.mxu0 0.0
        %1919 = vmatpush.msra.mxu0 0.0
        %1920 = vmatpush.msra.mxu0 0.0
        %1921 = vmatpush.msra.mxu0 0.0
        %1922 = vmatpush.msra.mxu0 0.0
        %1923 = vmatpush.msra.mxu0 0.0
        %1924 = vmatpush.msra.mxu0 0.0
        %1925 = vmatpush.msra.mxu0 0.0
        %1926 = vmatpush.msra.mxu0 0.0
        %1927 = vmatpush.msra.mxu0 0.0
        %1928 = vmatpush.msra.mxu0 0.0
        %1929 = vmatpush.msra.mxu0 %v1603
        %1930 = vmatpush.msra.mxu0 %v1602
        %1931 = vmatmul.f32.gmra.mxu0 %v1907
        %v1932 = vpop.f32.mrf.mxu0
        %v1933 = vadd.f32 0.0, %v1932
        %1934 = vmatmul.f32.gmra.mxu0 %v1910
        %v1935 = vpop.f32.mrf.mxu0
        %v1936 = vadd.f32 0.0, %v1935
        %1937 = vmatmul.f32.gmra.mxu0 %v1913
        %v1938 = vpop.f32.mrf.mxu0
        %v1939 = vadd.f32 0.0, %v1938
        %1940 = vdwg.mxu0
        %v1941 = vadd.f32 %v1775, %v1933
        %v1942 = vadd.f32 %v1776, %v1936
        %v1943 = vadd.f32 %v1777, %v1939
        %v1944 = vadd.f32 %v1472, %v1941
        %v1945 = vadd.f32 %v1473, %v1942
        %v1946 = vadd.f32 %v1474, %v1943
        %s1947 = scalar_lea.vmem %s10, 1
        %v1948 = vld [vmem:[%s1947] sm:$0x1]
        %s1949 = scalar_lea.vmem %s11, 1
        %v1950 = vld [vmem:[%s1949] sm:$0x1]
        %v1951 = vsel %vm642, %v1944, 0.0
        %1952 = vadd.xlane.f32.xlu0 %v1951
        %v1953 = vpop.xlane.xlu0 %1952
        %v1954 = vsel %vm642, %v1945, 0.0
        %1955 = vadd.xlane.f32.xlu0 %v1954
        %v1956 = vpop.xlane.xlu0 %1955
        %v1957 = vsel %vm674, %v1946, 0.0
        %1958 = vadd.xlane.f32.xlu0 %v1957
        %v1959 = vpop.xlane.xlu0 %1958
        %v1960 = vmul.f32 %v1953, %v711
        %v1961 = vmul.f32 %v1956, %v711
        %v1962 = vmul.f32 %v1959, %v711
        %v1963 = vsub.f32 %v1944, %v1960
        %v1964 = vsub.f32 %v1945, %v1961
        %v1965 = vsub.f32 %v1946, %v1962
        %v1966 = vmul.f32 %v1963, %v1963
        %v1967 = vmul.f32 %v1964, %v1964
        %v1968 = vmul.f32 %v1965, %v1965
        %v1969 = vsel %vm642, %v1966, 0.0
        %1970 = vadd.xlane.f32.xlu0 %v1969
        %v1971 = vpop.xlane.xlu0 %1970
        %v1972 = vsel %vm642, %v1967, 0.0
        %1973 = vadd.xlane.f32.xlu0 %v1972
        %v1974 = vpop.xlane.xlu0 %1973
        %v1975 = vsel %vm674, %v1968, 0.0
        %1976 = vadd.xlane.f32.xlu0 %v1975
        %v1977 = vpop.xlane.xlu0 %1976
        %v1978 = vmul.f32 %v1971, %v711
        %v1979 = vmul.f32 %v1974, %v711
        %v1980 = vmul.f32 %v1977, %v711
        %v1981 = vadd.f32 %v1978, 1e-05
        %v1982 = vadd.f32 %v1979, 1e-05
        %v1983 = vadd.f32 %v1980, 1e-05
        %v1984 = vrsqrt.pop %v1981
        %v1985 = vmul.f32 %v1984, %v1981
        %v1986 = vmul.f32 %v1985, %v1984
        %v1987 = vmul.f32 0.5, %v1986
        %v1988 = vsub.f32 1.5, %v1987
        %v1989 = vmul.f32 %v1984, %v1988
        %vm1990 = vweird.f32 %v1981
        %vm1991 = vweird.f32 %v1984
        %vm1992 = vmor %vm1990, %vm1991
        %v1993 = vsel %vm1992, %v1984, %v1989
        %v1994 = vrsqrt.pop %v1982
        %v1995 = vmul.f32 %v1994, %v1982
        %v1996 = vmul.f32 %v1995, %v1994
        %v1997 = vmul.f32 0.5, %v1996
        %v1998 = vsub.f32 1.5, %v1997
        %v1999 = vmul.f32 %v1994, %v1998
        %vm2000 = vweird.f32 %v1982
        %vm2001 = vweird.f32 %v1994
        %vm2002 = vmor %vm2000, %vm2001
        %v2003 = vsel %vm2002, %v1994, %v1999
        %v2004 = vrsqrt.pop %v1983
        %v2005 = vmul.f32 %v2004, %v1983
        %v2006 = vmul.f32 %v2005, %v2004
        %v2007 = vmul.f32 0.5, %v2006
        %v2008 = vsub.f32 1.5, %v2007
        %v2009 = vmul.f32 %v2004, %v2008
        %vm2010 = vweird.f32 %v1983
        %vm2011 = vweird.f32 %v2004
        %vm2012 = vmor %vm2010, %vm2011
        %v2013 = vsel %vm2012, %v2004, %v2009
        %v2014 = vmul.f32 %v1963, %v1993
        %v2015 = vmul.f32 %v1964, %v2003
        %v2016 = vmul.f32 %v1965, %v2013
        %v2018 = vperm.slane %v1948, 0
        %v2020 = vmul.f32 %v2014, %v2018
        %v2021 = vmul.f32 %v2015, %v2018
        %v2022 = vmul.f32 %v2016, %v2018
        %v2024 = vperm.slane %v1950, 0
        %v2026 = vadd.f32 %v2020, %v2024
        %v2027 = vadd.f32 %v2021, %v2024
        %v2028 = vadd.f32 %v2022, %v2024
        %s2029 = scalar_lea.vmem %s12, 48
        %v2030 = vld [vmem:[%s2029] sm:$0xff]
        %v2031 = vld [vmem:[%s2029 + $0x8] sm:$0xff]
        %v2032 = vld [vmem:[%s2029 + $0x10] sm:$0xff]
        %v2033 = vld [vmem:[%s2029 + $0x18] sm:$0xff]
        %v2034 = vld [vmem:[%s2029 + $0x20] sm:$0xff]
        %v2035 = vld [vmem:[%s2029 + $0x28] sm:$0xff]
        %s2036 = scalar_lea.vmem %s13, 1
        %v2037 = vld [vmem:[%s2036] sm:$0x1]
        %v2039 = vperm.slane %v2037, 0
        %v2042 = vsel %vm642, %v2026, 0
        %v2045 = vsel %vm642, %v2027, 0
        %v2048 = vsel %vm642, %v2028, 0
        %2050 = vmatpush.msra.mxu0 0.0
        %2051 = vmatpush.msra.mxu0 0.0
        %2052 = vmatpush.msra.mxu0 0.0
        %2053 = vmatpush.msra.mxu0 0.0
        %2054 = vmatpush.msra.mxu0 0.0
        %2055 = vmatpush.msra.mxu0 0.0
        %2056 = vmatpush.msra.mxu0 0.0
        %2057 = vmatpush.msra.mxu0 0.0
        %2058 = vmatpush.msra.mxu0 0.0
        %2059 = vmatpush.msra.mxu0 0.0
        %2060 = vmatpush.msra.mxu0 %v2035
        %2061 = vmatpush.msra.mxu0 %v2034
        %2062 = vmatpush.msra.mxu0 %v2033
        %2063 = vmatpush.msra.mxu0 %v2032
        %2064 = vmatpush.msra.mxu0 %v2031
        %2065 = vmatpush.msra.mxu0 %v2030
        %2066 = vmatmul.f32.gmra.mxu0 %v2042
        %v2067 = vpop.f32.mrf.mxu0
        %v2068 = vadd.f32 %v2039, %v2067
        %2069 = vmatmul.f32.gmra.mxu0 %v2045
        %v2070 = vpop.f32.mrf.mxu0
        %v2071 = vadd.f32 %v2039, %v2070
        %2072 = vmatmul.f32.gmra.mxu0 %v2048
        %v2073 = vpop.f32.mrf.mxu0
        %v2074 = vadd.f32 %v2039, %v2073
        %2075 = vdwg.mxu0
        %v2076 = vmul.f32 %v2068, 0.5
        %v2077 = vmul.f32 %v2071, 0.5
        %v2078 = vmul.f32 %v2074, 0.5
        %v2079 = vmul.f32 %v2068, 0.70710677
        %v2080 = vmul.f32 %v2071, 0.70710677
        %v2081 = vmul.f32 %v2074, 0.70710677
        %v2082 = vand.u32 2147483647, %v2079
        %v2083 = vand.u32 2147483647, %v2080
        %v2084 = vand.u32 2147483647, %v2081
        %v2085 = vmul.f32 %v2082, 0.3275911
        %v2086 = vmul.f32 %v2083, 0.3275911
        %v2087 = vmul.f32 %v2084, 0.3275911
        %v2088 = vadd.f32 %v2085, 1.0
        %v2089 = vadd.f32 %v2086, 1.0
        %v2090 = vadd.f32 %v2087, 1.0
        %v2091 = vrcp.pop %v2088
        %v2092 = vmul.f32 %v2088, %v2091
        %v2093 = vsub.f32 1.0, %v2092
        %v2094 = vmul.f32 %v2091, %v2093
        %v2095 = vadd.f32 %v2091, %v2094
        %vm2096 = vweird.f32 %v2088
        %vm2097 = vweird.f32 %v2091
        %vm2098 = vmor %vm2096, %vm2097
        %v2099 = vsel %vm2098, %v2091, %v2095
        %v2100 = vand.u32 2147483647, %v2088
        %vm2101 = vcmp.eq.f32.partialorder %v2100, 8.507059e+37
        %v2102 = vand.u32 %v2088, 2147483648
        %v2103 = vor.u32 1.1754944e-38, %v2102
        %v2104 = vsel %vm2101, %v2103, %v2099
        %v2105 = vmul.f32 1.0, %v2104
        %v2106 = vrcp.pop %v2089
        %v2107 = vmul.f32 %v2089, %v2106
        %v2108 = vsub.f32 1.0, %v2107
        %v2109 = vmul.f32 %v2106, %v2108
        %v2110 = vadd.f32 %v2106, %v2109
        %vm2111 = vweird.f32 %v2089
        %vm2112 = vweird.f32 %v2106
        %vm2113 = vmor %vm2111, %vm2112
        %v2114 = vsel %vm2113, %v2106, %v2110
        %v2115 = vand.u32 2147483647, %v2089
        %vm2116 = vcmp.eq.f32.partialorder %v2115, 8.507059e+37
        %v2117 = vand.u32 %v2089, 2147483648
        %v2118 = vor.u32 1.1754944e-38, %v2117
        %v2119 = vsel %vm2116, %v2118, %v2114
        %v2120 = vmul.f32 1.0, %v2119
        %v2121 = vrcp.pop %v2090
        %v2122 = vmul.f32 %v2090, %v2121
        %v2123 = vsub.f32 1.0, %v2122
        %v2124 = vmul.f32 %v2121, %v2123
        %v2125 = vadd.f32 %v2121, %v2124
        %vm2126 = vweird.f32 %v2090
        %vm2127 = vweird.f32 %v2121
        %vm2128 = vmor %vm2126, %vm2127
        %v2129 = vsel %vm2128, %v2121, %v2125
        %v2130 = vand.u32 2147483647, %v2090
        %vm2131 = vcmp.eq.f32.partialorder %v2130, 8.507059e+37
        %v2132 = vand.u32 %v2090, 2147483648
        %v2133 = vor.u32 1.1754944e-38, %v2132
        %v2134 = vsel %vm2131, %v2133, %v2129
        %v2135 = vmul.f32 1.0, %v2134
        %v2136 = vmul.f32 %v2105, 1.0614054
        %v2137 = vmul.f32 %v2120, 1.0614054
        %v2138 = vmul.f32 %v2135, 1.0614054
        %v2139 = vadd.f32 %v2136, -1.4531521
        %v2140 = vadd.f32 %v2137, -1.4531521
        %v2141 = vadd.f32 %v2138, -1.4531521
        %v2142 = vmul.f32 %v2139, %v2105
        %v2143 = vmul.f32 %v2140, %v2120
        %v2144 = vmul.f32 %v2141, %v2135
        %v2145 = vadd.f32 %v2142, 1.4214138
        %v2146 = vadd.f32 %v2143, 1.4214138
        %v2147 = vadd.f32 %v2144, 1.4214138
        %v2148 = vmul.f32 %v2145, %v2105
        %v2149 = vmul.f32 %v2146, %v2120
        %v2150 = vmul.f32 %v2147, %v2135
        %v2151 = vadd.f32 %v2148, -0.28449672
        %v2152 = vadd.f32 %v2149, -0.28449672
        %v2153 = vadd.f32 %v2150, -0.28449672
        %v2154 = vmul.f32 %v2151, %v2105
        %v2155 = vmul.f32 %v2152, %v2120
        %v2156 = vmul.f32 %v2153, %v2135
        %v2157 = vadd.f32 %v2154, 0.2548296
        %v2158 = vadd.f32 %v2155, 0.2548296
        %v2159 = vadd.f32 %v2156, 0.2548296
        %v2160 = vmul.f32 %v2157, %v2105
        %v2161 = vmul.f32 %v2158, %v2120
        %v2162 = vmul.f32 %v2159, %v2135
        %v2163 = vmul.f32 %v2082, %v2082
        %v2164 = vmul.f32 %v2083, %v2083
        %v2165 = vmul.f32 %v2084, %v2084
        %v2166 = vsub.f32 0.0, %v2163
        %v2167 = vsub.f32 0.0, %v2164
        %v2168 = vsub.f32 0.0, %v2165
        %v2169 = vmul.f32 %v2166, 1.442695
        %v2170 = vpow.pop %v2169
        %v2171 = vmul.f32 %v2167, 1.442695
        %v2172 = vpow.pop %v2171
        %v2173 = vmul.f32 %v2168, 1.442695
        %v2174 = vpow.pop %v2173
        %v2175 = vmul.f32 %v2160, %v2170
        %v2176 = vmul.f32 %v2161, %v2172
        %v2177 = vmul.f32 %v2162, %v2174
        %v2178 = vsub.f32 1.0, %v2175
        %v2179 = vsub.f32 1.0, %v2176
        %v2180 = vsub.f32 1.0, %v2177
        %vm2181 = vcmp.lt.f32.partialorder %v2079, 0.0
        %vm2182 = vcmp.lt.f32.partialorder %v2080, 0.0
        %vm2183 = vcmp.lt.f32.partialorder %v2081, 0.0
        %v2184 = vsub.f32 0.0, %v2178
        %v2185 = vsub.f32 0.0, %v2179
        %v2186 = vsub.f32 0.0, %v2180
        %v2187 = vsel %vm2181, %v2184, %v2178
        %v2188 = vsel %vm2182, %v2185, %v2179
        %v2189 = vsel %vm2183, %v2186, %v2180
        %v2190 = vadd.f32 %v2187, 1.0
        %v2191 = vadd.f32 %v2188, 1.0
        %v2192 = vadd.f32 %v2189, 1.0
        %v2193 = vmul.f32 %v2076, %v2190
        %v2194 = vmul.f32 %v2077, %v2191
        %v2195 = vmul.f32 %v2078, %v2192
        %s2196 = scalar_lea.vmem %s14, 96
        %v2197 = vld [vmem:[%s2196] sm:$0xff]
        %v2198 = vld [vmem:[%s2196 + $0x8] sm:$0xff]
        %v2199 = vld [vmem:[%s2196 + $0x10] sm:$0xff]
        %v2200 = vld [vmem:[%s2196 + $0x18] sm:$0xff]
        %v2201 = vld [vmem:[%s2196 + $0x20] sm:$0xff]
        %v2202 = vld [vmem:[%s2196 + $0x28] sm:$0xff]
        %v2203 = vld [vmem:[%s2196 + $0x30] sm:$0xff]
        %v2204 = vld [vmem:[%s2196 + $0x38] sm:$0xff]
        %v2205 = vld [vmem:[%s2196 + $0x40] sm:$0xff]
        %v2206 = vld [vmem:[%s2196 + $0x48] sm:$0xff]
        %v2207 = vld [vmem:[%s2196 + $0x50] sm:$0xff]
        %v2208 = vld [vmem:[%s2196 + $0x58] sm:$0xff]
        %v2210 = vsel %vm1429, %v2193, 0
        %v2213 = vsel %vm1429, %v2194, 0
        %v2216 = vsel %vm1429, %v2195, 0
        %2218 = vmatpush.msra.mxu0 0.0
        %2219 = vmatpush.msra.mxu0 0.0
        %2220 = vmatpush.msra.mxu0 0.0
        %2221 = vmatpush.msra.mxu0 0.0
        %2222 = vmatpush.msra.mxu0 %v2208
        %2223 = vmatpush.msra.mxu0 %v2207
        %2224 = vmatpush.msra.mxu0 %v2206
        %2225 = vmatpush.msra.mxu0 %v2205
        %2226 = vmatpush.msra.mxu0 %v2204
        %2227 = vmatpush.msra.mxu0 %v2203
        %2228 = vmatpush.msra.mxu0 %v2202
        %2229 = vmatpush.msra.mxu0 %v2201
        %2230 = vmatpush.msra.mxu0 %v2200
        %2231 = vmatpush.msra.mxu0 %v2199
        %2232 = vmatpush.msra.mxu0 %v2198
        %2233 = vmatpush.msra.mxu0 %v2197
        %2234 = vmatmul.f32.gmra.mxu0 %v2210
        %v2235 = vpop.f32.mrf.mxu0
        %v2236 = vadd.f32 0.0, %v2235
        %2237 = vmatmul.f32.gmra.mxu0 %v2213
        %v2238 = vpop.f32.mrf.mxu0
        %2239 = vmatmul.f32.gmra.mxu0 %v2216
        %v2240 = vpop.f32.mrf.mxu0
        %2241 = vdwg.mxu0
        %v2242 = vadd.f32 %v1944, %v2236
        %s2243 = scalar_lea.vmem %s15, 1
        %v2244 = vld [vmem:[%s2243] sm:$0x1]
        %v2246 = vperm.slane %v2244, 0
        %v2248 = vadd.f32 %v2242, %v2246
        %v2249 = vld [vmem:[%s16] sm:$0x1]
        %v2250 = vld [vmem:[%s17] sm:$0x1]
        %v2251 = vsel %vm674, %v2248, 0.0
        %2252 = vadd.xlane.f32.xlu0 %v2251
        %v2253 = vpop.xlane.xlu0 %2252
        %v2254 = vmul.f32 %v2253, %v711
        %v2255 = vsub.f32 %v2248, %v2254
        %v2256 = vmul.f32 %v2255, %v2255
        %v2257 = vsel %vm674, %v2256, 0.0
        %2258 = vadd.xlane.f32.xlu0 %v2257
        %v2259 = vpop.xlane.xlu0 %2258
        %v2260 = vmul.f32 %v2259, %v711
        %v2261 = vadd.f32 %v2260, 1e-05
        %v2262 = vrsqrt.pop %v2261
        %v2263 = vmul.f32 %v2262, %v2261
        %v2264 = vmul.f32 %v2263, %v2262
        %v2265 = vmul.f32 0.5, %v2264
        %v2266 = vsub.f32 1.5, %v2265
        %v2267 = vmul.f32 %v2262, %v2266
        %vm2268 = vweird.f32 %v2261
        %vm2269 = vweird.f32 %v2262
        %vm2270 = vmor %vm2268, %vm2269
        %v2271 = vsel %vm2270, %v2262, %v2267
        %v2272 = vmul.f32 %v2255, %v2271
        %v2273 = vmul.f32 %v2272, %v2249
        %v2274 = vadd.f32 %v2273, %v2250
        %v2275 = vld [vmem:[%s18] sm:$0xff]
        %v2276 = vld [vmem:[%s18 + $0x8] sm:$0xff]
        %v2277 = vld [vmem:[%s18 + $0x10] sm:$0xff]
        %v2278 = vld [vmem:[%s18 + $0x18] sm:$0xff]
        %v2279 = vld [vmem:[%s18 + $0x20] sm:$0xff]
        %v2280 = vld [vmem:[%s18 + $0x28] sm:$0xff]
        %v2281 = vld [vmem:[%s19] sm:$0x1]
        %v2283 = vsel %vm642, %v2274, 0
        %2285 = vmatpush.msra.mxu0 0.0
        %2286 = vmatpush.msra.mxu0 0.0
        %2287 = vmatpush.msra.mxu0 0.0
        %2288 = vmatpush.msra.mxu0 0.0
        %2289 = vmatpush.msra.mxu0 0.0
        %2290 = vmatpush.msra.mxu0 0.0
        %2291 = vmatpush.msra.mxu0 0.0
        %2292 = vmatpush.msra.mxu0 0.0
        %2293 = vmatpush.msra.mxu0 0.0
        %2294 = vmatpush.msra.mxu0 0.0
        %2295 = vmatpush.msra.mxu0 %v2280
        %2296 = vmatpush.msra.mxu0 %v2279
        %2297 = vmatpush.msra.mxu0 %v2278
        %2298 = vmatpush.msra.mxu0 %v2277
        %2299 = vmatpush.msra.mxu0 %v2276
        %2300 = vmatpush.msra.mxu0 %v2275
        %2301 = vmatmul.f32.gmra.mxu0 %v2283
        %v2302 = vpop.f32.mrf.mxu0
        %v2303 = vadd.f32 %v2281, %v2302
        %2304 = vdwg.mxu0
        %vm2305 = vcmask 73728
        %2306 = vst.msk [vmem:[%s621] sm:$0x1] %vm2305, %v2303
        %s2307 = sand.u32 %s467, 1
        %s2308 = scalar_lea.sflag [#allocation4], %s2307
        %s2309 = sand.u32 %s467, 1
        %s2310 = scalar_lea.vmem [#allocation3], %s2309
        // Predicated region
        $region101: #{vit_forward.1} parent=99 // pred_check
          %p2311 = pneg %p477
        $region102: #{vit_forward.1} parent=99 // pred_check_branch
          %2313 = sbr.rel (%p2311) target = $region104
        $region103: #{vit_forward.1} parent=99 // pred_region
          %2315 = vsyncadd %s2308, 0
          %s2316 = scalar_lea.hbm %s20, %s34
          %s2318 = sshll.u32 %s2310, 4
          %s2319 = int_to_ptr.vmem [resolvable:$true] %s2318
          %s2320 = sshll.u32 %s2316, 4
          %s2321 = int_to_ptr.hbm [resolvable:$true] %s2320
          %2323 = dma.vmem_to_hbm [thread:$0]  %s2319, 16, %s2321, %s2308
        $region104: #{vit_forward.1} parent=99 // pred_fallthru
          _
      $region100: #{vit_forward.1} parent=5 // pred_fallthru
        _
      %p2324 = scmp.le.s32.totalorder 2, %s29
      // Predicated region
      $region105: #{vit_forward.1} parent=5 // pred_check
        %p2325 = pneg %p2324
      $region106: #{vit_forward.1} parent=5 // pred_check_branch
        %2327 = sbr.rel (%p2325) target = $region108
      $region107: #{vit_forward.1} parent=5 // pred_region
        %s2328 = ssub.s32 %s29, 2
        // Predicated region
        $region109: #{vit_forward.1} parent=107 // pred_check
          %p2329 = pneg %p483
        $region110: #{vit_forward.1} parent=107 // pred_check_branch
          %2331 = sbr.rel (%p2329) target = $region112
        $region111: #{vit_forward.1} parent=107 // pred_region
          %s2332 = sand.u32 %s468, 1
          %s2333 = scalar_lea.sflag [#allocation4], %s2332
          %s2334 = sand.u32 %s468, 1
          %s2335 = scalar_lea.vmem [#allocation3], %s2334
          %2337 = dma.done %s2333, 16
        $region112: #{vit_forward.1} parent=107 // pred_fallthru
          _
      $region108: #{vit_forward.1} parent=5 // pred_fallthru
        _
    $region6: #{vit_forward.1} parent=1 // loop_footer
      %s33 = sadd.s32 1, %s29
    $region7: #{vit_forward.1} parent=1 // loop_footer_branch
      %28 = sbr.rel target = $region3
    $region8: #{vit_forward.1} parent=1 // loop_exit
      _
    %2338 = vsyncpa [#allocation4], 1
    %s2339 = scalar_lea.sflag [#allocation4], 1
    %2340 = vsyncpa %s2339, 1

</llo_original>
